<compile_context>
chip_gen: v5e
topology: v5e:2x2
jax: 0.10.0
libtpu: 0.0.40
codegen_flags: <defaults>
</compile_context>

<pallas_src>
import jax
import jax.numpy as jnp
from jax.experimental import pallas as pl
from jax.experimental.pallas import tpu as pltpu

EPS = 1e-5
VMEM_LIMIT = 32 * 1024 * 1024  # explicit scoped-VMEM budget (safe on v5e/v6e/v7x)


def _make_conv_stats_kernel(m_total, m_tile):
    """Pass 1: 1x1 conv as (Cout,Cin)@(Cin,Mt) + per-channel sum / sumsq."""

    def kernel(w_ref, x_ref, y_ref, sum_ref, sq_ref):
        i = pl.program_id(0)

        # MXU matmul, f32 accumulation.  y: (Cout, Mt)
        y = jnp.dot(w_ref[...], x_ref[...], preferred_element_type=jnp.float32)
        y_ref[...] = y.astype(y_ref.dtype)

        # Mask columns beyond the real M (last tile may be partial; OOB input
        # lanes contain undefined data and must not pollute the statistics).
        col = jax.lax.broadcasted_iota(jnp.int32, y.shape, 1) + i * m_tile
        y_valid = jnp.where(col < m_total, y, 0.0)

        s = jnp.sum(y_valid, axis=1, keepdims=True)            # (Cout, 1)
        q = jnp.sum(y_valid * y_valid, axis=1, keepdims=True)  # (Cout, 1)

        @pl.when(i == 0)
        def _():
            sum_ref[...] = s
            sq_ref[...] = q

        @pl.when(i != 0)
        def _():
            sum_ref[...] = sum_ref[...] + s
            sq_ref[...] = sq_ref[...] + q

    return kernel


def _norm_add_kernel(scale_ref, shift_ref, y_ref, res_ref, o_ref):
    """Pass 2: out = y * scale + shift + residual (all lane-dense tiles)."""
    o_ref[...] = (
        y_ref[...] * scale_ref[...] + shift_ref[...] + res_ref[...]
    ).astype(o_ref.dtype)


def conv_bn_add(x48, x42, conv_w, bn_gamma, bn_beta, *, m_tile=512, eps=EPS):
    """x48: (N, 192, H, W) NCHW, x42: (N, 32, H, W) NCHW -> (N, 32, H, W)."""
    n, cin, h, w = x48.shape
    cout = conv_w.shape[0]
    assert x42.shape == (n, cout, h, w)
    m = n * h * w

    # Channels-on-sublanes view (C, N*H*W).  For N=1 (the module's shapes) the
    # transpose of a size-1 axis is a free reshape — no HBM copy.
    x2d = jnp.transpose(x48, (1, 0, 2, 3)).reshape(cin, m)
    r2d = jnp.transpose(x42, (1, 0, 2, 3)).reshape(cout, m)
    w2d = conv_w.reshape(cout, cin)  # used directly as (Cout, Cin); no transpose

    # Lane-aligned M tile (multiple of 128), capped so tiny inputs use 1 block.
    m_tile = min(m_tile, pl.cdiv(m, 128) * 128)
    num_tiles = pl.cdiv(m, m_tile)

    # ---- Pass 1: conv + per-channel sum / sum-of-squares -------------------
    y2d, ch_sum, ch_sq = pl.pallas_call(
        _make_conv_stats_kernel(m, m_tile),
        out_shape=(
            jax.ShapeDtypeStruct((cout, m), jnp.float32),   # raw conv output
            jax.ShapeDtypeStruct((cout, 1), jnp.float32),   # sum_j y[c, j]
            jax.ShapeDtypeStruct((cout, 1), jnp.float32),   # sum_j y[c, j]^2
        ),
        grid_spec=pltpu.PrefetchScalarGridSpec(
            num_scalar_prefetch=0,
            grid=(num_tiles,),
            in_specs=[
                pl.BlockSpec((cout, cin), lambda i: (0, 0)),    # weight resident
                pl.BlockSpec((cin, m_tile), lambda i: (0, i)),  # x tile
            ],
            out_specs=(
                pl.BlockSpec((cout, m_tile), lambda i: (0, i)),  # y tile
                pl.BlockSpec((cout, 1), lambda i: (0, 0)),       # resident acc
                pl.BlockSpec((cout, 1), lambda i: (0, 0)),       # resident acc
            ),
        ),
        compiler_params=pltpu.CompilerParams(
            dimension_semantics=("arbitrary",),  # stats accumulate across M tiles
            vmem_limit_bytes=VMEM_LIMIT,
        ),
    )(w2d, x2d)

    # ---- Tiny host-side fold of BN statistics into scale/shift (32 elems) ---
    mean = ch_sum / jnp.float32(m)
    var = jnp.maximum(ch_sq / jnp.float32(m) - mean * mean, 0.0)
    scale = bn_gamma.reshape(cout, 1).astype(jnp.float32) * jax.lax.rsqrt(var + eps)
    shift = bn_beta.reshape(cout, 1).astype(jnp.float32) - mean * scale

    # ---- Pass 2: normalize + affine + residual add --------------------------
    out2d = pl.pallas_call(
        _norm_add_kernel,
        out_shape=jax.ShapeDtypeStruct((cout, m), x42.dtype),
        grid_spec=pltpu.PrefetchScalarGridSpec(
            num_scalar_prefetch=0,
            grid=(num_tiles,),
            in_specs=[
                pl.BlockSpec((cout, 1), lambda i: (0, 0)),       # scale resident
                pl.BlockSpec((cout, 1), lambda i: (0, 0)),       # shift resident
                pl.BlockSpec((cout, m_tile), lambda i: (0, i)),  # y tile
                pl.BlockSpec((cout, m_tile), lambda i: (0, i)),  # residual tile
            ],
            out_specs=pl.BlockSpec((cout, m_tile), lambda i: (0, i)),
        ),
        compiler_params=pltpu.CompilerParams(
            dimension_semantics=("parallel",),  # independent tiles (v7x 2-TC shard)
            vmem_limit_bytes=VMEM_LIMIT,
        ),
    )(scale, shift, y2d, r2d)

    # (Cout, N*H*W) -> NCHW (free for N=1).
    return jnp.transpose(out2d.reshape(cout, n, h, w), (1, 0, 2, 3))


def reference(x48, x42, conv_w, bn_gamma, bn_beta, eps=EPS):
    """Pure-JAX reference matching the PyTorch forward (train-mode BN)."""
    n, cin, h, w = x48.shape
    cout = conv_w.shape[0]
    x_flat = jnp.transpose(x48, (0, 2, 3, 1)).reshape(-1, cin)
    y = x_flat @ conv_w.reshape(cout, cin).T
    mean = jnp.mean(y, axis=0, keepdims=True)
    var = jnp.mean((y - mean) ** 2, axis=0, keepdims=True)
    y = (y - mean) / jnp.sqrt(var + eps) * bn_gamma + bn_beta
    y = jnp.transpose(y.reshape(n, h, w, cout), (0, 3, 1, 2))
    return x42 + y


if __name__ == "__main__":
    key = jax.random.PRNGKey(0)
    k1, k2, k3, k4, k5 = jax.random.split(key, 5)

    # Shapes from the module: Cin=192, Cout=32, N=1, H=W=28.
    N, CIN, COUT, H, W = 1, 192, 32, 28, 28

    x48 = jax.random.normal(k1, (N, CIN, H, W), dtype=jnp.float32)
    x42 = jax.random.normal(k2, (N, COUT, H, W), dtype=jnp.float32)

    # Deterministic synthetic parameters (no checkpoint).
    conv_w = jax.random.normal(k3, (COUT, CIN, 1, 1), dtype=jnp.float32) * 0.05
    bn_gamma = 1.0 + 0.1 * jax.random.normal(k4, (COUT,), dtype=jnp.float32)
    bn_beta = 0.1 * jax.random.normal(k5, (COUT,), dtype=jnp.float32)

    fn = jax.jit(conv_bn_add)
    out = jax.block_until_ready(fn(x48, x42, conv_w, bn_gamma, bn_beta))

    ref = reference(x48, x42, conv_w, bn_gamma, bn_beta)
    assert out.shape == (N, COUT, H, W)
    assert jnp.allclose(out, ref, atol=1e-4, rtol=1e-4), "mismatch vs reference"

    # TODO(synk): BatchNorm running_mean/running_var momentum updates (training
    # side effect) are not materialized; they do not affect the returned tensor.

    print("KERNEL_OK")
</pallas_src>

<mosaic_0001>
module attributes {stable_mosaic.version = 11 : i64} {
  func.func @kernel(%arg0: i32, %arg1: memref<32x192xf32, #tpu.memory_space<vmem>>, %arg2: memref<192x512xf32, #tpu.memory_space<vmem>>, %arg3: memref<32x512xf32, #tpu.memory_space<vmem>>, %arg4: memref<32x1xf32, #tpu.memory_space<vmem>>, %arg5: memref<32x1xf32, #tpu.memory_space<vmem>>) attributes {dimension_semantics = [#tpu.dimension_semantics<arbitrary>], iteration_bounds = array<i64: 2>, scalar_prefetch = 0 : i64, scratch_operands = 0 : i64, tpu.core_type = #tpu.core_type<tc>, window_params = [{pipeline_mode = #tpu.pipeline_mode<synchronous>, transform_indices = @transform_0, window_bounds = array<i64: 32, 192>}, {transform_indices = @transform_1, window_bounds = array<i64: 192, 512>}, {transform_indices = @transform_2, window_bounds = array<i64: 32, 512>}, {pipeline_mode = #tpu.pipeline_mode<synchronous>, transform_indices = @transform_3, window_bounds = array<i64: 32, 1>}, {pipeline_mode = #tpu.pipeline_mode<synchronous>, transform_indices = @transform_4, window_bounds = array<i64: 32, 1>}]} {
    %c0 = arith.constant 0 : index
    %c0_0 = arith.constant 0 : index
    %0 = vector.load %arg1[%c0, %c0_0] : memref<32x192xf32, #tpu.memory_space<vmem>>, vector<32x192xf32>
    %c0_1 = arith.constant 0 : index
    %c0_2 = arith.constant 0 : index
    %1 = vector.load %arg2[%c0_1, %c0_2] : memref<192x512xf32, #tpu.memory_space<vmem>>, vector<192x512xf32>
    %cst = arith.constant dense<0.000000e+00> : vector<32x512xf32>
    %2 = tpu.matmul %0, %1, %cst {dimension_numbers = #tpu.dot_dimension_numbers<[1], [0], [0], [1], [0, 0, 1, 1], [], []>} : vector<32x192xf32>, vector<192x512xf32>, vector<32x512xf32> -> vector<32x512xf32>
    %c0_3 = arith.constant 0 : index
    %c0_4 = arith.constant 0 : index
    %3 = vector.load %arg3[%c0_3, %c0_4] : memref<32x512xf32, #tpu.memory_space<vmem>>, vector<32x512xf32>
    tpu.vector_store %arg3[%c0_3, %c0_4], %2 {strides = array<i32>} : memref<32x512xf32, #tpu.memory_space<vmem>>, vector<32x512xf32>,
    %4 = tpu.iota {dimensions = array<i32: 1>} : vector<32x512xi32>
    %c512_i32 = arith.constant 512 : i32
    %5 = arith.muli %arg0, %c512_i32 : i32
    %6 = vector.broadcast %5 : i32 to vector<32x512xi32>
    %7 = arith.addi %4, %6 : vector<32x512xi32>
    %c784_i32 = arith.constant 784 : i32
    %8 = vector.broadcast %c784_i32 : i32 to vector<32x512xi32>
    %9 = arith.cmpi slt, %7, %8 : vector<32x512xi32>
    %cst_5 = arith.constant 0.000000e+00 : f32
    %10 = vector.broadcast %cst_5 : f32 to vector<32x512xf32>
    %11 = arith.select %9, %2, %10 : vector<32x512xi1>, vector<32x512xf32>
    %cst_6 = arith.constant dense<0.000000e+00> : vector<32xf32>
    %12 = vector.multi_reduction <add>, %11, %cst_6 [1] : vector<32x512xf32> to vector<32xf32>
    %13 = vector.shape_cast %12 : vector<32xf32> to vector<32x1xf32>
    %14 = arith.mulf %11, %11 : vector<32x512xf32>
    %cst_7 = arith.constant dense<0.000000e+00> : vector<32xf32>
    %15 = vector.multi_reduction <add>, %14, %cst_7 [1] : vector<32x512xf32> to vector<32xf32>
    %16 = vector.shape_cast %15 : vector<32xf32> to vector<32x1xf32>
    %c0_i32 = arith.constant 0 : i32
    %17 = arith.cmpi eq, %arg0, %c0_i32 : i32
    %18 = arith.extui %17 : i1 to i32
    %c0_i32_8 = arith.constant 0 : i32
    %19 = arith.cmpi ne, %18, %c0_i32_8 : i32
    scf.if %19 {
      %c0_11 = arith.constant 0 : index
      %c0_12 = arith.constant 0 : index
      %23 = vector.load %arg4[%c0_11, %c0_12] : memref<32x1xf32, #tpu.memory_space<vmem>>, vector<32x1xf32>
      tpu.vector_store %arg4[%c0_11, %c0_12], %13 {strides = array<i32>} : memref<32x1xf32, #tpu.memory_space<vmem>>, vector<32x1xf32>,
      %c0_13 = arith.constant 0 : index
      %c0_14 = arith.constant 0 : index
      %24 = vector.load %arg5[%c0_13, %c0_14] : memref<32x1xf32, #tpu.memory_space<vmem>>, vector<32x1xf32>
      tpu.vector_store %arg5[%c0_13, %c0_14], %16 {strides = array<i32>} : memref<32x1xf32, #tpu.memory_space<vmem>>, vector<32x1xf32>,
    } else {
    }
    %c0_i32_9 = arith.constant 0 : i32
    %20 = arith.cmpi ne, %arg0, %c0_i32_9 : i32
    %21 = arith.extui %20 : i1 to i32
    %c0_i32_10 = arith.constant 0 : i32
    %22 = arith.cmpi ne, %21, %c0_i32_10 : i32
    scf.if %22 {
      %c0_11 = arith.constant 0 : index
      %c0_12 = arith.constant 0 : index
      %23 = vector.load %arg4[%c0_11, %c0_12] : memref<32x1xf32, #tpu.memory_space<vmem>>, vector<32x1xf32>
      %24 = arith.addf %23, %13 : vector<32x1xf32>
      %c0_13 = arith.constant 0 : index
      %c0_14 = arith.constant 0 : index
      %25 = vector.load %arg4[%c0_13, %c0_14] : memref<32x1xf32, #tpu.memory_space<vmem>>, vector<32x1xf32>
      tpu.vector_store %arg4[%c0_13, %c0_14], %24 {strides = array<i32>} : memref<32x1xf32, #tpu.memory_space<vmem>>, vector<32x1xf32>,
      %c0_15 = arith.constant 0 : index
      %c0_16 = arith.constant 0 : index
      %26 = vector.load %arg5[%c0_15, %c0_16] : memref<32x1xf32, #tpu.memory_space<vmem>>, vector<32x1xf32>
      %27 = arith.addf %26, %16 : vector<32x1xf32>
      %c0_17 = arith.constant 0 : index
      %c0_18 = arith.constant 0 : index
      %28 = vector.load %arg5[%c0_17, %c0_18] : memref<32x1xf32, #tpu.memory_space<vmem>>, vector<32x1xf32>
      tpu.vector_store %arg5[%c0_17, %c0_18], %27 {strides = array<i32>} : memref<32x1xf32, #tpu.memory_space<vmem>>, vector<32x1xf32>,
    } else {
    }
    return
  }
  func.func @transform_0(%arg0: i32) -> (i32, i32) {
    %c0_i32 = arith.constant 0 : i32
    %c0_i32_0 = arith.constant 0 : i32
    %c0_i32_1 = arith.constant 0 : i32
    return %c0_i32, %c0_i32_0 : i32, i32
  }
  func.func @transform_1(%arg0: i32) -> (i32, i32) {
    %c0_i32 = arith.constant 0 : i32
    %c0_i32_0 = arith.constant 0 : i32
    return %c0_i32, %arg0 : i32, i32
  }
  func.func @transform_2(%arg0: i32) -> (i32, i32) {
    %c0_i32 = arith.constant 0 : i32
    %c0_i32_0 = arith.constant 0 : i32
    return %c0_i32, %arg0 : i32, i32
  }
  func.func @transform_3(%arg0: i32) -> (i32, i32) {
    %c0_i32 = arith.constant 0 : i32
    %c0_i32_0 = arith.constant 0 : i32
    %c0_i32_1 = arith.constant 0 : i32
    return %c0_i32, %c0_i32_0 : i32, i32
  }
  func.func @transform_4(%arg0: i32) -> (i32, i32) {
    %c0_i32 = arith.constant 0 : i32
    %c0_i32_0 = arith.constant 0 : i32
    %c0_i32_1 = arith.constant 0 : i32
    return %c0_i32, %c0_i32_0 : i32, i32
  }
}

module attributes {stable_mosaic.version = 11 : i64} {
  func.func @_norm_add_kernel(%arg0: i32, %arg1: memref<32x1xf32, #tpu.memory_space<vmem>>, %arg2: memref<32x1xf32, #tpu.memory_space<vmem>>, %arg3: memref<32x512xf32, #tpu.memory_space<vmem>>, %arg4: memref<32x512xf32, #tpu.memory_space<vmem>>, %arg5: memref<32x512xf32, #tpu.memory_space<vmem>>) attributes {dimension_semantics = [#tpu.dimension_semantics<parallel>], iteration_bounds = array<i64: 2>, scalar_prefetch = 0 : i64, scratch_operands = 0 : i64, tpu.core_type = #tpu.core_type<tc>, window_params = [{pipeline_mode = #tpu.pipeline_mode<synchronous>, transform_indices = @transform_0, window_bounds = array<i64: 32, 1>}, {pipeline_mode = #tpu.pipeline_mode<synchronous>, transform_indices = @transform_1, window_bounds = array<i64: 32, 1>}, {transform_indices = @transform_2, window_bounds = array<i64: 32, 512>}, {transform_indices = @transform_3, window_bounds = array<i64: 32, 512>}, {transform_indices = @transform_4, window_bounds = array<i64: 32, 512>}]} {
    %c0 = arith.constant 0 : index
    %c0_0 = arith.constant 0 : index
    %0 = vector.load %arg3[%c0, %c0_0] : memref<32x512xf32, #tpu.memory_space<vmem>>, vector<32x512xf32>
    %c0_1 = arith.constant 0 : index
    %c0_2 = arith.constant 0 : index
    %1 = vector.load %arg1[%c0_1, %c0_2] : memref<32x1xf32, #tpu.memory_space<vmem>>, vector<32x1xf32>
    %2 = vector.broadcast %1 : vector<32x1xf32> to vector<32x512xf32>
    %3 = arith.mulf %0, %2 : vector<32x512xf32>
    %c0_3 = arith.constant 0 : index
    %c0_4 = arith.constant 0 : index
    %4 = vector.load %arg2[%c0_3, %c0_4] : memref<32x1xf32, #tpu.memory_space<vmem>>, vector<32x1xf32>
    %5 = vector.broadcast %4 : vector<32x1xf32> to vector<32x512xf32>
    %6 = arith.addf %3, %5 : vector<32x512xf32>
    %c0_5 = arith.constant 0 : index
    %c0_6 = arith.constant 0 : index
    %7 = vector.load %arg4[%c0_5, %c0_6] : memref<32x512xf32, #tpu.memory_space<vmem>>, vector<32x512xf32>
    %8 = arith.addf %6, %7 : vector<32x512xf32>
    %c0_7 = arith.constant 0 : index
    %c0_8 = arith.constant 0 : index
    %9 = vector.load %arg5[%c0_7, %c0_8] : memref<32x512xf32, #tpu.memory_space<vmem>>, vector<32x512xf32>
    tpu.vector_store %arg5[%c0_7, %c0_8], %8 {strides = array<i32>} : memref<32x512xf32, #tpu.memory_space<vmem>>, vector<32x512xf32>,
    return
  }
  func.func @transform_0(%arg0: i32) -> (i32, i32) {
    %c0_i32 = arith.constant 0 : i32
    %c0_i32_0 = arith.constant 0 : i32
    %c0_i32_1 = arith.constant 0 : i32
    return %c0_i32, %c0_i32_0 : i32, i32
  }
  func.func @transform_1(%arg0: i32) -> (i32, i32) {
    %c0_i32 = arith.constant 0 : i32
    %c0_i32_0 = arith.constant 0 : i32
    %c0_i32_1 = arith.constant 0 : i32
    return %c0_i32, %c0_i32_0 : i32, i32
  }
  func.func @transform_2(%arg0: i32) -> (i32, i32) {
    %c0_i32 = arith.constant 0 : i32
    %c0_i32_0 = arith.constant 0 : i32
    return %c0_i32, %arg0 : i32, i32
  }
  func.func @transform_3(%arg0: i32) -> (i32, i32) {
    %c0_i32 = arith.constant 0 : i32
    %c0_i32_0 = arith.constant 0 : i32
    return %c0_i32, %arg0 : i32, i32
  }
  func.func @transform_4(%arg0: i32) -> (i32, i32) {
    %c0_i32 = arith.constant 0 : i32
    %c0_i32_0 = arith.constant 0 : i32
    return %c0_i32, %arg0 : i32, i32
  }
}

</mosaic_0001>

<llo_original>
// kernel: conv_bn_add.3
$region0: #{conv_bn_add.3}
  #allocation0 [shape = 'u32[]', space=smem, size = 0x4, offset = 0x4, fixed_abs, tag = 'smem constant byte address 0x4 - core index']
  #allocation1 [shape = 'u32[72,128]{1,0:T(1,128)}', space=vmem, size = 0x9000, scoped, tag = 'internal scratch']
  %s0 = inlined_call_operand.vmem [shape: f32[32,1], index: 0, kind: input, shape index: {}]
  %s1 = inlined_call_operand.vmem [shape: f32[32,1], index: 1, kind: input, shape index: {}]
  %s2 = inlined_call_operand.vmem [shape: f32[32,784], index: 2, kind: input, shape index: {}]
  %s3 = inlined_call_operand.vmem [shape: f32[32,784], index: 3, kind: input, shape index: {}]
  %s4 = inlined_call_operand.vmem [shape: f32[32,784], index: 4, kind: output, shape index: {}]
  %s5 = sld [smem:[#allocation0]]
  $region243: #{conv_bn_add.3} parent=0
    _
  %s7 = ssub.s32 1, %s5
  %s8 = scalar_select 0, %s7, %s5
  $region1: #{conv_bn_add.3} parent=0
    #allocation2 [shape = 'u8[131072]{0}', space=vmem, size = 0x20000, scoped, tag = 'input window, operand 2']
    #allocation3 [shape = 'u8[131072]{0}', space=vmem, size = 0x20000, scoped, tag = 'input window, operand 3']
    #allocation4 [shape = 'u8[131072]{0}', space=vmem, size = 0x20000, scoped, tag = 'output window, operand 0']
    loop: start=0, step=1, limit=4
    $region2: #{conv_bn_add.3} parent=1 // loop_pre_header
      _
    $region3: #{conv_bn_add.3} parent=1 // loop_header
      %s10 = sphi 0, %s14
      %p11 = scmp.ge.s32.totalorder %s10, 4
      %s18 = sphi 0, %s18
      %s20 = sphi 0, %s18
      %s21 = sphi 0, %s20
      %s35 = sphi 0, %s21
      %s39 = sphi 0, %s39
      %s41 = sphi 0, %s39
      %s42 = sphi 0, %s41
      %s56 = sphi 0, %s42
      %s62 = sphi 0, %s64
      %s65 = sphi 0, %s62
      %s66 = sphi 0, %s65
      %s82 = sphi 0, %s66
      %s88 = sphi 0, %s90
      %s91 = sphi 0, %s88
      %s92 = sphi 0, %s91
      %s108 = sphi 0, %s92
      %s114 = sphi 0, %s116
      %s117 = sphi 0, %s114
      %s118 = sphi 0, %s117
      %s134 = sphi 0, %s118
    $region4: #{conv_bn_add.3} parent=1 // loop_header_branch
      %13 = sbr.rel (%p11) target = $region8
    $region5: #{conv_bn_add.3} parent=1 // loop_body
      %s15 = ssub.s32 %s10, 1
      %s16 = ssub.s32 %s10, 2
      %s17 = sadd.s32 %s10, 1
      %s19 = sadd.s32 %s18, 1
      %p22 = scmp.eq.s32.totalorder %s10, 1
      %p23 = scmp.ne.s32.totalorder %s18, %s20
      %p24 = scmp.eq.s32.totalorder %s10, 0
      %p25 = por %p23, %p24
      %p26 = scmp.ne.s32.totalorder %s18, %s20
      %p27 = scmp.eq.s32.totalorder %s15, 1
      %p28 = por %p26, %p27
      %p29 = scmp.ne.s32.totalorder %s20, %s21
      %p30 = scmp.eq.s32.totalorder %s15, 0
      %p31 = por %p29, %p30
      %p32 = scmp.ne.s32.totalorder %s20, %s21
      %p33 = scmp.eq.s32.totalorder %s16, 1
      %p34 = por %p32, %p33
      %p36 = scmp.ne.s32.totalorder %s21, %s35
      %p37 = scmp.eq.s32.totalorder %s16, 0
      %p38 = por %p36, %p37
      %s40 = sadd.s32 %s39, 1
      %p43 = scmp.eq.s32.totalorder %s10, 1
      %p44 = scmp.ne.s32.totalorder %s39, %s41
      %p45 = scmp.eq.s32.totalorder %s10, 0
      %p46 = por %p44, %p45
      %p47 = scmp.ne.s32.totalorder %s39, %s41
      %p48 = scmp.eq.s32.totalorder %s15, 1
      %p49 = por %p47, %p48
      %p50 = scmp.ne.s32.totalorder %s41, %s42
      %p51 = scmp.eq.s32.totalorder %s15, 0
      %p52 = por %p50, %p51
      %p53 = scmp.ne.s32.totalorder %s41, %s42
      %p54 = scmp.eq.s32.totalorder %s16, 1
      %p55 = por %p53, %p54
      %p57 = scmp.ne.s32.totalorder %s42, %s56
      %p58 = scmp.eq.s32.totalorder %s16, 0
      %p59 = por %p57, %p58
      %s60 = ssub.s32 %s10, %s17
      %p61 = scmp.eq.s32.totalorder %s60, 0
      %s63 = sadd.s32 %s62, 1
      %s64 = scalar_select %p61, %s62, %s63
      %p67 = pneg %p61
      %p68 = scmp.eq.s32.totalorder %s10, 1
      %p69 = por %p67, %p68
      %p70 = scmp.ne.s32.totalorder %s62, %s65
      %p71 = scmp.eq.s32.totalorder %s10, 0
      %p72 = por %p70, %p71
      %p73 = scmp.ne.s32.totalorder %s62, %s65
      %p74 = scmp.eq.s32.totalorder %s15, 1
      %p75 = por %p73, %p74
      %p76 = scmp.ne.s32.totalorder %s65, %s66
      %p77 = scmp.eq.s32.totalorder %s15, 0
      %p78 = por %p76, %p77
      %p79 = scmp.ne.s32.totalorder %s65, %s66
      %p80 = scmp.eq.s32.totalorder %s16, 1
      %p81 = por %p79, %p80
      %p83 = scmp.ne.s32.totalorder %s66, %s82
      %p84 = scmp.eq.s32.totalorder %s16, 0
      %p85 = por %p83, %p84
      %s86 = ssub.s32 %s10, %s17
      %p87 = scmp.eq.s32.totalorder %s86, 0
      %s89 = sadd.s32 %s88, 1
      %s90 = scalar_select %p87, %s88, %s89
      %p93 = pneg %p87
      %p94 = scmp.eq.s32.totalorder %s10, 1
      %p95 = por %p93, %p94
      %p96 = scmp.ne.s32.totalorder %s88, %s91
      %p97 = scmp.eq.s32.totalorder %s10, 0
      %p98 = por %p96, %p97
      %p99 = scmp.ne.s32.totalorder %s88, %s91
      %p100 = scmp.eq.s32.totalorder %s15, 1
      %p101 = por %p99, %p100
      %p102 = scmp.ne.s32.totalorder %s91, %s92
      %p103 = scmp.eq.s32.totalorder %s15, 0
      %p104 = por %p102, %p103
      %p105 = scmp.ne.s32.totalorder %s91, %s92
      %p106 = scmp.eq.s32.totalorder %s16, 1
      %p107 = por %p105, %p106
      %p109 = scmp.ne.s32.totalorder %s92, %s108
      %p110 = scmp.eq.s32.totalorder %s16, 0
      %p111 = por %p109, %p110
      %s112 = ssub.s32 %s10, %s17
      %p113 = scmp.eq.s32.totalorder %s112, 0
      %s115 = sadd.s32 %s114, 1
      %s116 = scalar_select %p113, %s114, %s115
      %p119 = pneg %p113
      %p120 = scmp.eq.s32.totalorder %s10, 1
      %p121 = por %p119, %p120
      %p122 = scmp.ne.s32.totalorder %s114, %s117
      %p123 = scmp.eq.s32.totalorder %s10, 0
      %p124 = por %p122, %p123
      %p125 = scmp.ne.s32.totalorder %s114, %s117
      %p126 = scmp.eq.s32.totalorder %s15, 1
      %p127 = por %p125, %p126
      %p128 = scmp.ne.s32.totalorder %s117, %s118
      %p129 = scmp.eq.s32.totalorder %s15, 0
      %p130 = por %p128, %p129
      %p131 = scmp.ne.s32.totalorder %s117, %s118
      %p132 = scmp.eq.s32.totalorder %s16, 1
      %p133 = por %p131, %p132
      %p135 = scmp.ne.s32.totalorder %s118, %s134
      %p136 = scmp.eq.s32.totalorder %s16, 0
      %p137 = por %p135, %p136
      %p138 = scmp.le.s32.totalorder 1, %s10
      %p139 = scmp.lt.s32.totalorder %s10, 3
      %p140 = pnand %p138, %p139
      %p141 = pneg %p140
      // Predicated region
      $region9: #{conv_bn_add.3} parent=5 // pred_check
        _
      $region10: #{conv_bn_add.3} parent=5 // pred_check_branch
        %143 = sbr.rel (%p140) target = $region12
      $region11: #{conv_bn_add.3} parent=5 // pred_region
        %s144 = ssub.s32 %s10, 1
        // Predicated region
        $region13: #{conv_bn_add.3} parent=11 // pred_check
          %p145 = pneg %p31
        $region14: #{conv_bn_add.3} parent=11 // pred_check_branch
          %147 = sbr.rel (%p145) target = $region16
        $region15: #{conv_bn_add.3} parent=11 // pred_region
          _
        $region16: #{conv_bn_add.3} parent=11 // pred_fallthru
          _
        // Predicated region
        $region17: #{conv_bn_add.3} parent=11 // pred_check
          %p148 = pneg %p52
        $region18: #{conv_bn_add.3} parent=11 // pred_check_branch
          %150 = sbr.rel (%p148) target = $region20
        $region19: #{conv_bn_add.3} parent=11 // pred_region
          _
        $region20: #{conv_bn_add.3} parent=11 // pred_fallthru
          _
      $region12: #{conv_bn_add.3} parent=5 // pred_fallthru
        _
      %p151 = scmp.lt.s32.totalorder %s10, 2
      // Predicated region
      $region21: #{conv_bn_add.3} parent=5 // pred_check
        %p152 = pneg %p151
      $region22: #{conv_bn_add.3} parent=5 // pred_check_branch
        %154 = sbr.rel (%p152) target = $region24
      $region23: #{conv_bn_add.3} parent=5 // pred_region
        // Predicated region
        $region25: #{conv_bn_add.3} parent=23 // pred_check
          %p155 = pneg %p72
        $region26: #{conv_bn_add.3} parent=23 // pred_check_branch
          %157 = sbr.rel (%p155) target = $region28
        $region27: #{conv_bn_add.3} parent=23 // pred_region
          %s158 = sand.u32 %s62, 1
          %s159 = sand.u32 %s62, 1
          %s160 = smul.addr %s159, 128
          %s161 = scalar_lea.vmem [#allocation2], %s160
          %s162 = smul.u32 4, %s10
          %s163 = ssub.s32 7, %s162
          %p164 = scmp.lt.s32.totalorder %s163, 4
          %s165 = scalar_select %p164, %s163, 4
          %s166 = smul.u32 32, %s165
          %p167 = scmp.ne.s32.totalorder 0, %s166
          %s168 = smul.addr %s162, 8
          %s169 = scalar_lea.vmem %s2, %s168
          %s170 = smul.u32 %s165, 8
          // Predicated region
          $region29: #{conv_bn_add.3} parent=27 // pred_check
            %p171 = pneg %p167
          $region30: #{conv_bn_add.3} parent=27 // pred_check_branch
            %173 = sbr.rel (%p171) target = $region32
          $region31: #{conv_bn_add.3} parent=27 // pred_region
            %p174 = scmp.lt.u32.totalorder %s170, 8
            %p175 = pneg %p174
            // Predicated region
            $region33: #{conv_bn_add.3} parent=31 // pred_check
              _
            $region34: #{conv_bn_add.3} parent=31 // pred_check_branch
              %177 = sbr.rel (%p174) target = $region36
            $region35: #{conv_bn_add.3} parent=31 // pred_region
              %s199 = sand.u32 %s170, 7
              %p200 = scmp.eq.s32.totalorder %s199, 0
              // Predicated region
              $region48: #{conv_bn_add.3} parent=35 // pred_check
                %p201 = pneg %p200
              $region49: #{conv_bn_add.3} parent=35 // pred_check_branch
                %203 = sbr.rel (%p201) target = $region51
              $region50: #{conv_bn_add.3} parent=35 // pred_region
                %s204 = sshrl.u32 %s170, 3
                %s205 = sshrl.u32 %s204, 3
                // While loop
                $region52: #{conv_bn_add.3} parent=50 // loop_pre_header
                  _
                $region53: #{conv_bn_add.3} parent=50 // loop_header
                  %s207 = sphi 0, %s209
                  %p208 = scmp.ge.s32.totalorder %s207, %s205
                  %s212 = sphi 0, %s281
                  %s213 = sphi %s169, %s284
                  %s214 = sphi %s161, %s285
                $region54: #{conv_bn_add.3} parent=50 // loop_header_branch
                  %211 = sbr.rel (%p208) target = $region58
                $region55: #{conv_bn_add.3} parent=50 // loop_body
                  %v215 = vld [vmem:[%s213] sm:$0xff]
                  %216 = vst [vmem:[%s214] sm:$0xff] %v215
                  %v217 = vld [vmem:[%s213 + $0x8] sm:$0xff]
                  %218 = vst [vmem:[%s214 + $0x8] sm:$0xff] %v217
                  %v219 = vld [vmem:[%s213 + $0x10] sm:$0xff]
                  %220 = vst [vmem:[%s214 + $0x10] sm:$0xff] %v219
                  %v221 = vld [vmem:[%s213 + $0x18] sm:$0xff]
                  %222 = vst [vmem:[%s214 + $0x18] sm:$0xff] %v221
                  %v223 = vld [vmem:[%s213 + $0x20] sm:$0xff]
                  %224 = vst [vmem:[%s214 + $0x20] sm:$0xff] %v223
                  %v225 = vld [vmem:[%s213 + $0x28] sm:$0xff]
                  %226 = vst [vmem:[%s214 + $0x28] sm:$0xff] %v225
                  %v227 = vld [vmem:[%s213 + $0x30] sm:$0xff]
                  %228 = vst [vmem:[%s214 + $0x30] sm:$0xff] %v227
                  %v229 = vld [vmem:[%s213 + $0x38] sm:$0xff]
                  %230 = vst [vmem:[%s214 + $0x38] sm:$0xff] %v229
                  %v231 = vld [vmem:[%s213 + $0x38] sm:$0xff]
                  %232 = vst [vmem:[%s214 + $0x20] sm:$0xff] %v231
                  %v233 = vld [vmem:[%s213 + $0x40] sm:$0xff]
                  %234 = vst [vmem:[%s214 + $0x28] sm:$0xff] %v233
                  %v235 = vld [vmem:[%s213 + $0x48] sm:$0xff]
                  %236 = vst [vmem:[%s214 + $0x30] sm:$0xff] %v235
                  %v237 = vld [vmem:[%s213 + $0x50] sm:$0xff]
                  %238 = vst [vmem:[%s214 + $0x38] sm:$0xff] %v237
                  %v239 = vld [vmem:[%s213 + $0x58] sm:$0xff]
                  %240 = vst [vmem:[%s214 + $0x40] sm:$0xff] %v239
                  %v241 = vld [vmem:[%s213 + $0x60] sm:$0xff]
                  %242 = vst [vmem:[%s214 + $0x48] sm:$0xff] %v241
                  %v243 = vld [vmem:[%s213 + $0x68] sm:$0xff]
                  %244 = vst [vmem:[%s214 + $0x50] sm:$0xff] %v243
                  %v245 = vld [vmem:[%s213 + $0x70] sm:$0xff]
                  %246 = vst [vmem:[%s214 + $0x58] sm:$0xff] %v245
                  %v247 = vld [vmem:[%s213 + $0x70] sm:$0xff]
                  %248 = vst [vmem:[%s214 + $0x40] sm:$0xff] %v247
                  %v249 = vld [vmem:[%s213 + $0x78] sm:$0xff]
                  %250 = vst [vmem:[%s214 + $0x48] sm:$0xff] %v249
                  %v251 = vld [vmem:[%s213 + $0x80] sm:$0xff]
                  %252 = vst [vmem:[%s214 + $0x50] sm:$0xff] %v251
                  %v253 = vld [vmem:[%s213 + $0x88] sm:$0xff]
                  %254 = vst [vmem:[%s214 + $0x58] sm:$0xff] %v253
                  %v255 = vld [vmem:[%s213 + $0x90] sm:$0xff]
                  %256 = vst [vmem:[%s214 + $0x60] sm:$0xff] %v255
                  %v257 = vld [vmem:[%s213 + $0x98] sm:$0xff]
                  %258 = vst [vmem:[%s214 + $0x68] sm:$0xff] %v257
                  %v259 = vld [vmem:[%s213 + $0xa0] sm:$0xff]
                  %260 = vst [vmem:[%s214 + $0x70] sm:$0xff] %v259
                  %v261 = vld [vmem:[%s213 + $0xa8] sm:$0xff]
                  %262 = vst [vmem:[%s214 + $0x78] sm:$0xff] %v261
                  %v263 = vld [vmem:[%s213 + $0xa8] sm:$0xff]
                  %264 = vst [vmem:[%s214 + $0x60] sm:$0xff] %v263
                  %v265 = vld [vmem:[%s213 + $0xb0] sm:$0xff]
                  %266 = vst [vmem:[%s214 + $0x68] sm:$0xff] %v265
                  %v267 = vld [vmem:[%s213 + $0xb8] sm:$0xff]
                  %268 = vst [vmem:[%s214 + $0x70] sm:$0xff] %v267
                  %v269 = vld [vmem:[%s213 + $0xc0] sm:$0xff]
                  %270 = vst [vmem:[%s214 + $0x78] sm:$0xff] %v269
                  %v271 = vld [vmem:[%s213 + $0xc8] sm:$0xff]
                  %272 = vst [vmem:[%s214 + $0x80] sm:$0xff] %v271
                  %v273 = vld [vmem:[%s213 + $0xd0] sm:$0xff]
                  %274 = vst [vmem:[%s214 + $0x88] sm:$0xff] %v273
                  %v275 = vld [vmem:[%s213 + $0xd8] sm:$0xff]
                  %276 = vst [vmem:[%s214 + $0x90] sm:$0xff] %v275
                  %v277 = vld [vmem:[%s213 + $0xe0] sm:$0xff]
                  %278 = vst [vmem:[%s214 + $0x98] sm:$0xff] %v277
                  %s279 = sadd.s32 1, %s212
                  %p280 = scmp.ge.s32.totalorder %s279, %s205
                  %s281 = scalar_select %p280, 0, %s279
                  %s282 = smul.u32 %s281, 64
                  %s283 = smul.u32 %s281, 64
                  %s284 = scalar_lea.vmem %s169, %s282
                  %s285 = scalar_lea.vmem %s161, %s283 [#allocation2]
                $region56: #{conv_bn_add.3} parent=50 // loop_footer
                  %s209 = sadd.s32 %s207, 1
                $region57: #{conv_bn_add.3} parent=50 // loop_footer_branch
                  %206 = sbr.rel target = $region53
                $region58: #{conv_bn_add.3} parent=50 // loop_exit
                  _
                %s286 = sshrl.u32 %s204, 3
                %s287 = sand.u32 %s204, 7
                %s288 = smul.u32 %s286, 8
                %s289 = smul.u32 8, %s288
                %s290 = scalar_lea.vmem %s169, %s289
                %s291 = smul.u32 8, %s288
                %s292 = scalar_lea.vmem %s161, %s291 [#allocation2]
                // While loop
                $region59: #{conv_bn_add.3} parent=50 // loop_pre_header
                  _
                $region60: #{conv_bn_add.3} parent=50 // loop_header
                  %s294 = sphi 0, %s296
                  %p295 = scmp.ge.s32.totalorder %s294, %s287
                  %s299 = sphi 0, %s312
                  %s300 = sphi %s290, %s315
                  %s301 = sphi %s292, %s316
                $region61: #{conv_bn_add.3} parent=50 // loop_header_branch
                  %298 = sbr.rel (%p295) target = $region65
                $region62: #{conv_bn_add.3} parent=50 // loop_body
                  %v302 = vld [vmem:[%s300] sm:$0xff]
                  %303 = vst [vmem:[%s301] sm:$0xff] %v302
                  %v304 = vld [vmem:[%s300 + $0x38] sm:$0xff]
                  %305 = vst [vmem:[%s301 + $0x20] sm:$0xff] %v304
                  %v306 = vld [vmem:[%s300 + $0x70] sm:$0xff]
                  %307 = vst [vmem:[%s301 + $0x40] sm:$0xff] %v306
                  %v308 = vld [vmem:[%s300 + $0xa8] sm:$0xff]
                  %309 = vst [vmem:[%s301 + $0x60] sm:$0xff] %v308
                  %s310 = sadd.s32 1, %s299
                  %p311 = scmp.ge.s32.totalorder %s310, %s287
                  %s312 = scalar_select %p311, 0, %s310
                  %s313 = smul.u32 %s312, 8
                  %s314 = smul.u32 %s312, 8
                  %s315 = scalar_lea.vmem %s290, %s313
                  %s316 = scalar_lea.vmem %s292, %s314 [#allocation2]
                $region63: #{conv_bn_add.3} parent=50 // loop_footer
                  %s296 = sadd.s32 %s294, 1
                $region64: #{conv_bn_add.3} parent=50 // loop_footer_branch
                  %293 = sbr.rel target = $region60
                $region65: #{conv_bn_add.3} parent=50 // loop_exit
                  _
              $region51: #{conv_bn_add.3} parent=35 // pred_fallthru
                _
              %p317 = pneg %p200
              // Predicated region
              $region66: #{conv_bn_add.3} parent=35 // pred_check
                _
              $region67: #{conv_bn_add.3} parent=35 // pred_check_branch
                %319 = sbr.rel (%p200) target = $region69
              $region68: #{conv_bn_add.3} parent=35 // pred_region
                %s320 = sand.u32 %s170, 7
                %s321 = ssub.s32 %s170, %s320
                %s322 = scalar_lea.vmem %s169, %s321
                %s323 = ssub.s32 %s170, %s320
                %s324 = scalar_lea.vmem %s161, %s323 [#allocation2]
                %s325 = sshrl.u32 %s170, 3
                %s326 = sshrl.u32 %s325, 3
                // While loop
                $region70: #{conv_bn_add.3} parent=68 // loop_pre_header
                  _
                $region71: #{conv_bn_add.3} parent=68 // loop_header
                  %s328 = sphi 0, %s330
                  %p329 = scmp.ge.s32.totalorder %s328, %s326
                  %s333 = sphi 0, %s402
                  %s334 = sphi %s169, %s405
                  %s335 = sphi %s161, %s406
                $region72: #{conv_bn_add.3} parent=68 // loop_header_branch
                  %332 = sbr.rel (%p329) target = $region76
                $region73: #{conv_bn_add.3} parent=68 // loop_body
                  %v336 = vld [vmem:[%s334] sm:$0xff]
                  %337 = vst [vmem:[%s335] sm:$0xff] %v336
                  %v338 = vld [vmem:[%s334 + $0x8] sm:$0xff]
                  %339 = vst [vmem:[%s335 + $0x8] sm:$0xff] %v338
                  %v340 = vld [vmem:[%s334 + $0x10] sm:$0xff]
                  %341 = vst [vmem:[%s335 + $0x10] sm:$0xff] %v340
                  %v342 = vld [vmem:[%s334 + $0x18] sm:$0xff]
                  %343 = vst [vmem:[%s335 + $0x18] sm:$0xff] %v342
                  %v344 = vld [vmem:[%s334 + $0x20] sm:$0xff]
                  %345 = vst [vmem:[%s335 + $0x20] sm:$0xff] %v344
                  %v346 = vld [vmem:[%s334 + $0x28] sm:$0xff]
                  %347 = vst [vmem:[%s335 + $0x28] sm:$0xff] %v346
                  %v348 = vld [vmem:[%s334 + $0x30] sm:$0xff]
                  %349 = vst [vmem:[%s335 + $0x30] sm:$0xff] %v348
                  %v350 = vld [vmem:[%s334 + $0x38] sm:$0xff]
                  %351 = vst [vmem:[%s335 + $0x38] sm:$0xff] %v350
                  %v352 = vld [vmem:[%s334 + $0x38] sm:$0xff]
                  %353 = vst [vmem:[%s335 + $0x20] sm:$0xff] %v352
                  %v354 = vld [vmem:[%s334 + $0x40] sm:$0xff]
                  %355 = vst [vmem:[%s335 + $0x28] sm:$0xff] %v354
                  %v356 = vld [vmem:[%s334 + $0x48] sm:$0xff]
                  %357 = vst [vmem:[%s335 + $0x30] sm:$0xff] %v356
                  %v358 = vld [vmem:[%s334 + $0x50] sm:$0xff]
                  %359 = vst [vmem:[%s335 + $0x38] sm:$0xff] %v358
                  %v360 = vld [vmem:[%s334 + $0x58] sm:$0xff]
                  %361 = vst [vmem:[%s335 + $0x40] sm:$0xff] %v360
                  %v362 = vld [vmem:[%s334 + $0x60] sm:$0xff]
                  %363 = vst [vmem:[%s335 + $0x48] sm:$0xff] %v362
                  %v364 = vld [vmem:[%s334 + $0x68] sm:$0xff]
                  %365 = vst [vmem:[%s335 + $0x50] sm:$0xff] %v364
                  %v366 = vld [vmem:[%s334 + $0x70] sm:$0xff]
                  %367 = vst [vmem:[%s335 + $0x58] sm:$0xff] %v366
                  %v368 = vld [vmem:[%s334 + $0x70] sm:$0xff]
                  %369 = vst [vmem:[%s335 + $0x40] sm:$0xff] %v368
                  %v370 = vld [vmem:[%s334 + $0x78] sm:$0xff]
                  %371 = vst [vmem:[%s335 + $0x48] sm:$0xff] %v370
                  %v372 = vld [vmem:[%s334 + $0x80] sm:$0xff]
                  %373 = vst [vmem:[%s335 + $0x50] sm:$0xff] %v372
                  %v374 = vld [vmem:[%s334 + $0x88] sm:$0xff]
                  %375 = vst [vmem:[%s335 + $0x58] sm:$0xff] %v374
                  %v376 = vld [vmem:[%s334 + $0x90] sm:$0xff]
                  %377 = vst [vmem:[%s335 + $0x60] sm:$0xff] %v376
                  %v378 = vld [vmem:[%s334 + $0x98] sm:$0xff]
                  %379 = vst [vmem:[%s335 + $0x68] sm:$0xff] %v378
                  %v380 = vld [vmem:[%s334 + $0xa0] sm:$0xff]
                  %381 = vst [vmem:[%s335 + $0x70] sm:$0xff] %v380
                  %v382 = vld [vmem:[%s334 + $0xa8] sm:$0xff]
                  %383 = vst [vmem:[%s335 + $0x78] sm:$0xff] %v382
                  %v384 = vld [vmem:[%s334 + $0xa8] sm:$0xff]
                  %385 = vst [vmem:[%s335 + $0x60] sm:$0xff] %v384
                  %v386 = vld [vmem:[%s334 + $0xb0] sm:$0xff]
                  %387 = vst [vmem:[%s335 + $0x68] sm:$0xff] %v386
                  %v388 = vld [vmem:[%s334 + $0xb8] sm:$0xff]
                  %389 = vst [vmem:[%s335 + $0x70] sm:$0xff] %v388
                  %v390 = vld [vmem:[%s334 + $0xc0] sm:$0xff]
                  %391 = vst [vmem:[%s335 + $0x78] sm:$0xff] %v390
                  %v392 = vld [vmem:[%s334 + $0xc8] sm:$0xff]
                  %393 = vst [vmem:[%s335 + $0x80] sm:$0xff] %v392
                  %v394 = vld [vmem:[%s334 + $0xd0] sm:$0xff]
                  %395 = vst [vmem:[%s335 + $0x88] sm:$0xff] %v394
                  %v396 = vld [vmem:[%s334 + $0xd8] sm:$0xff]
                  %397 = vst [vmem:[%s335 + $0x90] sm:$0xff] %v396
                  %v398 = vld [vmem:[%s334 + $0xe0] sm:$0xff]
                  %399 = vst [vmem:[%s335 + $0x98] sm:$0xff] %v398
                  %s400 = sadd.s32 1, %s333
                  %p401 = scmp.ge.s32.totalorder %s400, %s326
                  %s402 = scalar_select %p401, 0, %s400
                  %s403 = smul.u32 %s402, 64
                  %s404 = smul.u32 %s402, 64
                  %s405 = scalar_lea.vmem %s169, %s403
                  %s406 = scalar_lea.vmem %s161, %s404 [#allocation2]
                $region74: #{conv_bn_add.3} parent=68 // loop_footer
                  %s330 = sadd.s32 %s328, 1
                $region75: #{conv_bn_add.3} parent=68 // loop_footer_branch
                  %327 = sbr.rel target = $region71
                $region76: #{conv_bn_add.3} parent=68 // loop_exit
                  _
                %s407 = sshrl.u32 %s325, 3
                %s408 = sand.u32 %s325, 7
                %s409 = smul.u32 %s407, 8
                %s410 = smul.u32 8, %s409
                %s411 = scalar_lea.vmem %s169, %s410
                %s412 = smul.u32 8, %s409
                %s413 = scalar_lea.vmem %s161, %s412 [#allocation2]
                // While loop
                $region77: #{conv_bn_add.3} parent=68 // loop_pre_header
                  _
                $region78: #{conv_bn_add.3} parent=68 // loop_header
                  %s415 = sphi 0, %s417
                  %p416 = scmp.ge.s32.totalorder %s415, %s408
                  %s420 = sphi 0, %s433
                  %s421 = sphi %s411, %s436
                  %s422 = sphi %s413, %s437
                $region79: #{conv_bn_add.3} parent=68 // loop_header_branch
                  %419 = sbr.rel (%p416) target = $region83
                $region80: #{conv_bn_add.3} parent=68 // loop_body
                  %v423 = vld [vmem:[%s421] sm:$0xff]
                  %424 = vst [vmem:[%s422] sm:$0xff] %v423
                  %v425 = vld [vmem:[%s421 + $0x38] sm:$0xff]
                  %426 = vst [vmem:[%s422 + $0x20] sm:$0xff] %v425
                  %v427 = vld [vmem:[%s421 + $0x70] sm:$0xff]
                  %428 = vst [vmem:[%s422 + $0x40] sm:$0xff] %v427
                  %v429 = vld [vmem:[%s421 + $0xa8] sm:$0xff]
                  %430 = vst [vmem:[%s422 + $0x60] sm:$0xff] %v429
                  %s431 = sadd.s32 1, %s420
                  %p432 = scmp.ge.s32.totalorder %s431, %s408
                  %s433 = scalar_select %p432, 0, %s431
                  %s434 = smul.u32 %s433, 8
                  %s435 = smul.u32 %s433, 8
                  %s436 = scalar_lea.vmem %s411, %s434
                  %s437 = scalar_lea.vmem %s413, %s435 [#allocation2]
                $region81: #{conv_bn_add.3} parent=68 // loop_footer
                  %s417 = sadd.s32 %s415, 1
                $region82: #{conv_bn_add.3} parent=68 // loop_footer_branch
                  %414 = sbr.rel target = $region78
                $region83: #{conv_bn_add.3} parent=68 // loop_exit
                  _
                %s438 = sshll.u32 1, %s320
                %s439 = ssub.s32 %s438, 1
                loop: start=0, step=1, limit=1
                $region84: #{conv_bn_add.3} parent=68 // loop_pre_header
                  _
                $region85: #{conv_bn_add.3} parent=68 // loop_header
                  %s441 = sphi 0, %s445
                  %p442 = scmp.ge.s32.totalorder %s441, 1
                  %s446 = sphi %s322, %s322
                  %s447 = sphi %s324, %s324
                $region86: #{conv_bn_add.3} parent=68 // loop_header_branch
                  %444 = sbr.rel (%p442) target = $region90
                $region87: #{conv_bn_add.3} parent=68 // loop_body
                  %v448 = vld [vmem:[%s446] sm:%s439]
                  %449 = vst [vmem:[%s447] sm:%s439] %v448
                  %v450 = vld [vmem:[%s446 + $0x38] sm:%s439]
                  %451 = vst [vmem:[%s447 + $0x20] sm:%s439] %v450
                  %v452 = vld [vmem:[%s446 + $0x70] sm:%s439]
                  %453 = vst [vmem:[%s447 + $0x40] sm:%s439] %v452
                  %v454 = vld [vmem:[%s446 + $0xa8] sm:%s439]
                  %455 = vst [vmem:[%s447 + $0x60] sm:%s439] %v454
                $region88: #{conv_bn_add.3} parent=68 // loop_footer
                  %s445 = sadd.s32 1, %s441
                $region89: #{conv_bn_add.3} parent=68 // loop_footer_branch
                  %440 = sbr.rel target = $region85
                $region90: #{conv_bn_add.3} parent=68 // loop_exit
                  _
              $region69: #{conv_bn_add.3} parent=35 // pred_fallthru
                _
            $region36: #{conv_bn_add.3} parent=31 // pred_fallthru
              _
            // Predicated region
            $region37: #{conv_bn_add.3} parent=31 // pred_check
              %p178 = pneg %p174
            $region38: #{conv_bn_add.3} parent=31 // pred_check_branch
              %180 = sbr.rel (%p178) target = $region40
            $region39: #{conv_bn_add.3} parent=31 // pred_region
              %s181 = sshll.u32 1, %s170
              %s182 = ssub.s32 %s181, 1
              loop: start=0, step=1, limit=1
              $region41: #{conv_bn_add.3} parent=39 // loop_pre_header
                _
              $region42: #{conv_bn_add.3} parent=39 // loop_header
                %s184 = sphi 0, %s188
                %p185 = scmp.ge.s32.totalorder %s184, 1
                %s189 = sphi %s169, %s169
                %s190 = sphi %s161, %s161
              $region43: #{conv_bn_add.3} parent=39 // loop_header_branch
                %187 = sbr.rel (%p185) target = $region47
              $region44: #{conv_bn_add.3} parent=39 // loop_body
                %v191 = vld [vmem:[%s189] sm:%s182]
                %192 = vst [vmem:[%s190] sm:%s182] %v191
                %v193 = vld [vmem:[%s189 + $0x38] sm:%s182]
                %194 = vst [vmem:[%s190 + $0x20] sm:%s182] %v193
                %v195 = vld [vmem:[%s189 + $0x70] sm:%s182]
                %196 = vst [vmem:[%s190 + $0x40] sm:%s182] %v195
                %v197 = vld [vmem:[%s189 + $0xa8] sm:%s182]
                %198 = vst [vmem:[%s190 + $0x60] sm:%s182] %v197
              $region45: #{conv_bn_add.3} parent=39 // loop_footer
                %s188 = sadd.s32 1, %s184
              $region46: #{conv_bn_add.3} parent=39 // loop_footer_branch
                %183 = sbr.rel target = $region42
              $region47: #{conv_bn_add.3} parent=39 // loop_exit
                _
            $region40: #{conv_bn_add.3} parent=31 // pred_fallthru
              _
          $region32: #{conv_bn_add.3} parent=27 // pred_fallthru
            _
          %456 = vnop
        $region28: #{conv_bn_add.3} parent=23 // pred_fallthru
          _
        // Predicated region
        $region91: #{conv_bn_add.3} parent=23 // pred_check
          %p457 = pneg %p98
        $region92: #{conv_bn_add.3} parent=23 // pred_check_branch
          %459 = sbr.rel (%p457) target = $region94
        $region93: #{conv_bn_add.3} parent=23 // pred_region
          %s460 = sand.u32 %s88, 1
          %s461 = sand.u32 %s88, 1
          %s462 = smul.addr %s461, 128
          %s463 = scalar_lea.vmem [#allocation3], %s462
          %s464 = smul.u32 4, %s10
          %s465 = ssub.s32 7, %s464
          %p466 = scmp.lt.s32.totalorder %s465, 4
          %s467 = scalar_select %p466, %s465, 4
          %s468 = smul.u32 32, %s467
          %p469 = scmp.ne.s32.totalorder 0, %s468
          %s470 = smul.addr %s464, 8
          %s471 = scalar_lea.vmem %s3, %s470
          %s472 = smul.u32 %s467, 8
          // Predicated region
          $region95: #{conv_bn_add.3} parent=93 // pred_check
            %p473 = pneg %p469
          $region96: #{conv_bn_add.3} parent=93 // pred_check_branch
            %475 = sbr.rel (%p473) target = $region98
          $region97: #{conv_bn_add.3} parent=93 // pred_region
            %p476 = scmp.lt.u32.totalorder %s472, 8
            %p477 = pneg %p476
            // Predicated region
            $region99: #{conv_bn_add.3} parent=97 // pred_check
              _
            $region100: #{conv_bn_add.3} parent=97 // pred_check_branch
              %479 = sbr.rel (%p476) target = $region102
            $region101: #{conv_bn_add.3} parent=97 // pred_region
              %s501 = sand.u32 %s472, 7
              %p502 = scmp.eq.s32.totalorder %s501, 0
              // Predicated region
              $region114: #{conv_bn_add.3} parent=101 // pred_check
                %p503 = pneg %p502
              $region115: #{conv_bn_add.3} parent=101 // pred_check_branch
                %505 = sbr.rel (%p503) target = $region117
              $region116: #{conv_bn_add.3} parent=101 // pred_region
                %s506 = sshrl.u32 %s472, 3
                %s507 = sshrl.u32 %s506, 3
                // While loop
                $region118: #{conv_bn_add.3} parent=116 // loop_pre_header
                  _
                $region119: #{conv_bn_add.3} parent=116 // loop_header
                  %s509 = sphi 0, %s511
                  %p510 = scmp.ge.s32.totalorder %s509, %s507
                  %s514 = sphi 0, %s583
                  %s515 = sphi %s471, %s586
                  %s516 = sphi %s463, %s587
                $region120: #{conv_bn_add.3} parent=116 // loop_header_branch
                  %513 = sbr.rel (%p510) target = $region124
                $region121: #{conv_bn_add.3} parent=116 // loop_body
                  %v517 = vld [vmem:[%s515] sm:$0xff]
                  %518 = vst [vmem:[%s516] sm:$0xff] %v517
                  %v519 = vld [vmem:[%s515 + $0x8] sm:$0xff]
                  %520 = vst [vmem:[%s516 + $0x8] sm:$0xff] %v519
                  %v521 = vld [vmem:[%s515 + $0x10] sm:$0xff]
                  %522 = vst [vmem:[%s516 + $0x10] sm:$0xff] %v521
                  %v523 = vld [vmem:[%s515 + $0x18] sm:$0xff]
                  %524 = vst [vmem:[%s516 + $0x18] sm:$0xff] %v523
                  %v525 = vld [vmem:[%s515 + $0x20] sm:$0xff]
                  %526 = vst [vmem:[%s516 + $0x20] sm:$0xff] %v525
                  %v527 = vld [vmem:[%s515 + $0x28] sm:$0xff]
                  %528 = vst [vmem:[%s516 + $0x28] sm:$0xff] %v527
                  %v529 = vld [vmem:[%s515 + $0x30] sm:$0xff]
                  %530 = vst [vmem:[%s516 + $0x30] sm:$0xff] %v529
                  %v531 = vld [vmem:[%s515 + $0x38] sm:$0xff]
                  %532 = vst [vmem:[%s516 + $0x38] sm:$0xff] %v531
                  %v533 = vld [vmem:[%s515 + $0x38] sm:$0xff]
                  %534 = vst [vmem:[%s516 + $0x20] sm:$0xff] %v533
                  %v535 = vld [vmem:[%s515 + $0x40] sm:$0xff]
                  %536 = vst [vmem:[%s516 + $0x28] sm:$0xff] %v535
                  %v537 = vld [vmem:[%s515 + $0x48] sm:$0xff]
                  %538 = vst [vmem:[%s516 + $0x30] sm:$0xff] %v537
                  %v539 = vld [vmem:[%s515 + $0x50] sm:$0xff]
                  %540 = vst [vmem:[%s516 + $0x38] sm:$0xff] %v539
                  %v541 = vld [vmem:[%s515 + $0x58] sm:$0xff]
                  %542 = vst [vmem:[%s516 + $0x40] sm:$0xff] %v541
                  %v543 = vld [vmem:[%s515 + $0x60] sm:$0xff]
                  %544 = vst [vmem:[%s516 + $0x48] sm:$0xff] %v543
                  %v545 = vld [vmem:[%s515 + $0x68] sm:$0xff]
                  %546 = vst [vmem:[%s516 + $0x50] sm:$0xff] %v545
                  %v547 = vld [vmem:[%s515 + $0x70] sm:$0xff]
                  %548 = vst [vmem:[%s516 + $0x58] sm:$0xff] %v547
                  %v549 = vld [vmem:[%s515 + $0x70] sm:$0xff]
                  %550 = vst [vmem:[%s516 + $0x40] sm:$0xff] %v549
                  %v551 = vld [vmem:[%s515 + $0x78] sm:$0xff]
                  %552 = vst [vmem:[%s516 + $0x48] sm:$0xff] %v551
                  %v553 = vld [vmem:[%s515 + $0x80] sm:$0xff]
                  %554 = vst [vmem:[%s516 + $0x50] sm:$0xff] %v553
                  %v555 = vld [vmem:[%s515 + $0x88] sm:$0xff]
                  %556 = vst [vmem:[%s516 + $0x58] sm:$0xff] %v555
                  %v557 = vld [vmem:[%s515 + $0x90] sm:$0xff]
                  %558 = vst [vmem:[%s516 + $0x60] sm:$0xff] %v557
                  %v559 = vld [vmem:[%s515 + $0x98] sm:$0xff]
                  %560 = vst [vmem:[%s516 + $0x68] sm:$0xff] %v559
                  %v561 = vld [vmem:[%s515 + $0xa0] sm:$0xff]
                  %562 = vst [vmem:[%s516 + $0x70] sm:$0xff] %v561
                  %v563 = vld [vmem:[%s515 + $0xa8] sm:$0xff]
                  %564 = vst [vmem:[%s516 + $0x78] sm:$0xff] %v563
                  %v565 = vld [vmem:[%s515 + $0xa8] sm:$0xff]
                  %566 = vst [vmem:[%s516 + $0x60] sm:$0xff] %v565
                  %v567 = vld [vmem:[%s515 + $0xb0] sm:$0xff]
                  %568 = vst [vmem:[%s516 + $0x68] sm:$0xff] %v567
                  %v569 = vld [vmem:[%s515 + $0xb8] sm:$0xff]
                  %570 = vst [vmem:[%s516 + $0x70] sm:$0xff] %v569
                  %v571 = vld [vmem:[%s515 + $0xc0] sm:$0xff]
                  %572 = vst [vmem:[%s516 + $0x78] sm:$0xff] %v571
                  %v573 = vld [vmem:[%s515 + $0xc8] sm:$0xff]
                  %574 = vst [vmem:[%s516 + $0x80] sm:$0xff] %v573
                  %v575 = vld [vmem:[%s515 + $0xd0] sm:$0xff]
                  %576 = vst [vmem:[%s516 + $0x88] sm:$0xff] %v575
                  %v577 = vld [vmem:[%s515 + $0xd8] sm:$0xff]
                  %578 = vst [vmem:[%s516 + $0x90] sm:$0xff] %v577
                  %v579 = vld [vmem:[%s515 + $0xe0] sm:$0xff]
                  %580 = vst [vmem:[%s516 + $0x98] sm:$0xff] %v579
                  %s581 = sadd.s32 1, %s514
                  %p582 = scmp.ge.s32.totalorder %s581, %s507
                  %s583 = scalar_select %p582, 0, %s581
                  %s584 = smul.u32 %s583, 64
                  %s585 = smul.u32 %s583, 64
                  %s586 = scalar_lea.vmem %s471, %s584
                  %s587 = scalar_lea.vmem %s463, %s585 [#allocation3]
                $region122: #{conv_bn_add.3} parent=116 // loop_footer
                  %s511 = sadd.s32 %s509, 1
                $region123: #{conv_bn_add.3} parent=116 // loop_footer_branch
                  %508 = sbr.rel target = $region119
                $region124: #{conv_bn_add.3} parent=116 // loop_exit
                  _
                %s588 = sshrl.u32 %s506, 3
                %s589 = sand.u32 %s506, 7
                %s590 = smul.u32 %s588, 8
                %s591 = smul.u32 8, %s590
                %s592 = scalar_lea.vmem %s471, %s591
                %s593 = smul.u32 8, %s590
                %s594 = scalar_lea.vmem %s463, %s593 [#allocation3]
                // While loop
                $region125: #{conv_bn_add.3} parent=116 // loop_pre_header
                  _
                $region126: #{conv_bn_add.3} parent=116 // loop_header
                  %s596 = sphi 0, %s598
                  %p597 = scmp.ge.s32.totalorder %s596, %s589
                  %s601 = sphi 0, %s614
                  %s602 = sphi %s592, %s617
                  %s603 = sphi %s594, %s618
                $region127: #{conv_bn_add.3} parent=116 // loop_header_branch
                  %600 = sbr.rel (%p597) target = $region131
                $region128: #{conv_bn_add.3} parent=116 // loop_body
                  %v604 = vld [vmem:[%s602] sm:$0xff]
                  %605 = vst [vmem:[%s603] sm:$0xff] %v604
                  %v606 = vld [vmem:[%s602 + $0x38] sm:$0xff]
                  %607 = vst [vmem:[%s603 + $0x20] sm:$0xff] %v606
                  %v608 = vld [vmem:[%s602 + $0x70] sm:$0xff]
                  %609 = vst [vmem:[%s603 + $0x40] sm:$0xff] %v608
                  %v610 = vld [vmem:[%s602 + $0xa8] sm:$0xff]
                  %611 = vst [vmem:[%s603 + $0x60] sm:$0xff] %v610
                  %s612 = sadd.s32 1, %s601
                  %p613 = scmp.ge.s32.totalorder %s612, %s589
                  %s614 = scalar_select %p613, 0, %s612
                  %s615 = smul.u32 %s614, 8
                  %s616 = smul.u32 %s614, 8
                  %s617 = scalar_lea.vmem %s592, %s615
                  %s618 = scalar_lea.vmem %s594, %s616 [#allocation3]
                $region129: #{conv_bn_add.3} parent=116 // loop_footer
                  %s598 = sadd.s32 %s596, 1
                $region130: #{conv_bn_add.3} parent=116 // loop_footer_branch
                  %595 = sbr.rel target = $region126
                $region131: #{conv_bn_add.3} parent=116 // loop_exit
                  _
              $region117: #{conv_bn_add.3} parent=101 // pred_fallthru
                _
              %p619 = pneg %p502
              // Predicated region
              $region132: #{conv_bn_add.3} parent=101 // pred_check
                _
              $region133: #{conv_bn_add.3} parent=101 // pred_check_branch
                %621 = sbr.rel (%p502) target = $region135
              $region134: #{conv_bn_add.3} parent=101 // pred_region
                %s622 = sand.u32 %s472, 7
                %s623 = ssub.s32 %s472, %s622
                %s624 = scalar_lea.vmem %s471, %s623
                %s625 = ssub.s32 %s472, %s622
                %s626 = scalar_lea.vmem %s463, %s625 [#allocation3]
                %s627 = sshrl.u32 %s472, 3
                %s628 = sshrl.u32 %s627, 3
                // While loop
                $region136: #{conv_bn_add.3} parent=134 // loop_pre_header
                  _
                $region137: #{conv_bn_add.3} parent=134 // loop_header
                  %s630 = sphi 0, %s632
                  %p631 = scmp.ge.s32.totalorder %s630, %s628
                  %s635 = sphi 0, %s704
                  %s636 = sphi %s471, %s707
                  %s637 = sphi %s463, %s708
                $region138: #{conv_bn_add.3} parent=134 // loop_header_branch
                  %634 = sbr.rel (%p631) target = $region142
                $region139: #{conv_bn_add.3} parent=134 // loop_body
                  %v638 = vld [vmem:[%s636] sm:$0xff]
                  %639 = vst [vmem:[%s637] sm:$0xff] %v638
                  %v640 = vld [vmem:[%s636 + $0x8] sm:$0xff]
                  %641 = vst [vmem:[%s637 + $0x8] sm:$0xff] %v640
                  %v642 = vld [vmem:[%s636 + $0x10] sm:$0xff]
                  %643 = vst [vmem:[%s637 + $0x10] sm:$0xff] %v642
                  %v644 = vld [vmem:[%s636 + $0x18] sm:$0xff]
                  %645 = vst [vmem:[%s637 + $0x18] sm:$0xff] %v644
                  %v646 = vld [vmem:[%s636 + $0x20] sm:$0xff]
                  %647 = vst [vmem:[%s637 + $0x20] sm:$0xff] %v646
                  %v648 = vld [vmem:[%s636 + $0x28] sm:$0xff]
                  %649 = vst [vmem:[%s637 + $0x28] sm:$0xff] %v648
                  %v650 = vld [vmem:[%s636 + $0x30] sm:$0xff]
                  %651 = vst [vmem:[%s637 + $0x30] sm:$0xff] %v650
                  %v652 = vld [vmem:[%s636 + $0x38] sm:$0xff]
                  %653 = vst [vmem:[%s637 + $0x38] sm:$0xff] %v652
                  %v654 = vld [vmem:[%s636 + $0x38] sm:$0xff]
                  %655 = vst [vmem:[%s637 + $0x20] sm:$0xff] %v654
                  %v656 = vld [vmem:[%s636 + $0x40] sm:$0xff]
                  %657 = vst [vmem:[%s637 + $0x28] sm:$0xff] %v656
                  %v658 = vld [vmem:[%s636 + $0x48] sm:$0xff]
                  %659 = vst [vmem:[%s637 + $0x30] sm:$0xff] %v658
                  %v660 = vld [vmem:[%s636 + $0x50] sm:$0xff]
                  %661 = vst [vmem:[%s637 + $0x38] sm:$0xff] %v660
                  %v662 = vld [vmem:[%s636 + $0x58] sm:$0xff]
                  %663 = vst [vmem:[%s637 + $0x40] sm:$0xff] %v662
                  %v664 = vld [vmem:[%s636 + $0x60] sm:$0xff]
                  %665 = vst [vmem:[%s637 + $0x48] sm:$0xff] %v664
                  %v666 = vld [vmem:[%s636 + $0x68] sm:$0xff]
                  %667 = vst [vmem:[%s637 + $0x50] sm:$0xff] %v666
                  %v668 = vld [vmem:[%s636 + $0x70] sm:$0xff]
                  %669 = vst [vmem:[%s637 + $0x58] sm:$0xff] %v668
                  %v670 = vld [vmem:[%s636 + $0x70] sm:$0xff]
                  %671 = vst [vmem:[%s637 + $0x40] sm:$0xff] %v670
                  %v672 = vld [vmem:[%s636 + $0x78] sm:$0xff]
                  %673 = vst [vmem:[%s637 + $0x48] sm:$0xff] %v672
                  %v674 = vld [vmem:[%s636 + $0x80] sm:$0xff]
                  %675 = vst [vmem:[%s637 + $0x50] sm:$0xff] %v674
                  %v676 = vld [vmem:[%s636 + $0x88] sm:$0xff]
                  %677 = vst [vmem:[%s637 + $0x58] sm:$0xff] %v676
                  %v678 = vld [vmem:[%s636 + $0x90] sm:$0xff]
                  %679 = vst [vmem:[%s637 + $0x60] sm:$0xff] %v678
                  %v680 = vld [vmem:[%s636 + $0x98] sm:$0xff]
                  %681 = vst [vmem:[%s637 + $0x68] sm:$0xff] %v680
                  %v682 = vld [vmem:[%s636 + $0xa0] sm:$0xff]
                  %683 = vst [vmem:[%s637 + $0x70] sm:$0xff] %v682
                  %v684 = vld [vmem:[%s636 + $0xa8] sm:$0xff]
                  %685 = vst [vmem:[%s637 + $0x78] sm:$0xff] %v684
                  %v686 = vld [vmem:[%s636 + $0xa8] sm:$0xff]
                  %687 = vst [vmem:[%s637 + $0x60] sm:$0xff] %v686
                  %v688 = vld [vmem:[%s636 + $0xb0] sm:$0xff]
                  %689 = vst [vmem:[%s637 + $0x68] sm:$0xff] %v688
                  %v690 = vld [vmem:[%s636 + $0xb8] sm:$0xff]
                  %691 = vst [vmem:[%s637 + $0x70] sm:$0xff] %v690
                  %v692 = vld [vmem:[%s636 + $0xc0] sm:$0xff]
                  %693 = vst [vmem:[%s637 + $0x78] sm:$0xff] %v692
                  %v694 = vld [vmem:[%s636 + $0xc8] sm:$0xff]
                  %695 = vst [vmem:[%s637 + $0x80] sm:$0xff] %v694
                  %v696 = vld [vmem:[%s636 + $0xd0] sm:$0xff]
                  %697 = vst [vmem:[%s637 + $0x88] sm:$0xff] %v696
                  %v698 = vld [vmem:[%s636 + $0xd8] sm:$0xff]
                  %699 = vst [vmem:[%s637 + $0x90] sm:$0xff] %v698
                  %v700 = vld [vmem:[%s636 + $0xe0] sm:$0xff]
                  %701 = vst [vmem:[%s637 + $0x98] sm:$0xff] %v700
                  %s702 = sadd.s32 1, %s635
                  %p703 = scmp.ge.s32.totalorder %s702, %s628
                  %s704 = scalar_select %p703, 0, %s702
                  %s705 = smul.u32 %s704, 64
                  %s706 = smul.u32 %s704, 64
                  %s707 = scalar_lea.vmem %s471, %s705
                  %s708 = scalar_lea.vmem %s463, %s706 [#allocation3]
                $region140: #{conv_bn_add.3} parent=134 // loop_footer
                  %s632 = sadd.s32 %s630, 1
                $region141: #{conv_bn_add.3} parent=134 // loop_footer_branch
                  %629 = sbr.rel target = $region137
                $region142: #{conv_bn_add.3} parent=134 // loop_exit
                  _
                %s709 = sshrl.u32 %s627, 3
                %s710 = sand.u32 %s627, 7
                %s711 = smul.u32 %s709, 8
                %s712 = smul.u32 8, %s711
                %s713 = scalar_lea.vmem %s471, %s712
                %s714 = smul.u32 8, %s711
                %s715 = scalar_lea.vmem %s463, %s714 [#allocation3]
                // While loop
                $region143: #{conv_bn_add.3} parent=134 // loop_pre_header
                  _
                $region144: #{conv_bn_add.3} parent=134 // loop_header
                  %s717 = sphi 0, %s719
                  %p718 = scmp.ge.s32.totalorder %s717, %s710
                  %s722 = sphi 0, %s735
                  %s723 = sphi %s713, %s738
                  %s724 = sphi %s715, %s739
                $region145: #{conv_bn_add.3} parent=134 // loop_header_branch
                  %721 = sbr.rel (%p718) target = $region149
                $region146: #{conv_bn_add.3} parent=134 // loop_body
                  %v725 = vld [vmem:[%s723] sm:$0xff]
                  %726 = vst [vmem:[%s724] sm:$0xff] %v725
                  %v727 = vld [vmem:[%s723 + $0x38] sm:$0xff]
                  %728 = vst [vmem:[%s724 + $0x20] sm:$0xff] %v727
                  %v729 = vld [vmem:[%s723 + $0x70] sm:$0xff]
                  %730 = vst [vmem:[%s724 + $0x40] sm:$0xff] %v729
                  %v731 = vld [vmem:[%s723 + $0xa8] sm:$0xff]
                  %732 = vst [vmem:[%s724 + $0x60] sm:$0xff] %v731
                  %s733 = sadd.s32 1, %s722
                  %p734 = scmp.ge.s32.totalorder %s733, %s710
                  %s735 = scalar_select %p734, 0, %s733
                  %s736 = smul.u32 %s735, 8
                  %s737 = smul.u32 %s735, 8
                  %s738 = scalar_lea.vmem %s713, %s736
                  %s739 = scalar_lea.vmem %s715, %s737 [#allocation3]
                $region147: #{conv_bn_add.3} parent=134 // loop_footer
                  %s719 = sadd.s32 %s717, 1
                $region148: #{conv_bn_add.3} parent=134 // loop_footer_branch
                  %716 = sbr.rel target = $region144
                $region149: #{conv_bn_add.3} parent=134 // loop_exit
                  _
                %s740 = sshll.u32 1, %s622
                %s741 = ssub.s32 %s740, 1
                loop: start=0, step=1, limit=1
                $region150: #{conv_bn_add.3} parent=134 // loop_pre_header
                  _
                $region151: #{conv_bn_add.3} parent=134 // loop_header
                  %s743 = sphi 0, %s747
                  %p744 = scmp.ge.s32.totalorder %s743, 1
                  %s748 = sphi %s624, %s624
                  %s749 = sphi %s626, %s626
                $region152: #{conv_bn_add.3} parent=134 // loop_header_branch
                  %746 = sbr.rel (%p744) target = $region156
                $region153: #{conv_bn_add.3} parent=134 // loop_body
                  %v750 = vld [vmem:[%s748] sm:%s741]
                  %751 = vst [vmem:[%s749] sm:%s741] %v750
                  %v752 = vld [vmem:[%s748 + $0x38] sm:%s741]
                  %753 = vst [vmem:[%s749 + $0x20] sm:%s741] %v752
                  %v754 = vld [vmem:[%s748 + $0x70] sm:%s741]
                  %755 = vst [vmem:[%s749 + $0x40] sm:%s741] %v754
                  %v756 = vld [vmem:[%s748 + $0xa8] sm:%s741]
                  %757 = vst [vmem:[%s749 + $0x60] sm:%s741] %v756
                $region154: #{conv_bn_add.3} parent=134 // loop_footer
                  %s747 = sadd.s32 1, %s743
                $region155: #{conv_bn_add.3} parent=134 // loop_footer_branch
                  %742 = sbr.rel target = $region151
                $region156: #{conv_bn_add.3} parent=134 // loop_exit
                  _
              $region135: #{conv_bn_add.3} parent=101 // pred_fallthru
                _
            $region102: #{conv_bn_add.3} parent=97 // pred_fallthru
              _
            // Predicated region
            $region103: #{conv_bn_add.3} parent=97 // pred_check
              %p480 = pneg %p476
            $region104: #{conv_bn_add.3} parent=97 // pred_check_branch
              %482 = sbr.rel (%p480) target = $region106
            $region105: #{conv_bn_add.3} parent=97 // pred_region
              %s483 = sshll.u32 1, %s472
              %s484 = ssub.s32 %s483, 1
              loop: start=0, step=1, limit=1
              $region107: #{conv_bn_add.3} parent=105 // loop_pre_header
                _
              $region108: #{conv_bn_add.3} parent=105 // loop_header
                %s486 = sphi 0, %s490
                %p487 = scmp.ge.s32.totalorder %s486, 1
                %s491 = sphi %s471, %s471
                %s492 = sphi %s463, %s463
              $region109: #{conv_bn_add.3} parent=105 // loop_header_branch
                %489 = sbr.rel (%p487) target = $region113
              $region110: #{conv_bn_add.3} parent=105 // loop_body
                %v493 = vld [vmem:[%s491] sm:%s484]
                %494 = vst [vmem:[%s492] sm:%s484] %v493
                %v495 = vld [vmem:[%s491 + $0x38] sm:%s484]
                %496 = vst [vmem:[%s492 + $0x20] sm:%s484] %v495
                %v497 = vld [vmem:[%s491 + $0x70] sm:%s484]
                %498 = vst [vmem:[%s492 + $0x40] sm:%s484] %v497
                %v499 = vld [vmem:[%s491 + $0xa8] sm:%s484]
                %500 = vst [vmem:[%s492 + $0x60] sm:%s484] %v499
              $region111: #{conv_bn_add.3} parent=105 // loop_footer
                %s490 = sadd.s32 1, %s486
              $region112: #{conv_bn_add.3} parent=105 // loop_footer_branch
                %485 = sbr.rel target = $region108
              $region113: #{conv_bn_add.3} parent=105 // loop_exit
                _
            $region106: #{conv_bn_add.3} parent=97 // pred_fallthru
              _
          $region98: #{conv_bn_add.3} parent=93 // pred_fallthru
            _
          %758 = vnop
        $region94: #{conv_bn_add.3} parent=23 // pred_fallthru
          _
      $region24: #{conv_bn_add.3} parent=5 // pred_fallthru
        _
      %p759 = scmp.le.s32.totalorder 1, %s10
      %p760 = scmp.lt.s32.totalorder %s10, 3
      %p761 = pnand %p759, %p760
      %p762 = pneg %p761
      // Predicated region
      $region157: #{conv_bn_add.3} parent=5 // pred_check
        _
      $region158: #{conv_bn_add.3} parent=5 // pred_check_branch
        %764 = sbr.rel (%p761) target = $region160
      $region159: #{conv_bn_add.3} parent=5 // pred_region
        %s765 = ssub.s32 %s10, 1
        %s766 = sand.u32 %s65, 1
        %s767 = sand.u32 %s65, 1
        %s768 = smul.addr %s767, 128
        %s769 = scalar_lea.vmem [#allocation2], %s768
        // Predicated region
        $region161: #{conv_bn_add.3} parent=159 // pred_check
          %p770 = pneg %p78
        $region162: #{conv_bn_add.3} parent=159 // pred_check_branch
          %772 = sbr.rel (%p770) target = $region164
        $region163: #{conv_bn_add.3} parent=159 // pred_region
          _
        $region164: #{conv_bn_add.3} parent=159 // pred_fallthru
          _
        %s773 = sand.u32 %s91, 1
        %s774 = sand.u32 %s91, 1
        %s775 = smul.addr %s774, 128
        %s776 = scalar_lea.vmem [#allocation3], %s775
        // Predicated region
        $region165: #{conv_bn_add.3} parent=159 // pred_check
          %p777 = pneg %p104
        $region166: #{conv_bn_add.3} parent=159 // pred_check_branch
          %779 = sbr.rel (%p777) target = $region168
        $region167: #{conv_bn_add.3} parent=159 // pred_region
          _
        $region168: #{conv_bn_add.3} parent=159 // pred_fallthru
          _
        %p780 = pneg %p31
        %p781 = pneg %p28
        %p782 = pneg %p52
        %p783 = pneg %p49
        %s784 = sand.u32 %s65, 1
        %s785 = sand.u32 %s65, 1
        %s786 = smul.addr %s785, 128
        %s787 = scalar_lea.vmem [#allocation2], %s786
        %p788 = pneg %p78
        %p789 = pneg %p75
        %s790 = sand.u32 %s91, 1
        %s791 = sand.u32 %s91, 1
        %s792 = smul.addr %s791, 128
        %s793 = scalar_lea.vmem [#allocation3], %s792
        %p794 = pneg %p104
        %p795 = pneg %p101
        %p796 = pneg %p130
        %p797 = pneg %p127
        %s798 = sand.u32 %s117, 1
        %s799 = sand.u32 %s117, 1
        %s800 = smul.addr %s799, 128
        %s801 = scalar_lea.vmem [#allocation4], %s800
        %s802 = smul.u32 4, %s15
        %s803 = ssub.s32 7, %s802
        %p804 = scmp.lt.s32.totalorder %s803, 4
        %s805 = scalar_select %p804, %s803, 4
        %s806 = smul.u32 32, %s805
        %s807 = smul.u32 4, %s15
        %s808 = ssub.s32 7, %s807
        %p809 = scmp.lt.s32.totalorder %s808, 4
        %s810 = scalar_select %p809, %s808, 4
        %s811 = smul.u32 32, %s810
        %s812 = smul.u32 4, %s15
        %s813 = ssub.s32 7, %s812
        %p814 = scmp.lt.s32.totalorder %s813, 4
        %s815 = scalar_select %p814, %s813, 4
        %s816 = smul.u32 32, %s815
        %v817 = vld [vmem:[%s769] sm:$0xff]
        %v818 = vld [vmem:[%s769 + $0x8] sm:$0xff]
        %v819 = vld [vmem:[%s769 + $0x10] sm:$0xff]
        %v820 = vld [vmem:[%s769 + $0x18] sm:$0xff]
        %v821 = vld [vmem:[%s769 + $0x20] sm:$0xff]
        %v822 = vld [vmem:[%s769 + $0x28] sm:$0xff]
        %v823 = vld [vmem:[%s769 + $0x30] sm:$0xff]
        %v824 = vld [vmem:[%s769 + $0x38] sm:$0xff]
        %v825 = vld [vmem:[%s769 + $0x40] sm:$0xff]
        %v826 = vld [vmem:[%s769 + $0x48] sm:$0xff]
        %v827 = vld [vmem:[%s769 + $0x50] sm:$0xff]
        %v828 = vld [vmem:[%s769 + $0x58] sm:$0xff]
        %v829 = vld [vmem:[%s769 + $0x60] sm:$0xff]
        %v830 = vld [vmem:[%s769 + $0x68] sm:$0xff]
        %v831 = vld [vmem:[%s769 + $0x70] sm:$0xff]
        %v832 = vld [vmem:[%s769 + $0x78] sm:$0xff]
        %v833 = vld [vmem:[%s0] sm:$0xff]
        %v834 = vld [vmem:[%s0 + $0x8] sm:$0xff]
        %v835 = vld [vmem:[%s0 + $0x10] sm:$0xff]
        %v836 = vld [vmem:[%s0 + $0x18] sm:$0xff]
        %838 = vset.pattern.permute.xlu0 0
        %839 = vperm.xlu0 %838, %v833
        %v840 = vpop.permute.xlu0 %839
        %843 = vset.pattern.permute.xlu0 0
        %844 = vperm.xlu0 %843, %v834
        %v845 = vpop.permute.xlu0 %844
        %848 = vset.pattern.permute.xlu0 0
        %849 = vperm.xlu0 %848, %v835
        %v850 = vpop.permute.xlu0 %849
        %853 = vset.pattern.permute.xlu0 0
        %854 = vperm.xlu0 %853, %v836
        %v855 = vpop.permute.xlu0 %854
        %v857 = vmul.f32 %v817, %v840
        %v858 = vmul.f32 %v818, %v840
        %v859 = vmul.f32 %v819, %v840
        %v860 = vmul.f32 %v820, %v840
        %v861 = vmul.f32 %v821, %v845
        %v862 = vmul.f32 %v822, %v845
        %v863 = vmul.f32 %v823, %v845
        %v864 = vmul.f32 %v824, %v845
        %v865 = vmul.f32 %v825, %v850
        %v866 = vmul.f32 %v826, %v850
        %v867 = vmul.f32 %v827, %v850
        %v868 = vmul.f32 %v828, %v850
        %v869 = vmul.f32 %v829, %v855
        %v870 = vmul.f32 %v830, %v855
        %v871 = vmul.f32 %v831, %v855
        %v872 = vmul.f32 %v832, %v855
        %v873 = vld [vmem:[%s1] sm:$0xff]
        %v874 = vld [vmem:[%s1 + $0x8] sm:$0xff]
        %v875 = vld [vmem:[%s1 + $0x10] sm:$0xff]
        %v876 = vld [vmem:[%s1 + $0x18] sm:$0xff]
        %878 = vset.pattern.permute.xlu0 0
        %879 = vperm.xlu0 %878, %v873
        %v880 = vpop.permute.xlu0 %879
        %883 = vset.pattern.permute.xlu0 0
        %884 = vperm.xlu0 %883, %v874
        %v885 = vpop.permute.xlu0 %884
        %888 = vset.pattern.permute.xlu0 0
        %889 = vperm.xlu0 %888, %v875
        %v890 = vpop.permute.xlu0 %889
        %893 = vset.pattern.permute.xlu0 0
        %894 = vperm.xlu0 %893, %v876
        %v895 = vpop.permute.xlu0 %894
        %v897 = vadd.f32 %v857, %v880
        %v898 = vadd.f32 %v858, %v880
        %v899 = vadd.f32 %v859, %v880
        %v900 = vadd.f32 %v860, %v880
        %v901 = vadd.f32 %v861, %v885
        %v902 = vadd.f32 %v862, %v885
        %v903 = vadd.f32 %v863, %v885
        %v904 = vadd.f32 %v864, %v885
        %v905 = vadd.f32 %v865, %v890
        %v906 = vadd.f32 %v866, %v890
        %v907 = vadd.f32 %v867, %v890
        %v908 = vadd.f32 %v868, %v890
        %v909 = vadd.f32 %v869, %v895
        %v910 = vadd.f32 %v870, %v895
        %v911 = vadd.f32 %v871, %v895
        %v912 = vadd.f32 %v872, %v895
        %v913 = vld [vmem:[%s776] sm:$0xff]
        %v914 = vld [vmem:[%s776 + $0x8] sm:$0xff]
        %v915 = vld [vmem:[%s776 + $0x10] sm:$0xff]
        %v916 = vld [vmem:[%s776 + $0x18] sm:$0xff]
        %v917 = vld [vmem:[%s776 + $0x20] sm:$0xff]
        %v918 = vld [vmem:[%s776 + $0x28] sm:$0xff]
        %v919 = vld [vmem:[%s776 + $0x30] sm:$0xff]
        %v920 = vld [vmem:[%s776 + $0x38] sm:$0xff]
        %v921 = vld [vmem:[%s776 + $0x40] sm:$0xff]
        %v922 = vld [vmem:[%s776 + $0x48] sm:$0xff]
        %v923 = vld [vmem:[%s776 + $0x50] sm:$0xff]
        %v924 = vld [vmem:[%s776 + $0x58] sm:$0xff]
        %v925 = vld [vmem:[%s776 + $0x60] sm:$0xff]
        %v926 = vld [vmem:[%s776 + $0x68] sm:$0xff]
        %v927 = vld [vmem:[%s776 + $0x70] sm:$0xff]
        %v928 = vld [vmem:[%s776 + $0x78] sm:$0xff]
        %v929 = vadd.f32 %v897, %v913
        %v930 = vadd.f32 %v898, %v914
        %v931 = vadd.f32 %v899, %v915
        %v932 = vadd.f32 %v900, %v916
        %v933 = vadd.f32 %v901, %v917
        %v934 = vadd.f32 %v902, %v918
        %v935 = vadd.f32 %v903, %v919
        %v936 = vadd.f32 %v904, %v920
        %v937 = vadd.f32 %v905, %v921
        %v938 = vadd.f32 %v906, %v922
        %v939 = vadd.f32 %v907, %v923
        %v940 = vadd.f32 %v908, %v924
        %v941 = vadd.f32 %v909, %v925
        %v942 = vadd.f32 %v910, %v926
        %v943 = vadd.f32 %v911, %v927
        %v944 = vadd.f32 %v912, %v928
        %945 = vst [vmem:[%s801] sm:$0xff] %v929
        %946 = vst [vmem:[%s801 + $0x8] sm:$0xff] %v930
        %947 = vst [vmem:[%s801 + $0x10] sm:$0xff] %v931
        %948 = vst [vmem:[%s801 + $0x18] sm:$0xff] %v932
        %949 = vst [vmem:[%s801 + $0x20] sm:$0xff] %v933
        %950 = vst [vmem:[%s801 + $0x28] sm:$0xff] %v934
        %951 = vst [vmem:[%s801 + $0x30] sm:$0xff] %v935
        %952 = vst [vmem:[%s801 + $0x38] sm:$0xff] %v936
        %953 = vst [vmem:[%s801 + $0x40] sm:$0xff] %v937
        %954 = vst [vmem:[%s801 + $0x48] sm:$0xff] %v938
        %955 = vst [vmem:[%s801 + $0x50] sm:$0xff] %v939
        %956 = vst [vmem:[%s801 + $0x58] sm:$0xff] %v940
        %957 = vst [vmem:[%s801 + $0x60] sm:$0xff] %v941
        %958 = vst [vmem:[%s801 + $0x68] sm:$0xff] %v942
        %959 = vst [vmem:[%s801 + $0x70] sm:$0xff] %v943
        %960 = vst [vmem:[%s801 + $0x78] sm:$0xff] %v944
        %s961 = sand.u32 %s117, 1
        %s962 = sand.u32 %s117, 1
        %s963 = smul.addr %s962, 128
        %s964 = scalar_lea.vmem [#allocation4], %s963
        // Predicated region
        $region169: #{conv_bn_add.3} parent=159 // pred_check
          %p965 = pneg %p127
        $region170: #{conv_bn_add.3} parent=159 // pred_check_branch
          %967 = sbr.rel (%p965) target = $region172
        $region171: #{conv_bn_add.3} parent=159 // pred_region
          %s968 = smul.u32 4, %s15
          %s969 = ssub.s32 7, %s968
          %p970 = scmp.lt.s32.totalorder %s969, 4
          %s971 = scalar_select %p970, %s969, 4
          %s972 = smul.u32 32, %s971
          %p973 = scmp.ne.s32.totalorder 0, %s972
          %s974 = smul.addr %s968, 8
          %s975 = scalar_lea.vmem %s4, %s974
          %s976 = smul.u32 %s971, 8
          // Predicated region
          $region173: #{conv_bn_add.3} parent=171 // pred_check
            %p977 = pneg %p973
          $region174: #{conv_bn_add.3} parent=171 // pred_check_branch
            %979 = sbr.rel (%p977) target = $region176
          $region175: #{conv_bn_add.3} parent=171 // pred_region
            %p980 = scmp.lt.u32.totalorder %s976, 8
            %p981 = pneg %p980
            // Predicated region
            $region177: #{conv_bn_add.3} parent=175 // pred_check
              _
            $region178: #{conv_bn_add.3} parent=175 // pred_check_branch
              %983 = sbr.rel (%p980) target = $region180
            $region179: #{conv_bn_add.3} parent=175 // pred_region
              %s1005 = sand.u32 %s976, 7
              %p1006 = scmp.eq.s32.totalorder %s1005, 0
              // Predicated region
              $region192: #{conv_bn_add.3} parent=179 // pred_check
                %p1007 = pneg %p1006
              $region193: #{conv_bn_add.3} parent=179 // pred_check_branch
                %1009 = sbr.rel (%p1007) target = $region195
              $region194: #{conv_bn_add.3} parent=179 // pred_region
                %s1010 = sshrl.u32 %s976, 3
                %s1011 = sshrl.u32 %s1010, 3
                // While loop
                $region196: #{conv_bn_add.3} parent=194 // loop_pre_header
                  _
                $region197: #{conv_bn_add.3} parent=194 // loop_header
                  %s1013 = sphi 0, %s1015
                  %p1014 = scmp.ge.s32.totalorder %s1013, %s1011
                  %s1018 = sphi 0, %s1087
                  %s1019 = sphi %s964, %s1090
                  %s1020 = sphi %s975, %s1091
                $region198: #{conv_bn_add.3} parent=194 // loop_header_branch
                  %1017 = sbr.rel (%p1014) target = $region202
                $region199: #{conv_bn_add.3} parent=194 // loop_body
                  %v1021 = vld [vmem:[%s1019] sm:$0xff]
                  %1022 = vst [vmem:[%s1020] sm:$0xff] %v1021
                  %v1023 = vld [vmem:[%s1019 + $0x8] sm:$0xff]
                  %1024 = vst [vmem:[%s1020 + $0x8] sm:$0xff] %v1023
                  %v1025 = vld [vmem:[%s1019 + $0x10] sm:$0xff]
                  %1026 = vst [vmem:[%s1020 + $0x10] sm:$0xff] %v1025
                  %v1027 = vld [vmem:[%s1019 + $0x18] sm:$0xff]
                  %1028 = vst [vmem:[%s1020 + $0x18] sm:$0xff] %v1027
                  %v1029 = vld [vmem:[%s1019 + $0x20] sm:$0xff]
                  %1030 = vst [vmem:[%s1020 + $0x20] sm:$0xff] %v1029
                  %v1031 = vld [vmem:[%s1019 + $0x28] sm:$0xff]
                  %1032 = vst [vmem:[%s1020 + $0x28] sm:$0xff] %v1031
                  %v1033 = vld [vmem:[%s1019 + $0x30] sm:$0xff]
                  %1034 = vst [vmem:[%s1020 + $0x30] sm:$0xff] %v1033
                  %v1035 = vld [vmem:[%s1019 + $0x38] sm:$0xff]
                  %1036 = vst [vmem:[%s1020 + $0x38] sm:$0xff] %v1035
                  %v1037 = vld [vmem:[%s1019 + $0x20] sm:$0xff]
                  %1038 = vst [vmem:[%s1020 + $0x38] sm:$0xff] %v1037
                  %v1039 = vld [vmem:[%s1019 + $0x28] sm:$0xff]
                  %1040 = vst [vmem:[%s1020 + $0x40] sm:$0xff] %v1039
                  %v1041 = vld [vmem:[%s1019 + $0x30] sm:$0xff]
                  %1042 = vst [vmem:[%s1020 + $0x48] sm:$0xff] %v1041
                  %v1043 = vld [vmem:[%s1019 + $0x38] sm:$0xff]
                  %1044 = vst [vmem:[%s1020 + $0x50] sm:$0xff] %v1043
                  %v1045 = vld [vmem:[%s1019 + $0x40] sm:$0xff]
                  %1046 = vst [vmem:[%s1020 + $0x58] sm:$0xff] %v1045
                  %v1047 = vld [vmem:[%s1019 + $0x48] sm:$0xff]
                  %1048 = vst [vmem:[%s1020 + $0x60] sm:$0xff] %v1047
                  %v1049 = vld [vmem:[%s1019 + $0x50] sm:$0xff]
                  %1050 = vst [vmem:[%s1020 + $0x68] sm:$0xff] %v1049
                  %v1051 = vld [vmem:[%s1019 + $0x58] sm:$0xff]
                  %1052 = vst [vmem:[%s1020 + $0x70] sm:$0xff] %v1051
                  %v1053 = vld [vmem:[%s1019 + $0x40] sm:$0xff]
                  %1054 = vst [vmem:[%s1020 + $0x70] sm:$0xff] %v1053
                  %v1055 = vld [vmem:[%s1019 + $0x48] sm:$0xff]
                  %1056 = vst [vmem:[%s1020 + $0x78] sm:$0xff] %v1055
                  %v1057 = vld [vmem:[%s1019 + $0x50] sm:$0xff]
                  %1058 = vst [vmem:[%s1020 + $0x80] sm:$0xff] %v1057
                  %v1059 = vld [vmem:[%s1019 + $0x58] sm:$0xff]
                  %1060 = vst [vmem:[%s1020 + $0x88] sm:$0xff] %v1059
                  %v1061 = vld [vmem:[%s1019 + $0x60] sm:$0xff]
                  %1062 = vst [vmem:[%s1020 + $0x90] sm:$0xff] %v1061
                  %v1063 = vld [vmem:[%s1019 + $0x68] sm:$0xff]
                  %1064 = vst [vmem:[%s1020 + $0x98] sm:$0xff] %v1063
                  %v1065 = vld [vmem:[%s1019 + $0x70] sm:$0xff]
                  %1066 = vst [vmem:[%s1020 + $0xa0] sm:$0xff] %v1065
                  %v1067 = vld [vmem:[%s1019 + $0x78] sm:$0xff]
                  %1068 = vst [vmem:[%s1020 + $0xa8] sm:$0xff] %v1067
                  %v1069 = vld [vmem:[%s1019 + $0x60] sm:$0xff]
                  %1070 = vst [vmem:[%s1020 + $0xa8] sm:$0xff] %v1069
                  %v1071 = vld [vmem:[%s1019 + $0x68] sm:$0xff]
                  %1072 = vst [vmem:[%s1020 + $0xb0] sm:$0xff] %v1071
                  %v1073 = vld [vmem:[%s1019 + $0x70] sm:$0xff]
                  %1074 = vst [vmem:[%s1020 + $0xb8] sm:$0xff] %v1073
                  %v1075 = vld [vmem:[%s1019 + $0x78] sm:$0xff]
                  %1076 = vst [vmem:[%s1020 + $0xc0] sm:$0xff] %v1075
                  %v1077 = vld [vmem:[%s1019 + $0x80] sm:$0xff]
                  %1078 = vst [vmem:[%s1020 + $0xc8] sm:$0xff] %v1077
                  %v1079 = vld [vmem:[%s1019 + $0x88] sm:$0xff]
                  %1080 = vst [vmem:[%s1020 + $0xd0] sm:$0xff] %v1079
                  %v1081 = vld [vmem:[%s1019 + $0x90] sm:$0xff]
                  %1082 = vst [vmem:[%s1020 + $0xd8] sm:$0xff] %v1081
                  %v1083 = vld [vmem:[%s1019 + $0x98] sm:$0xff]
                  %1084 = vst [vmem:[%s1020 + $0xe0] sm:$0xff] %v1083
                  %s1085 = sadd.s32 1, %s1018
                  %p1086 = scmp.ge.s32.totalorder %s1085, %s1011
                  %s1087 = scalar_select %p1086, 0, %s1085
                  %s1088 = smul.u32 %s1087, 64
                  %s1089 = smul.u32 %s1087, 64
                  %s1090 = scalar_lea.vmem %s964, %s1088 [#allocation4]
                  %s1091 = scalar_lea.vmem %s975, %s1089
                $region200: #{conv_bn_add.3} parent=194 // loop_footer
                  %s1015 = sadd.s32 %s1013, 1
                $region201: #{conv_bn_add.3} parent=194 // loop_footer_branch
                  %1012 = sbr.rel target = $region197
                $region202: #{conv_bn_add.3} parent=194 // loop_exit
                  _
                %s1092 = sshrl.u32 %s1010, 3
                %s1093 = sand.u32 %s1010, 7
                %s1094 = smul.u32 %s1092, 8
                %s1095 = smul.u32 8, %s1094
                %s1096 = scalar_lea.vmem %s964, %s1095 [#allocation4]
                %s1097 = smul.u32 8, %s1094
                %s1098 = scalar_lea.vmem %s975, %s1097
                // While loop
                $region203: #{conv_bn_add.3} parent=194 // loop_pre_header
                  _
                $region204: #{conv_bn_add.3} parent=194 // loop_header
                  %s1100 = sphi 0, %s1102
                  %p1101 = scmp.ge.s32.totalorder %s1100, %s1093
                  %s1105 = sphi 0, %s1118
                  %s1106 = sphi %s1096, %s1121
                  %s1107 = sphi %s1098, %s1122
                $region205: #{conv_bn_add.3} parent=194 // loop_header_branch
                  %1104 = sbr.rel (%p1101) target = $region209
                $region206: #{conv_bn_add.3} parent=194 // loop_body
                  %v1108 = vld [vmem:[%s1106] sm:$0xff]
                  %1109 = vst [vmem:[%s1107] sm:$0xff] %v1108
                  %v1110 = vld [vmem:[%s1106 + $0x20] sm:$0xff]
                  %1111 = vst [vmem:[%s1107 + $0x38] sm:$0xff] %v1110
                  %v1112 = vld [vmem:[%s1106 + $0x40] sm:$0xff]
                  %1113 = vst [vmem:[%s1107 + $0x70] sm:$0xff] %v1112
                  %v1114 = vld [vmem:[%s1106 + $0x60] sm:$0xff]
                  %1115 = vst [vmem:[%s1107 + $0xa8] sm:$0xff] %v1114
                  %s1116 = sadd.s32 1, %s1105
                  %p1117 = scmp.ge.s32.totalorder %s1116, %s1093
                  %s1118 = scalar_select %p1117, 0, %s1116
                  %s1119 = smul.u32 %s1118, 8
                  %s1120 = smul.u32 %s1118, 8
                  %s1121 = scalar_lea.vmem %s1096, %s1119 [#allocation4]
                  %s1122 = scalar_lea.vmem %s1098, %s1120
                $region207: #{conv_bn_add.3} parent=194 // loop_footer
                  %s1102 = sadd.s32 %s1100, 1
                $region208: #{conv_bn_add.3} parent=194 // loop_footer_branch
                  %1099 = sbr.rel target = $region204
                $region209: #{conv_bn_add.3} parent=194 // loop_exit
                  _
              $region195: #{conv_bn_add.3} parent=179 // pred_fallthru
                _
              %p1123 = pneg %p1006
              // Predicated region
              $region210: #{conv_bn_add.3} parent=179 // pred_check
                _
              $region211: #{conv_bn_add.3} parent=179 // pred_check_branch
                %1125 = sbr.rel (%p1006) target = $region213
              $region212: #{conv_bn_add.3} parent=179 // pred_region
                %s1126 = sand.u32 %s976, 7
                %s1127 = ssub.s32 %s976, %s1126
                %s1128 = scalar_lea.vmem %s964, %s1127 [#allocation4]
                %s1129 = ssub.s32 %s976, %s1126
                %s1130 = scalar_lea.vmem %s975, %s1129
                %s1131 = sshrl.u32 %s976, 3
                %s1132 = sshrl.u32 %s1131, 3
                // While loop
                $region214: #{conv_bn_add.3} parent=212 // loop_pre_header
                  _
                $region215: #{conv_bn_add.3} parent=212 // loop_header
                  %s1134 = sphi 0, %s1136
                  %p1135 = scmp.ge.s32.totalorder %s1134, %s1132
                  %s1139 = sphi 0, %s1208
                  %s1140 = sphi %s964, %s1211
                  %s1141 = sphi %s975, %s1212
                $region216: #{conv_bn_add.3} parent=212 // loop_header_branch
                  %1138 = sbr.rel (%p1135) target = $region220
                $region217: #{conv_bn_add.3} parent=212 // loop_body
                  %v1142 = vld [vmem:[%s1140] sm:$0xff]
                  %1143 = vst [vmem:[%s1141] sm:$0xff] %v1142
                  %v1144 = vld [vmem:[%s1140 + $0x8] sm:$0xff]
                  %1145 = vst [vmem:[%s1141 + $0x8] sm:$0xff] %v1144
                  %v1146 = vld [vmem:[%s1140 + $0x10] sm:$0xff]
                  %1147 = vst [vmem:[%s1141 + $0x10] sm:$0xff] %v1146
                  %v1148 = vld [vmem:[%s1140 + $0x18] sm:$0xff]
                  %1149 = vst [vmem:[%s1141 + $0x18] sm:$0xff] %v1148
                  %v1150 = vld [vmem:[%s1140 + $0x20] sm:$0xff]
                  %1151 = vst [vmem:[%s1141 + $0x20] sm:$0xff] %v1150
                  %v1152 = vld [vmem:[%s1140 + $0x28] sm:$0xff]
                  %1153 = vst [vmem:[%s1141 + $0x28] sm:$0xff] %v1152
                  %v1154 = vld [vmem:[%s1140 + $0x30] sm:$0xff]
                  %1155 = vst [vmem:[%s1141 + $0x30] sm:$0xff] %v1154
                  %v1156 = vld [vmem:[%s1140 + $0x38] sm:$0xff]
                  %1157 = vst [vmem:[%s1141 + $0x38] sm:$0xff] %v1156
                  %v1158 = vld [vmem:[%s1140 + $0x20] sm:$0xff]
                  %1159 = vst [vmem:[%s1141 + $0x38] sm:$0xff] %v1158
                  %v1160 = vld [vmem:[%s1140 + $0x28] sm:$0xff]
                  %1161 = vst [vmem:[%s1141 + $0x40] sm:$0xff] %v1160
                  %v1162 = vld [vmem:[%s1140 + $0x30] sm:$0xff]
                  %1163 = vst [vmem:[%s1141 + $0x48] sm:$0xff] %v1162
                  %v1164 = vld [vmem:[%s1140 + $0x38] sm:$0xff]
                  %1165 = vst [vmem:[%s1141 + $0x50] sm:$0xff] %v1164
                  %v1166 = vld [vmem:[%s1140 + $0x40] sm:$0xff]
                  %1167 = vst [vmem:[%s1141 + $0x58] sm:$0xff] %v1166
                  %v1168 = vld [vmem:[%s1140 + $0x48] sm:$0xff]
                  %1169 = vst [vmem:[%s1141 + $0x60] sm:$0xff] %v1168
                  %v1170 = vld [vmem:[%s1140 + $0x50] sm:$0xff]
                  %1171 = vst [vmem:[%s1141 + $0x68] sm:$0xff] %v1170
                  %v1172 = vld [vmem:[%s1140 + $0x58] sm:$0xff]
                  %1173 = vst [vmem:[%s1141 + $0x70] sm:$0xff] %v1172
                  %v1174 = vld [vmem:[%s1140 + $0x40] sm:$0xff]
                  %1175 = vst [vmem:[%s1141 + $0x70] sm:$0xff] %v1174
                  %v1176 = vld [vmem:[%s1140 + $0x48] sm:$0xff]
                  %1177 = vst [vmem:[%s1141 + $0x78] sm:$0xff] %v1176
                  %v1178 = vld [vmem:[%s1140 + $0x50] sm:$0xff]
                  %1179 = vst [vmem:[%s1141 + $0x80] sm:$0xff] %v1178
                  %v1180 = vld [vmem:[%s1140 + $0x58] sm:$0xff]
                  %1181 = vst [vmem:[%s1141 + $0x88] sm:$0xff] %v1180
                  %v1182 = vld [vmem:[%s1140 + $0x60] sm:$0xff]
                  %1183 = vst [vmem:[%s1141 + $0x90] sm:$0xff] %v1182
                  %v1184 = vld [vmem:[%s1140 + $0x68] sm:$0xff]
                  %1185 = vst [vmem:[%s1141 + $0x98] sm:$0xff] %v1184
                  %v1186 = vld [vmem:[%s1140 + $0x70] sm:$0xff]
                  %1187 = vst [vmem:[%s1141 + $0xa0] sm:$0xff] %v1186
                  %v1188 = vld [vmem:[%s1140 + $0x78] sm:$0xff]
                  %1189 = vst [vmem:[%s1141 + $0xa8] sm:$0xff] %v1188
                  %v1190 = vld [vmem:[%s1140 + $0x60] sm:$0xff]
                  %1191 = vst [vmem:[%s1141 + $0xa8] sm:$0xff] %v1190
                  %v1192 = vld [vmem:[%s1140 + $0x68] sm:$0xff]
                  %1193 = vst [vmem:[%s1141 + $0xb0] sm:$0xff] %v1192
                  %v1194 = vld [vmem:[%s1140 + $0x70] sm:$0xff]
                  %1195 = vst [vmem:[%s1141 + $0xb8] sm:$0xff] %v1194
                  %v1196 = vld [vmem:[%s1140 + $0x78] sm:$0xff]
                  %1197 = vst [vmem:[%s1141 + $0xc0] sm:$0xff] %v1196
                  %v1198 = vld [vmem:[%s1140 + $0x80] sm:$0xff]
                  %1199 = vst [vmem:[%s1141 + $0xc8] sm:$0xff] %v1198
                  %v1200 = vld [vmem:[%s1140 + $0x88] sm:$0xff]
                  %1201 = vst [vmem:[%s1141 + $0xd0] sm:$0xff] %v1200
                  %v1202 = vld [vmem:[%s1140 + $0x90] sm:$0xff]
                  %1203 = vst [vmem:[%s1141 + $0xd8] sm:$0xff] %v1202
                  %v1204 = vld [vmem:[%s1140 + $0x98] sm:$0xff]
                  %1205 = vst [vmem:[%s1141 + $0xe0] sm:$0xff] %v1204
                  %s1206 = sadd.s32 1, %s1139
                  %p1207 = scmp.ge.s32.totalorder %s1206, %s1132
                  %s1208 = scalar_select %p1207, 0, %s1206
                  %s1209 = smul.u32 %s1208, 64
                  %s1210 = smul.u32 %s1208, 64
                  %s1211 = scalar_lea.vmem %s964, %s1209 [#allocation4]
                  %s1212 = scalar_lea.vmem %s975, %s1210
                $region218: #{conv_bn_add.3} parent=212 // loop_footer
                  %s1136 = sadd.s32 %s1134, 1
                $region219: #{conv_bn_add.3} parent=212 // loop_footer_branch
                  %1133 = sbr.rel target = $region215
                $region220: #{conv_bn_add.3} parent=212 // loop_exit
                  _
                %s1213 = sshrl.u32 %s1131, 3
                %s1214 = sand.u32 %s1131, 7
                %s1215 = smul.u32 %s1213, 8
                %s1216 = smul.u32 8, %s1215
                %s1217 = scalar_lea.vmem %s964, %s1216 [#allocation4]
                %s1218 = smul.u32 8, %s1215
                %s1219 = scalar_lea.vmem %s975, %s1218
                // While loop
                $region221: #{conv_bn_add.3} parent=212 // loop_pre_header
                  _
                $region222: #{conv_bn_add.3} parent=212 // loop_header
                  %s1221 = sphi 0, %s1223
                  %p1222 = scmp.ge.s32.totalorder %s1221, %s1214
                  %s1226 = sphi 0, %s1239
                  %s1227 = sphi %s1217, %s1242
                  %s1228 = sphi %s1219, %s1243
                $region223: #{conv_bn_add.3} parent=212 // loop_header_branch
                  %1225 = sbr.rel (%p1222) target = $region227
                $region224: #{conv_bn_add.3} parent=212 // loop_body
                  %v1229 = vld [vmem:[%s1227] sm:$0xff]
                  %1230 = vst [vmem:[%s1228] sm:$0xff] %v1229
                  %v1231 = vld [vmem:[%s1227 + $0x20] sm:$0xff]
                  %1232 = vst [vmem:[%s1228 + $0x38] sm:$0xff] %v1231
                  %v1233 = vld [vmem:[%s1227 + $0x40] sm:$0xff]
                  %1234 = vst [vmem:[%s1228 + $0x70] sm:$0xff] %v1233
                  %v1235 = vld [vmem:[%s1227 + $0x60] sm:$0xff]
                  %1236 = vst [vmem:[%s1228 + $0xa8] sm:$0xff] %v1235
                  %s1237 = sadd.s32 1, %s1226
                  %p1238 = scmp.ge.s32.totalorder %s1237, %s1214
                  %s1239 = scalar_select %p1238, 0, %s1237
                  %s1240 = smul.u32 %s1239, 8
                  %s1241 = smul.u32 %s1239, 8
                  %s1242 = scalar_lea.vmem %s1217, %s1240 [#allocation4]
                  %s1243 = scalar_lea.vmem %s1219, %s1241
                $region225: #{conv_bn_add.3} parent=212 // loop_footer
                  %s1223 = sadd.s32 %s1221, 1
                $region226: #{conv_bn_add.3} parent=212 // loop_footer_branch
                  %1220 = sbr.rel target = $region222
                $region227: #{conv_bn_add.3} parent=212 // loop_exit
                  _
                %s1244 = sshll.u32 1, %s1126
                %s1245 = ssub.s32 %s1244, 1
                loop: start=0, step=1, limit=1
                $region228: #{conv_bn_add.3} parent=212 // loop_pre_header
                  _
                $region229: #{conv_bn_add.3} parent=212 // loop_header
                  %s1247 = sphi 0, %s1251
                  %p1248 = scmp.ge.s32.totalorder %s1247, 1
                  %s1252 = sphi %s1128, %s1128
                  %s1253 = sphi %s1130, %s1130
                $region230: #{conv_bn_add.3} parent=212 // loop_header_branch
                  %1250 = sbr.rel (%p1248) target = $region234
                $region231: #{conv_bn_add.3} parent=212 // loop_body
                  %v1254 = vld [vmem:[%s1252] sm:%s1245]
                  %1255 = vst [vmem:[%s1253] sm:%s1245] %v1254
                  %v1256 = vld [vmem:[%s1252 + $0x20] sm:%s1245]
                  %1257 = vst [vmem:[%s1253 + $0x38] sm:%s1245] %v1256
                  %v1258 = vld [vmem:[%s1252 + $0x40] sm:%s1245]
                  %1259 = vst [vmem:[%s1253 + $0x70] sm:%s1245] %v1258
                  %v1260 = vld [vmem:[%s1252 + $0x60] sm:%s1245]
                  %1261 = vst [vmem:[%s1253 + $0xa8] sm:%s1245] %v1260
                $region232: #{conv_bn_add.3} parent=212 // loop_footer
                  %s1251 = sadd.s32 1, %s1247
                $region233: #{conv_bn_add.3} parent=212 // loop_footer_branch
                  %1246 = sbr.rel target = $region229
                $region234: #{conv_bn_add.3} parent=212 // loop_exit
                  _
              $region213: #{conv_bn_add.3} parent=179 // pred_fallthru
                _
            $region180: #{conv_bn_add.3} parent=175 // pred_fallthru
              _
            // Predicated region
            $region181: #{conv_bn_add.3} parent=175 // pred_check
              %p984 = pneg %p980
            $region182: #{conv_bn_add.3} parent=175 // pred_check_branch
              %986 = sbr.rel (%p984) target = $region184
            $region183: #{conv_bn_add.3} parent=175 // pred_region
              %s987 = sshll.u32 1, %s976
              %s988 = ssub.s32 %s987, 1
              loop: start=0, step=1, limit=1
              $region185: #{conv_bn_add.3} parent=183 // loop_pre_header
                _
              $region186: #{conv_bn_add.3} parent=183 // loop_header
                %s990 = sphi 0, %s994
                %p991 = scmp.ge.s32.totalorder %s990, 1
                %s995 = sphi %s964, %s964
                %s996 = sphi %s975, %s975
              $region187: #{conv_bn_add.3} parent=183 // loop_header_branch
                %993 = sbr.rel (%p991) target = $region191
              $region188: #{conv_bn_add.3} parent=183 // loop_body
                %v997 = vld [vmem:[%s995] sm:%s988]
                %998 = vst [vmem:[%s996] sm:%s988] %v997
                %v999 = vld [vmem:[%s995 + $0x20] sm:%s988]
                %1000 = vst [vmem:[%s996 + $0x38] sm:%s988] %v999
                %v1001 = vld [vmem:[%s995 + $0x40] sm:%s988]
                %1002 = vst [vmem:[%s996 + $0x70] sm:%s988] %v1001
                %v1003 = vld [vmem:[%s995 + $0x60] sm:%s988]
                %1004 = vst [vmem:[%s996 + $0xa8] sm:%s988] %v1003
              $region189: #{conv_bn_add.3} parent=183 // loop_footer
                %s994 = sadd.s32 1, %s990
              $region190: #{conv_bn_add.3} parent=183 // loop_footer_branch
                %989 = sbr.rel target = $region186
              $region191: #{conv_bn_add.3} parent=183 // loop_exit
                _
            $region184: #{conv_bn_add.3} parent=175 // pred_fallthru
              _
          $region176: #{conv_bn_add.3} parent=171 // pred_fallthru
            _
          %1262 = vnop
        $region172: #{conv_bn_add.3} parent=159 // pred_fallthru
          _
      $region160: #{conv_bn_add.3} parent=5 // pred_fallthru
        _
      %p1263 = scmp.le.s32.totalorder 2, %s10
      // Predicated region
      $region235: #{conv_bn_add.3} parent=5 // pred_check
        %p1264 = pneg %p1263
      $region236: #{conv_bn_add.3} parent=5 // pred_check_branch
        %1266 = sbr.rel (%p1264) target = $region238
      $region237: #{conv_bn_add.3} parent=5 // pred_region
        %s1267 = ssub.s32 %s10, 2
        // Predicated region
        $region239: #{conv_bn_add.3} parent=237 // pred_check
          %p1268 = pneg %p133
        $region240: #{conv_bn_add.3} parent=237 // pred_check_branch
          %1270 = sbr.rel (%p1268) target = $region242
        $region241: #{conv_bn_add.3} parent=237 // pred_region
          %s1271 = sand.u32 %s118, 1
          %s1272 = sand.u32 %s118, 1
          %s1273 = smul.addr %s1272, 128
          %s1274 = scalar_lea.vmem [#allocation4], %s1273
        $region242: #{conv_bn_add.3} parent=237 // pred_fallthru
          _
      $region238: #{conv_bn_add.3} parent=5 // pred_fallthru
        _
    $region6: #{conv_bn_add.3} parent=1 // loop_footer
      %s14 = sadd.s32 1, %s10
    $region7: #{conv_bn_add.3} parent=1 // loop_footer_branch
      %9 = sbr.rel target = $region3
    $region8: #{conv_bn_add.3} parent=1 // loop_exit
      _

// kernel: conv_bn_add.2
$region0: #{conv_bn_add.2}
  #allocation0 [shape = 'u32[]', space=smem, size = 0x4, offset = 0x4, fixed_abs, tag = 'smem constant byte address 0x4 - core index']
  #allocation1 [shape = 'u32[72,128]{1,0:T(1,128)}', space=vmem, size = 0x9000, scoped, tag = 'internal scratch']
  %s0 = inlined_call_operand.vmem [shape: f32[32,192], index: 0, kind: input, shape index: {}]
  %s1 = inlined_call_operand.vmem [shape: f32[192,784], index: 1, kind: input, shape index: {}]
  %s2 = inlined_call_operand.vmem [shape: f32[32,784], index: 2, kind: output, shape index: {0}]
  %s3 = inlined_call_operand.vmem [shape: f32[32,1], index: 3, kind: output, shape index: {1}]
  %s4 = inlined_call_operand.vmem [shape: f32[32,1], index: 4, kind: output, shape index: {2}]
  %5 = xla_tuple %s2, %s3, %s4
  %s6 = sld [smem:[#allocation0]]
  $region193: #{conv_bn_add.2} parent=0
    _
  %s8 = ssub.s32 1, %s6
  %s9 = scalar_select 0, %s8, %s6
  $region1: #{conv_bn_add.2} parent=0
    #allocation2 [shape = 'u8[786432]{0}', space=vmem, size = 0xc0000, scoped, tag = 'input window, operand 1']
    #allocation3 [shape = 'u8[131072]{0}', space=vmem, size = 0x20000, scoped, tag = 'output window, operand 0']
    loop: start=0, step=1, limit=4
    $region2: #{conv_bn_add.2} parent=1 // loop_pre_header
      _
    $region3: #{conv_bn_add.2} parent=1 // loop_header
      %s11 = sphi 0, %s15
      %p12 = scmp.ge.s32.totalorder %s11, 4
      %s19 = sphi 0, %s19
      %s21 = sphi 0, %s19
      %s22 = sphi 0, %s21
      %s36 = sphi 0, %s22
      %s42 = sphi 0, %s44
      %s45 = sphi 0, %s42
      %s46 = sphi 0, %s45
      %s62 = sphi 0, %s46
      %s68 = sphi 0, %s70
      %s71 = sphi 0, %s68
      %s72 = sphi 0, %s71
      %s88 = sphi 0, %s72
      %s92 = sphi 0, %s92
      %s94 = sphi 0, %s92
      %s95 = sphi 0, %s94
      %s109 = sphi 0, %s95
      %s113 = sphi 0, %s113
      %s115 = sphi 0, %s113
      %s116 = sphi 0, %s115
      %s130 = sphi 0, %s116
    $region4: #{conv_bn_add.2} parent=1 // loop_header_branch
      %14 = sbr.rel (%p12) target = $region8
    $region5: #{conv_bn_add.2} parent=1 // loop_body
      %s16 = ssub.s32 %s11, 1
      %s17 = ssub.s32 %s11, 2
      %s18 = sadd.s32 %s11, 1
      %s20 = sadd.s32 %s19, 1
      %p23 = scmp.eq.s32.totalorder %s11, 1
      %p24 = scmp.ne.s32.totalorder %s19, %s21
      %p25 = scmp.eq.s32.totalorder %s11, 0
      %p26 = por %p24, %p25
      %p27 = scmp.ne.s32.totalorder %s19, %s21
      %p28 = scmp.eq.s32.totalorder %s16, 1
      %p29 = por %p27, %p28
      %p30 = scmp.ne.s32.totalorder %s21, %s22
      %p31 = scmp.eq.s32.totalorder %s16, 0
      %p32 = por %p30, %p31
      %p33 = scmp.ne.s32.totalorder %s21, %s22
      %p34 = scmp.eq.s32.totalorder %s17, 1
      %p35 = por %p33, %p34
      %p37 = scmp.ne.s32.totalorder %s22, %s36
      %p38 = scmp.eq.s32.totalorder %s17, 0
      %p39 = por %p37, %p38
      %s40 = ssub.s32 %s11, %s18
      %p41 = scmp.eq.s32.totalorder %s40, 0
      %s43 = sadd.s32 %s42, 1
      %s44 = scalar_select %p41, %s42, %s43
      %p47 = pneg %p41
      %p48 = scmp.eq.s32.totalorder %s11, 1
      %p49 = por %p47, %p48
      %p50 = scmp.ne.s32.totalorder %s42, %s45
      %p51 = scmp.eq.s32.totalorder %s11, 0
      %p52 = por %p50, %p51
      %p53 = scmp.ne.s32.totalorder %s42, %s45
      %p54 = scmp.eq.s32.totalorder %s16, 1
      %p55 = por %p53, %p54
      %p56 = scmp.ne.s32.totalorder %s45, %s46
      %p57 = scmp.eq.s32.totalorder %s16, 0
      %p58 = por %p56, %p57
      %p59 = scmp.ne.s32.totalorder %s45, %s46
      %p60 = scmp.eq.s32.totalorder %s17, 1
      %p61 = por %p59, %p60
      %p63 = scmp.ne.s32.totalorder %s46, %s62
      %p64 = scmp.eq.s32.totalorder %s17, 0
      %p65 = por %p63, %p64
      %s66 = ssub.s32 %s11, %s18
      %p67 = scmp.eq.s32.totalorder %s66, 0
      %s69 = sadd.s32 %s68, 1
      %s70 = scalar_select %p67, %s68, %s69
      %p73 = pneg %p67
      %p74 = scmp.eq.s32.totalorder %s11, 1
      %p75 = por %p73, %p74
      %p76 = scmp.ne.s32.totalorder %s68, %s71
      %p77 = scmp.eq.s32.totalorder %s11, 0
      %p78 = por %p76, %p77
      %p79 = scmp.ne.s32.totalorder %s68, %s71
      %p80 = scmp.eq.s32.totalorder %s16, 1
      %p81 = por %p79, %p80
      %p82 = scmp.ne.s32.totalorder %s71, %s72
      %p83 = scmp.eq.s32.totalorder %s16, 0
      %p84 = por %p82, %p83
      %p85 = scmp.ne.s32.totalorder %s71, %s72
      %p86 = scmp.eq.s32.totalorder %s17, 1
      %p87 = por %p85, %p86
      %p89 = scmp.ne.s32.totalorder %s72, %s88
      %p90 = scmp.eq.s32.totalorder %s17, 0
      %p91 = por %p89, %p90
      %s93 = sadd.s32 %s92, 1
      %p96 = scmp.eq.s32.totalorder %s11, 1
      %p97 = scmp.ne.s32.totalorder %s92, %s94
      %p98 = scmp.eq.s32.totalorder %s11, 0
      %p99 = por %p97, %p98
      %p100 = scmp.ne.s32.totalorder %s92, %s94
      %p101 = scmp.eq.s32.totalorder %s16, 1
      %p102 = por %p100, %p101
      %p103 = scmp.ne.s32.totalorder %s94, %s95
      %p104 = scmp.eq.s32.totalorder %s16, 0
      %p105 = por %p103, %p104
      %p106 = scmp.ne.s32.totalorder %s94, %s95
      %p107 = scmp.eq.s32.totalorder %s17, 1
      %p108 = por %p106, %p107
      %p110 = scmp.ne.s32.totalorder %s95, %s109
      %p111 = scmp.eq.s32.totalorder %s17, 0
      %p112 = por %p110, %p111
      %s114 = sadd.s32 %s113, 1
      %p117 = scmp.eq.s32.totalorder %s11, 1
      %p118 = scmp.ne.s32.totalorder %s113, %s115
      %p119 = scmp.eq.s32.totalorder %s11, 0
      %p120 = por %p118, %p119
      %p121 = scmp.ne.s32.totalorder %s113, %s115
      %p122 = scmp.eq.s32.totalorder %s16, 1
      %p123 = por %p121, %p122
      %p124 = scmp.ne.s32.totalorder %s115, %s116
      %p125 = scmp.eq.s32.totalorder %s16, 0
      %p126 = por %p124, %p125
      %p127 = scmp.ne.s32.totalorder %s115, %s116
      %p128 = scmp.eq.s32.totalorder %s17, 1
      %p129 = por %p127, %p128
      %p131 = scmp.ne.s32.totalorder %s116, %s130
      %p132 = scmp.eq.s32.totalorder %s17, 0
      %p133 = por %p131, %p132
      %p134 = scmp.le.s32.totalorder 1, %s11
      %p135 = scmp.lt.s32.totalorder %s11, 3
      %p136 = pnand %p134, %p135
      %p137 = pneg %p136
      // Predicated region
      $region9: #{conv_bn_add.2} parent=5 // pred_check
        _
      $region10: #{conv_bn_add.2} parent=5 // pred_check_branch
        %139 = sbr.rel (%p136) target = $region12
      $region11: #{conv_bn_add.2} parent=5 // pred_region
        %s140 = ssub.s32 %s11, 1
        // Predicated region
        $region13: #{conv_bn_add.2} parent=11 // pred_check
          %p141 = pneg %p32
        $region14: #{conv_bn_add.2} parent=11 // pred_check_branch
          %143 = sbr.rel (%p141) target = $region16
        $region15: #{conv_bn_add.2} parent=11 // pred_region
          _
        $region16: #{conv_bn_add.2} parent=11 // pred_fallthru
          _
      $region12: #{conv_bn_add.2} parent=5 // pred_fallthru
        _
      %p144 = scmp.lt.s32.totalorder %s11, 2
      // Predicated region
      $region17: #{conv_bn_add.2} parent=5 // pred_check
        %p145 = pneg %p144
      $region18: #{conv_bn_add.2} parent=5 // pred_check_branch
        %147 = sbr.rel (%p145) target = $region20
      $region19: #{conv_bn_add.2} parent=5 // pred_region
        // Predicated region
        $region21: #{conv_bn_add.2} parent=19 // pred_check
          %p148 = pneg %p52
        $region22: #{conv_bn_add.2} parent=19 // pred_check_branch
          %150 = sbr.rel (%p148) target = $region24
        $region23: #{conv_bn_add.2} parent=19 // pred_region
          %s151 = sand.u32 %s42, 1
          %s152 = sand.u32 %s42, 1
          %s153 = smul.addr %s152, 768
          %s154 = scalar_lea.vmem [#allocation2], %s153
          %s155 = smul.u32 4, %s11
          %s156 = ssub.s32 7, %s155
          %p157 = scmp.lt.s32.totalorder %s156, 4
          %s158 = scalar_select %p157, %s156, 4
          %s159 = smul.u32 192, %s158
          %p160 = scmp.ne.s32.totalorder 0, %s159
          %s161 = smul.addr %s155, 8
          %s162 = scalar_lea.vmem %s1, %s161
          %s163 = smul.u32 %s158, 8
          // Predicated region
          $region25: #{conv_bn_add.2} parent=23 // pred_check
            %p164 = pneg %p160
          $region26: #{conv_bn_add.2} parent=23 // pred_check_branch
            %166 = sbr.rel (%p164) target = $region28
          $region27: #{conv_bn_add.2} parent=23 // pred_region
            %p167 = scmp.lt.u32.totalorder %s163, 8
            %p168 = pneg %p167
            // Predicated region
            $region29: #{conv_bn_add.2} parent=27 // pred_check
              _
            $region30: #{conv_bn_add.2} parent=27 // pred_check_branch
              %170 = sbr.rel (%p167) target = $region32
            $region31: #{conv_bn_add.2} parent=27 // pred_region
              %s232 = sand.u32 %s163, 7
              %p233 = scmp.eq.s32.totalorder %s232, 0
              // Predicated region
              $region44: #{conv_bn_add.2} parent=31 // pred_check
                %p234 = pneg %p233
              $region45: #{conv_bn_add.2} parent=31 // pred_check_branch
                %236 = sbr.rel (%p234) target = $region47
              $region46: #{conv_bn_add.2} parent=31 // pred_region
                %s237 = sshrl.u32 %s163, 3
                %s238 = sshrl.u32 %s237, 1
                // While loop
                $region48: #{conv_bn_add.2} parent=46 // loop_pre_header
                  _
                $region49: #{conv_bn_add.2} parent=46 // loop_header
                  %s240 = sphi 0, %s242
                  %p241 = scmp.ge.s32.totalorder %s240, %s238
                  %s245 = sphi 0, %s346
                  %s246 = sphi %s162, %s349
                  %s247 = sphi %s154, %s350
                $region50: #{conv_bn_add.2} parent=46 // loop_header_branch
                  %244 = sbr.rel (%p241) target = $region54
                $region51: #{conv_bn_add.2} parent=46 // loop_body
                  %v248 = vld [vmem:[%s246] sm:$0xff]
                  %249 = vst [vmem:[%s247] sm:$0xff] %v248
                  %v250 = vld [vmem:[%s246 + $0x8] sm:$0xff]
                  %251 = vst [vmem:[%s247 + $0x8] sm:$0xff] %v250
                  %v252 = vld [vmem:[%s246 + $0x38] sm:$0xff]
                  %253 = vst [vmem:[%s247 + $0x20] sm:$0xff] %v252
                  %v254 = vld [vmem:[%s246 + $0x40] sm:$0xff]
                  %255 = vst [vmem:[%s247 + $0x28] sm:$0xff] %v254
                  %v256 = vld [vmem:[%s246 + $0x70] sm:$0xff]
                  %257 = vst [vmem:[%s247 + $0x40] sm:$0xff] %v256
                  %v258 = vld [vmem:[%s246 + $0x78] sm:$0xff]
                  %259 = vst [vmem:[%s247 + $0x48] sm:$0xff] %v258
                  %v260 = vld [vmem:[%s246 + $0xa8] sm:$0xff]
                  %261 = vst [vmem:[%s247 + $0x60] sm:$0xff] %v260
                  %v262 = vld [vmem:[%s246 + $0xb0] sm:$0xff]
                  %263 = vst [vmem:[%s247 + $0x68] sm:$0xff] %v262
                  %v264 = vld [vmem:[%s246 + $0xe0] sm:$0xff]
                  %265 = vst [vmem:[%s247 + $0x80] sm:$0xff] %v264
                  %v266 = vld [vmem:[%s246 + $0xe8] sm:$0xff]
                  %267 = vst [vmem:[%s247 + $0x88] sm:$0xff] %v266
                  %v268 = vld [vmem:[%s246 + $0x118] sm:$0xff]
                  %269 = vst [vmem:[%s247 + $0xa0] sm:$0xff] %v268
                  %v270 = vld [vmem:[%s246 + $0x120] sm:$0xff]
                  %271 = vst [vmem:[%s247 + $0xa8] sm:$0xff] %v270
                  %v272 = vld [vmem:[%s246 + $0x150] sm:$0xff]
                  %273 = vst [vmem:[%s247 + $0xc0] sm:$0xff] %v272
                  %v274 = vld [vmem:[%s246 + $0x158] sm:$0xff]
                  %275 = vst [vmem:[%s247 + $0xc8] sm:$0xff] %v274
                  %v276 = vld [vmem:[%s246 + $0x188] sm:$0xff]
                  %277 = vst [vmem:[%s247 + $0xe0] sm:$0xff] %v276
                  %v278 = vld [vmem:[%s246 + $0x190] sm:$0xff]
                  %279 = vst [vmem:[%s247 + $0xe8] sm:$0xff] %v278
                  %v280 = vld [vmem:[%s246 + $0x1c0] sm:$0xff]
                  %281 = vst [vmem:[%s247 + $0x100] sm:$0xff] %v280
                  %v282 = vld [vmem:[%s246 + $0x1c8] sm:$0xff]
                  %283 = vst [vmem:[%s247 + $0x108] sm:$0xff] %v282
                  %v284 = vld [vmem:[%s246 + $0x1f8] sm:$0xff]
                  %285 = vst [vmem:[%s247 + $0x120] sm:$0xff] %v284
                  %v286 = vld [vmem:[%s246 + $0x200] sm:$0xff]
                  %287 = vst [vmem:[%s247 + $0x128] sm:$0xff] %v286
                  %v288 = vld [vmem:[%s246 + $0x230] sm:$0xff]
                  %289 = vst [vmem:[%s247 + $0x140] sm:$0xff] %v288
                  %v290 = vld [vmem:[%s246 + $0x238] sm:$0xff]
                  %291 = vst [vmem:[%s247 + $0x148] sm:$0xff] %v290
                  %v292 = vld [vmem:[%s246 + $0x268] sm:$0xff]
                  %293 = vst [vmem:[%s247 + $0x160] sm:$0xff] %v292
                  %v294 = vld [vmem:[%s246 + $0x270] sm:$0xff]
                  %295 = vst [vmem:[%s247 + $0x168] sm:$0xff] %v294
                  %v296 = vld [vmem:[%s246 + $0x2a0] sm:$0xff]
                  %297 = vst [vmem:[%s247 + $0x180] sm:$0xff] %v296
                  %v298 = vld [vmem:[%s246 + $0x2a8] sm:$0xff]
                  %299 = vst [vmem:[%s247 + $0x188] sm:$0xff] %v298
                  %v300 = vld [vmem:[%s246 + $0x2d8] sm:$0xff]
                  %301 = vst [vmem:[%s247 + $0x1a0] sm:$0xff] %v300
                  %v302 = vld [vmem:[%s246 + $0x2e0] sm:$0xff]
                  %303 = vst [vmem:[%s247 + $0x1a8] sm:$0xff] %v302
                  %v304 = vld [vmem:[%s246 + $0x310] sm:$0xff]
                  %305 = vst [vmem:[%s247 + $0x1c0] sm:$0xff] %v304
                  %v306 = vld [vmem:[%s246 + $0x318] sm:$0xff]
                  %307 = vst [vmem:[%s247 + $0x1c8] sm:$0xff] %v306
                  %v308 = vld [vmem:[%s246 + $0x348] sm:$0xff]
                  %309 = vst [vmem:[%s247 + $0x1e0] sm:$0xff] %v308
                  %v310 = vld [vmem:[%s246 + $0x350] sm:$0xff]
                  %311 = vst [vmem:[%s247 + $0x1e8] sm:$0xff] %v310
                  %v312 = vld [vmem:[%s246 + $0x380] sm:$0xff]
                  %313 = vst [vmem:[%s247 + $0x200] sm:$0xff] %v312
                  %v314 = vld [vmem:[%s246 + $0x388] sm:$0xff]
                  %315 = vst [vmem:[%s247 + $0x208] sm:$0xff] %v314
                  %v316 = vld [vmem:[%s246 + $0x3b8] sm:$0xff]
                  %317 = vst [vmem:[%s247 + $0x220] sm:$0xff] %v316
                  %v318 = vld [vmem:[%s246 + $0x3c0] sm:$0xff]
                  %319 = vst [vmem:[%s247 + $0x228] sm:$0xff] %v318
                  %v320 = vld [vmem:[%s246 + $0x3f0] sm:$0xff]
                  %321 = vst [vmem:[%s247 + $0x240] sm:$0xff] %v320
                  %v322 = vld [vmem:[%s246 + $0x3f8] sm:$0xff]
                  %323 = vst [vmem:[%s247 + $0x248] sm:$0xff] %v322
                  %v324 = vld [vmem:[%s246 + $0x428] sm:$0xff]
                  %325 = vst [vmem:[%s247 + $0x260] sm:$0xff] %v324
                  %v326 = vld [vmem:[%s246 + $0x430] sm:$0xff]
                  %327 = vst [vmem:[%s247 + $0x268] sm:$0xff] %v326
                  %v328 = vld [vmem:[%s246 + $0x460] sm:$0xff]
                  %329 = vst [vmem:[%s247 + $0x280] sm:$0xff] %v328
                  %v330 = vld [vmem:[%s246 + $0x468] sm:$0xff]
                  %331 = vst [vmem:[%s247 + $0x288] sm:$0xff] %v330
                  %v332 = vld [vmem:[%s246 + $0x498] sm:$0xff]
                  %333 = vst [vmem:[%s247 + $0x2a0] sm:$0xff] %v332
                  %v334 = vld [vmem:[%s246 + $0x4a0] sm:$0xff]
                  %335 = vst [vmem:[%s247 + $0x2a8] sm:$0xff] %v334
                  %v336 = vld [vmem:[%s246 + $0x4d0] sm:$0xff]
                  %337 = vst [vmem:[%s247 + $0x2c0] sm:$0xff] %v336
                  %v338 = vld [vmem:[%s246 + $0x4d8] sm:$0xff]
                  %339 = vst [vmem:[%s247 + $0x2c8] sm:$0xff] %v338
                  %v340 = vld [vmem:[%s246 + $0x508] sm:$0xff]
                  %341 = vst [vmem:[%s247 + $0x2e0] sm:$0xff] %v340
                  %v342 = vld [vmem:[%s246 + $0x510] sm:$0xff]
                  %343 = vst [vmem:[%s247 + $0x2e8] sm:$0xff] %v342
                  %s344 = sadd.s32 1, %s245
                  %p345 = scmp.ge.s32.totalorder %s344, %s238
                  %s346 = scalar_select %p345, 0, %s344
                  %s347 = smul.u32 %s346, 16
                  %s348 = smul.u32 %s346, 16
                  %s349 = scalar_lea.vmem %s162, %s347
                  %s350 = scalar_lea.vmem %s154, %s348 [#allocation2]
                $region52: #{conv_bn_add.2} parent=46 // loop_footer
                  %s242 = sadd.s32 %s240, 1
                $region53: #{conv_bn_add.2} parent=46 // loop_footer_branch
                  %239 = sbr.rel target = $region49
                $region54: #{conv_bn_add.2} parent=46 // loop_exit
                  _
                %s351 = sshrl.u32 %s237, 1
                %s352 = sand.u32 %s237, 1
                %s353 = smul.u32 %s351, 2
                %s354 = smul.u32 8, %s353
                %s355 = scalar_lea.vmem %s162, %s354
                %s356 = smul.u32 8, %s353
                %s357 = scalar_lea.vmem %s154, %s356 [#allocation2]
                // While loop
                $region55: #{conv_bn_add.2} parent=46 // loop_pre_header
                  _
                $region56: #{conv_bn_add.2} parent=46 // loop_header
                  %s359 = sphi 0, %s361
                  %p360 = scmp.ge.s32.totalorder %s359, %s352
                  %s364 = sphi 0, %s417
                  %s365 = sphi %s355, %s420
                  %s366 = sphi %s357, %s421
                $region57: #{conv_bn_add.2} parent=46 // loop_header_branch
                  %363 = sbr.rel (%p360) target = $region61
                $region58: #{conv_bn_add.2} parent=46 // loop_body
                  %v367 = vld [vmem:[%s365] sm:$0xff]
                  %368 = vst [vmem:[%s366] sm:$0xff] %v367
                  %v369 = vld [vmem:[%s365 + $0x38] sm:$0xff]
                  %370 = vst [vmem:[%s366 + $0x20] sm:$0xff] %v369
                  %v371 = vld [vmem:[%s365 + $0x70] sm:$0xff]
                  %372 = vst [vmem:[%s366 + $0x40] sm:$0xff] %v371
                  %v373 = vld [vmem:[%s365 + $0xa8] sm:$0xff]
                  %374 = vst [vmem:[%s366 + $0x60] sm:$0xff] %v373
                  %v375 = vld [vmem:[%s365 + $0xe0] sm:$0xff]
                  %376 = vst [vmem:[%s366 + $0x80] sm:$0xff] %v375
                  %v377 = vld [vmem:[%s365 + $0x118] sm:$0xff]
                  %378 = vst [vmem:[%s366 + $0xa0] sm:$0xff] %v377
                  %v379 = vld [vmem:[%s365 + $0x150] sm:$0xff]
                  %380 = vst [vmem:[%s366 + $0xc0] sm:$0xff] %v379
                  %v381 = vld [vmem:[%s365 + $0x188] sm:$0xff]
                  %382 = vst [vmem:[%s366 + $0xe0] sm:$0xff] %v381
                  %v383 = vld [vmem:[%s365 + $0x1c0] sm:$0xff]
                  %384 = vst [vmem:[%s366 + $0x100] sm:$0xff] %v383
                  %v385 = vld [vmem:[%s365 + $0x1f8] sm:$0xff]
                  %386 = vst [vmem:[%s366 + $0x120] sm:$0xff] %v385
                  %v387 = vld [vmem:[%s365 + $0x230] sm:$0xff]
                  %388 = vst [vmem:[%s366 + $0x140] sm:$0xff] %v387
                  %v389 = vld [vmem:[%s365 + $0x268] sm:$0xff]
                  %390 = vst [vmem:[%s366 + $0x160] sm:$0xff] %v389
                  %v391 = vld [vmem:[%s365 + $0x2a0] sm:$0xff]
                  %392 = vst [vmem:[%s366 + $0x180] sm:$0xff] %v391
                  %v393 = vld [vmem:[%s365 + $0x2d8] sm:$0xff]
                  %394 = vst [vmem:[%s366 + $0x1a0] sm:$0xff] %v393
                  %v395 = vld [vmem:[%s365 + $0x310] sm:$0xff]
                  %396 = vst [vmem:[%s366 + $0x1c0] sm:$0xff] %v395
                  %v397 = vld [vmem:[%s365 + $0x348] sm:$0xff]
                  %398 = vst [vmem:[%s366 + $0x1e0] sm:$0xff] %v397
                  %v399 = vld [vmem:[%s365 + $0x380] sm:$0xff]
                  %400 = vst [vmem:[%s366 + $0x200] sm:$0xff] %v399
                  %v401 = vld [vmem:[%s365 + $0x3b8] sm:$0xff]
                  %402 = vst [vmem:[%s366 + $0x220] sm:$0xff] %v401
                  %v403 = vld [vmem:[%s365 + $0x3f0] sm:$0xff]
                  %404 = vst [vmem:[%s366 + $0x240] sm:$0xff] %v403
                  %v405 = vld [vmem:[%s365 + $0x428] sm:$0xff]
                  %406 = vst [vmem:[%s366 + $0x260] sm:$0xff] %v405
                  %v407 = vld [vmem:[%s365 + $0x460] sm:$0xff]
                  %408 = vst [vmem:[%s366 + $0x280] sm:$0xff] %v407
                  %v409 = vld [vmem:[%s365 + $0x498] sm:$0xff]
                  %410 = vst [vmem:[%s366 + $0x2a0] sm:$0xff] %v409
                  %v411 = vld [vmem:[%s365 + $0x4d0] sm:$0xff]
                  %412 = vst [vmem:[%s366 + $0x2c0] sm:$0xff] %v411
                  %v413 = vld [vmem:[%s365 + $0x508] sm:$0xff]
                  %414 = vst [vmem:[%s366 + $0x2e0] sm:$0xff] %v413
                  %s415 = sadd.s32 1, %s364
                  %p416 = scmp.ge.s32.totalorder %s415, %s352
                  %s417 = scalar_select %p416, 0, %s415
                  %s418 = smul.u32 %s417, 8
                  %s419 = smul.u32 %s417, 8
                  %s420 = scalar_lea.vmem %s355, %s418
                  %s421 = scalar_lea.vmem %s357, %s419 [#allocation2]
                $region59: #{conv_bn_add.2} parent=46 // loop_footer
                  %s361 = sadd.s32 %s359, 1
                $region60: #{conv_bn_add.2} parent=46 // loop_footer_branch
                  %358 = sbr.rel target = $region56
                $region61: #{conv_bn_add.2} parent=46 // loop_exit
                  _
              $region47: #{conv_bn_add.2} parent=31 // pred_fallthru
                _
              %p422 = pneg %p233
              // Predicated region
              $region62: #{conv_bn_add.2} parent=31 // pred_check
                _
              $region63: #{conv_bn_add.2} parent=31 // pred_check_branch
                %424 = sbr.rel (%p233) target = $region65
              $region64: #{conv_bn_add.2} parent=31 // pred_region
                %s425 = sand.u32 %s163, 7
                %s426 = ssub.s32 %s163, %s425
                %s427 = scalar_lea.vmem %s162, %s426
                %s428 = ssub.s32 %s163, %s425
                %s429 = scalar_lea.vmem %s154, %s428 [#allocation2]
                %s430 = sshrl.u32 %s163, 3
                %s431 = sshrl.u32 %s430, 1
                // While loop
                $region66: #{conv_bn_add.2} parent=64 // loop_pre_header
                  _
                $region67: #{conv_bn_add.2} parent=64 // loop_header
                  %s433 = sphi 0, %s435
                  %p434 = scmp.ge.s32.totalorder %s433, %s431
                  %s438 = sphi 0, %s539
                  %s439 = sphi %s162, %s542
                  %s440 = sphi %s154, %s543
                $region68: #{conv_bn_add.2} parent=64 // loop_header_branch
                  %437 = sbr.rel (%p434) target = $region72
                $region69: #{conv_bn_add.2} parent=64 // loop_body
                  %v441 = vld [vmem:[%s439] sm:$0xff]
                  %442 = vst [vmem:[%s440] sm:$0xff] %v441
                  %v443 = vld [vmem:[%s439 + $0x8] sm:$0xff]
                  %444 = vst [vmem:[%s440 + $0x8] sm:$0xff] %v443
                  %v445 = vld [vmem:[%s439 + $0x38] sm:$0xff]
                  %446 = vst [vmem:[%s440 + $0x20] sm:$0xff] %v445
                  %v447 = vld [vmem:[%s439 + $0x40] sm:$0xff]
                  %448 = vst [vmem:[%s440 + $0x28] sm:$0xff] %v447
                  %v449 = vld [vmem:[%s439 + $0x70] sm:$0xff]
                  %450 = vst [vmem:[%s440 + $0x40] sm:$0xff] %v449
                  %v451 = vld [vmem:[%s439 + $0x78] sm:$0xff]
                  %452 = vst [vmem:[%s440 + $0x48] sm:$0xff] %v451
                  %v453 = vld [vmem:[%s439 + $0xa8] sm:$0xff]
                  %454 = vst [vmem:[%s440 + $0x60] sm:$0xff] %v453
                  %v455 = vld [vmem:[%s439 + $0xb0] sm:$0xff]
                  %456 = vst [vmem:[%s440 + $0x68] sm:$0xff] %v455
                  %v457 = vld [vmem:[%s439 + $0xe0] sm:$0xff]
                  %458 = vst [vmem:[%s440 + $0x80] sm:$0xff] %v457
                  %v459 = vld [vmem:[%s439 + $0xe8] sm:$0xff]
                  %460 = vst [vmem:[%s440 + $0x88] sm:$0xff] %v459
                  %v461 = vld [vmem:[%s439 + $0x118] sm:$0xff]
                  %462 = vst [vmem:[%s440 + $0xa0] sm:$0xff] %v461
                  %v463 = vld [vmem:[%s439 + $0x120] sm:$0xff]
                  %464 = vst [vmem:[%s440 + $0xa8] sm:$0xff] %v463
                  %v465 = vld [vmem:[%s439 + $0x150] sm:$0xff]
                  %466 = vst [vmem:[%s440 + $0xc0] sm:$0xff] %v465
                  %v467 = vld [vmem:[%s439 + $0x158] sm:$0xff]
                  %468 = vst [vmem:[%s440 + $0xc8] sm:$0xff] %v467
                  %v469 = vld [vmem:[%s439 + $0x188] sm:$0xff]
                  %470 = vst [vmem:[%s440 + $0xe0] sm:$0xff] %v469
                  %v471 = vld [vmem:[%s439 + $0x190] sm:$0xff]
                  %472 = vst [vmem:[%s440 + $0xe8] sm:$0xff] %v471
                  %v473 = vld [vmem:[%s439 + $0x1c0] sm:$0xff]
                  %474 = vst [vmem:[%s440 + $0x100] sm:$0xff] %v473
                  %v475 = vld [vmem:[%s439 + $0x1c8] sm:$0xff]
                  %476 = vst [vmem:[%s440 + $0x108] sm:$0xff] %v475
                  %v477 = vld [vmem:[%s439 + $0x1f8] sm:$0xff]
                  %478 = vst [vmem:[%s440 + $0x120] sm:$0xff] %v477
                  %v479 = vld [vmem:[%s439 + $0x200] sm:$0xff]
                  %480 = vst [vmem:[%s440 + $0x128] sm:$0xff] %v479
                  %v481 = vld [vmem:[%s439 + $0x230] sm:$0xff]
                  %482 = vst [vmem:[%s440 + $0x140] sm:$0xff] %v481
                  %v483 = vld [vmem:[%s439 + $0x238] sm:$0xff]
                  %484 = vst [vmem:[%s440 + $0x148] sm:$0xff] %v483
                  %v485 = vld [vmem:[%s439 + $0x268] sm:$0xff]
                  %486 = vst [vmem:[%s440 + $0x160] sm:$0xff] %v485
                  %v487 = vld [vmem:[%s439 + $0x270] sm:$0xff]
                  %488 = vst [vmem:[%s440 + $0x168] sm:$0xff] %v487
                  %v489 = vld [vmem:[%s439 + $0x2a0] sm:$0xff]
                  %490 = vst [vmem:[%s440 + $0x180] sm:$0xff] %v489
                  %v491 = vld [vmem:[%s439 + $0x2a8] sm:$0xff]
                  %492 = vst [vmem:[%s440 + $0x188] sm:$0xff] %v491
                  %v493 = vld [vmem:[%s439 + $0x2d8] sm:$0xff]
                  %494 = vst [vmem:[%s440 + $0x1a0] sm:$0xff] %v493
                  %v495 = vld [vmem:[%s439 + $0x2e0] sm:$0xff]
                  %496 = vst [vmem:[%s440 + $0x1a8] sm:$0xff] %v495
                  %v497 = vld [vmem:[%s439 + $0x310] sm:$0xff]
                  %498 = vst [vmem:[%s440 + $0x1c0] sm:$0xff] %v497
                  %v499 = vld [vmem:[%s439 + $0x318] sm:$0xff]
                  %500 = vst [vmem:[%s440 + $0x1c8] sm:$0xff] %v499
                  %v501 = vld [vmem:[%s439 + $0x348] sm:$0xff]
                  %502 = vst [vmem:[%s440 + $0x1e0] sm:$0xff] %v501
                  %v503 = vld [vmem:[%s439 + $0x350] sm:$0xff]
                  %504 = vst [vmem:[%s440 + $0x1e8] sm:$0xff] %v503
                  %v505 = vld [vmem:[%s439 + $0x380] sm:$0xff]
                  %506 = vst [vmem:[%s440 + $0x200] sm:$0xff] %v505
                  %v507 = vld [vmem:[%s439 + $0x388] sm:$0xff]
                  %508 = vst [vmem:[%s440 + $0x208] sm:$0xff] %v507
                  %v509 = vld [vmem:[%s439 + $0x3b8] sm:$0xff]
                  %510 = vst [vmem:[%s440 + $0x220] sm:$0xff] %v509
                  %v511 = vld [vmem:[%s439 + $0x3c0] sm:$0xff]
                  %512 = vst [vmem:[%s440 + $0x228] sm:$0xff] %v511
                  %v513 = vld [vmem:[%s439 + $0x3f0] sm:$0xff]
                  %514 = vst [vmem:[%s440 + $0x240] sm:$0xff] %v513
                  %v515 = vld [vmem:[%s439 + $0x3f8] sm:$0xff]
                  %516 = vst [vmem:[%s440 + $0x248] sm:$0xff] %v515
                  %v517 = vld [vmem:[%s439 + $0x428] sm:$0xff]
                  %518 = vst [vmem:[%s440 + $0x260] sm:$0xff] %v517
                  %v519 = vld [vmem:[%s439 + $0x430] sm:$0xff]
                  %520 = vst [vmem:[%s440 + $0x268] sm:$0xff] %v519
                  %v521 = vld [vmem:[%s439 + $0x460] sm:$0xff]
                  %522 = vst [vmem:[%s440 + $0x280] sm:$0xff] %v521
                  %v523 = vld [vmem:[%s439 + $0x468] sm:$0xff]
                  %524 = vst [vmem:[%s440 + $0x288] sm:$0xff] %v523
                  %v525 = vld [vmem:[%s439 + $0x498] sm:$0xff]
                  %526 = vst [vmem:[%s440 + $0x2a0] sm:$0xff] %v525
                  %v527 = vld [vmem:[%s439 + $0x4a0] sm:$0xff]
                  %528 = vst [vmem:[%s440 + $0x2a8] sm:$0xff] %v527
                  %v529 = vld [vmem:[%s439 + $0x4d0] sm:$0xff]
                  %530 = vst [vmem:[%s440 + $0x2c0] sm:$0xff] %v529
                  %v531 = vld [vmem:[%s439 + $0x4d8] sm:$0xff]
                  %532 = vst [vmem:[%s440 + $0x2c8] sm:$0xff] %v531
                  %v533 = vld [vmem:[%s439 + $0x508] sm:$0xff]
                  %534 = vst [vmem:[%s440 + $0x2e0] sm:$0xff] %v533
                  %v535 = vld [vmem:[%s439 + $0x510] sm:$0xff]
                  %536 = vst [vmem:[%s440 + $0x2e8] sm:$0xff] %v535
                  %s537 = sadd.s32 1, %s438
                  %p538 = scmp.ge.s32.totalorder %s537, %s431
                  %s539 = scalar_select %p538, 0, %s537
                  %s540 = smul.u32 %s539, 16
                  %s541 = smul.u32 %s539, 16
                  %s542 = scalar_lea.vmem %s162, %s540
                  %s543 = scalar_lea.vmem %s154, %s541 [#allocation2]
                $region70: #{conv_bn_add.2} parent=64 // loop_footer
                  %s435 = sadd.s32 %s433, 1
                $region71: #{conv_bn_add.2} parent=64 // loop_footer_branch
                  %432 = sbr.rel target = $region67
                $region72: #{conv_bn_add.2} parent=64 // loop_exit
                  _
                %s544 = sshrl.u32 %s430, 1
                %s545 = sand.u32 %s430, 1
                %s546 = smul.u32 %s544, 2
                %s547 = smul.u32 8, %s546
                %s548 = scalar_lea.vmem %s162, %s547
                %s549 = smul.u32 8, %s546
                %s550 = scalar_lea.vmem %s154, %s549 [#allocation2]
                // While loop
                $region73: #{conv_bn_add.2} parent=64 // loop_pre_header
                  _
                $region74: #{conv_bn_add.2} parent=64 // loop_header
                  %s552 = sphi 0, %s554
                  %p553 = scmp.ge.s32.totalorder %s552, %s545
                  %s557 = sphi 0, %s610
                  %s558 = sphi %s548, %s613
                  %s559 = sphi %s550, %s614
                $region75: #{conv_bn_add.2} parent=64 // loop_header_branch
                  %556 = sbr.rel (%p553) target = $region79
                $region76: #{conv_bn_add.2} parent=64 // loop_body
                  %v560 = vld [vmem:[%s558] sm:$0xff]
                  %561 = vst [vmem:[%s559] sm:$0xff] %v560
                  %v562 = vld [vmem:[%s558 + $0x38] sm:$0xff]
                  %563 = vst [vmem:[%s559 + $0x20] sm:$0xff] %v562
                  %v564 = vld [vmem:[%s558 + $0x70] sm:$0xff]
                  %565 = vst [vmem:[%s559 + $0x40] sm:$0xff] %v564
                  %v566 = vld [vmem:[%s558 + $0xa8] sm:$0xff]
                  %567 = vst [vmem:[%s559 + $0x60] sm:$0xff] %v566
                  %v568 = vld [vmem:[%s558 + $0xe0] sm:$0xff]
                  %569 = vst [vmem:[%s559 + $0x80] sm:$0xff] %v568
                  %v570 = vld [vmem:[%s558 + $0x118] sm:$0xff]
                  %571 = vst [vmem:[%s559 + $0xa0] sm:$0xff] %v570
                  %v572 = vld [vmem:[%s558 + $0x150] sm:$0xff]
                  %573 = vst [vmem:[%s559 + $0xc0] sm:$0xff] %v572
                  %v574 = vld [vmem:[%s558 + $0x188] sm:$0xff]
                  %575 = vst [vmem:[%s559 + $0xe0] sm:$0xff] %v574
                  %v576 = vld [vmem:[%s558 + $0x1c0] sm:$0xff]
                  %577 = vst [vmem:[%s559 + $0x100] sm:$0xff] %v576
                  %v578 = vld [vmem:[%s558 + $0x1f8] sm:$0xff]
                  %579 = vst [vmem:[%s559 + $0x120] sm:$0xff] %v578
                  %v580 = vld [vmem:[%s558 + $0x230] sm:$0xff]
                  %581 = vst [vmem:[%s559 + $0x140] sm:$0xff] %v580
                  %v582 = vld [vmem:[%s558 + $0x268] sm:$0xff]
                  %583 = vst [vmem:[%s559 + $0x160] sm:$0xff] %v582
                  %v584 = vld [vmem:[%s558 + $0x2a0] sm:$0xff]
                  %585 = vst [vmem:[%s559 + $0x180] sm:$0xff] %v584
                  %v586 = vld [vmem:[%s558 + $0x2d8] sm:$0xff]
                  %587 = vst [vmem:[%s559 + $0x1a0] sm:$0xff] %v586
                  %v588 = vld [vmem:[%s558 + $0x310] sm:$0xff]
                  %589 = vst [vmem:[%s559 + $0x1c0] sm:$0xff] %v588
                  %v590 = vld [vmem:[%s558 + $0x348] sm:$0xff]
                  %591 = vst [vmem:[%s559 + $0x1e0] sm:$0xff] %v590
                  %v592 = vld [vmem:[%s558 + $0x380] sm:$0xff]
                  %593 = vst [vmem:[%s559 + $0x200] sm:$0xff] %v592
                  %v594 = vld [vmem:[%s558 + $0x3b8] sm:$0xff]
                  %595 = vst [vmem:[%s559 + $0x220] sm:$0xff] %v594
                  %v596 = vld [vmem:[%s558 + $0x3f0] sm:$0xff]
                  %597 = vst [vmem:[%s559 + $0x240] sm:$0xff] %v596
                  %v598 = vld [vmem:[%s558 + $0x428] sm:$0xff]
                  %599 = vst [vmem:[%s559 + $0x260] sm:$0xff] %v598
                  %v600 = vld [vmem:[%s558 + $0x460] sm:$0xff]
                  %601 = vst [vmem:[%s559 + $0x280] sm:$0xff] %v600
                  %v602 = vld [vmem:[%s558 + $0x498] sm:$0xff]
                  %603 = vst [vmem:[%s559 + $0x2a0] sm:$0xff] %v602
                  %v604 = vld [vmem:[%s558 + $0x4d0] sm:$0xff]
                  %605 = vst [vmem:[%s559 + $0x2c0] sm:$0xff] %v604
                  %v606 = vld [vmem:[%s558 + $0x508] sm:$0xff]
                  %607 = vst [vmem:[%s559 + $0x2e0] sm:$0xff] %v606
                  %s608 = sadd.s32 1, %s557
                  %p609 = scmp.ge.s32.totalorder %s608, %s545
                  %s610 = scalar_select %p609, 0, %s608
                  %s611 = smul.u32 %s610, 8
                  %s612 = smul.u32 %s610, 8
                  %s613 = scalar_lea.vmem %s548, %s611
                  %s614 = scalar_lea.vmem %s550, %s612 [#allocation2]
                $region77: #{conv_bn_add.2} parent=64 // loop_footer
                  %s554 = sadd.s32 %s552, 1
                $region78: #{conv_bn_add.2} parent=64 // loop_footer_branch
                  %551 = sbr.rel target = $region74
                $region79: #{conv_bn_add.2} parent=64 // loop_exit
                  _
                %s615 = sshll.u32 1, %s425
                %s616 = ssub.s32 %s615, 1
                loop: start=0, step=1, limit=1
                $region80: #{conv_bn_add.2} parent=64 // loop_pre_header
                  _
                $region81: #{conv_bn_add.2} parent=64 // loop_header
                  %s618 = sphi 0, %s622
                  %p619 = scmp.ge.s32.totalorder %s618, 1
                  %s623 = sphi %s427, %s427
                  %s624 = sphi %s429, %s429
                $region82: #{conv_bn_add.2} parent=64 // loop_header_branch
                  %621 = sbr.rel (%p619) target = $region86
                $region83: #{conv_bn_add.2} parent=64 // loop_body
                  %v625 = vld [vmem:[%s623] sm:%s616]
                  %626 = vst [vmem:[%s624] sm:%s616] %v625
                  %v627 = vld [vmem:[%s623 + $0x38] sm:%s616]
                  %628 = vst [vmem:[%s624 + $0x20] sm:%s616] %v627
                  %v629 = vld [vmem:[%s623 + $0x70] sm:%s616]
                  %630 = vst [vmem:[%s624 + $0x40] sm:%s616] %v629
                  %v631 = vld [vmem:[%s623 + $0xa8] sm:%s616]
                  %632 = vst [vmem:[%s624 + $0x60] sm:%s616] %v631
                  %v633 = vld [vmem:[%s623 + $0xe0] sm:%s616]
                  %634 = vst [vmem:[%s624 + $0x80] sm:%s616] %v633
                  %v635 = vld [vmem:[%s623 + $0x118] sm:%s616]
                  %636 = vst [vmem:[%s624 + $0xa0] sm:%s616] %v635
                  %v637 = vld [vmem:[%s623 + $0x150] sm:%s616]
                  %638 = vst [vmem:[%s624 + $0xc0] sm:%s616] %v637
                  %v639 = vld [vmem:[%s623 + $0x188] sm:%s616]
                  %640 = vst [vmem:[%s624 + $0xe0] sm:%s616] %v639
                  %v641 = vld [vmem:[%s623 + $0x1c0] sm:%s616]
                  %642 = vst [vmem:[%s624 + $0x100] sm:%s616] %v641
                  %v643 = vld [vmem:[%s623 + $0x1f8] sm:%s616]
                  %644 = vst [vmem:[%s624 + $0x120] sm:%s616] %v643
                  %v645 = vld [vmem:[%s623 + $0x230] sm:%s616]
                  %646 = vst [vmem:[%s624 + $0x140] sm:%s616] %v645
                  %v647 = vld [vmem:[%s623 + $0x268] sm:%s616]
                  %648 = vst [vmem:[%s624 + $0x160] sm:%s616] %v647
                  %v649 = vld [vmem:[%s623 + $0x2a0] sm:%s616]
                  %650 = vst [vmem:[%s624 + $0x180] sm:%s616] %v649
                  %v651 = vld [vmem:[%s623 + $0x2d8] sm:%s616]
                  %652 = vst [vmem:[%s624 + $0x1a0] sm:%s616] %v651
                  %v653 = vld [vmem:[%s623 + $0x310] sm:%s616]
                  %654 = vst [vmem:[%s624 + $0x1c0] sm:%s616] %v653
                  %v655 = vld [vmem:[%s623 + $0x348] sm:%s616]
                  %656 = vst [vmem:[%s624 + $0x1e0] sm:%s616] %v655
                  %v657 = vld [vmem:[%s623 + $0x380] sm:%s616]
                  %658 = vst [vmem:[%s624 + $0x200] sm:%s616] %v657
                  %v659 = vld [vmem:[%s623 + $0x3b8] sm:%s616]
                  %660 = vst [vmem:[%s624 + $0x220] sm:%s616] %v659
                  %v661 = vld [vmem:[%s623 + $0x3f0] sm:%s616]
                  %662 = vst [vmem:[%s624 + $0x240] sm:%s616] %v661
                  %v663 = vld [vmem:[%s623 + $0x428] sm:%s616]
                  %664 = vst [vmem:[%s624 + $0x260] sm:%s616] %v663
                  %v665 = vld [vmem:[%s623 + $0x460] sm:%s616]
                  %666 = vst [vmem:[%s624 + $0x280] sm:%s616] %v665
                  %v667 = vld [vmem:[%s623 + $0x498] sm:%s616]
                  %668 = vst [vmem:[%s624 + $0x2a0] sm:%s616] %v667
                  %v669 = vld [vmem:[%s623 + $0x4d0] sm:%s616]
                  %670 = vst [vmem:[%s624 + $0x2c0] sm:%s616] %v669
                  %v671 = vld [vmem:[%s623 + $0x508] sm:%s616]
                  %672 = vst [vmem:[%s624 + $0x2e0] sm:%s616] %v671
                $region84: #{conv_bn_add.2} parent=64 // loop_footer
                  %s622 = sadd.s32 1, %s618
                $region85: #{conv_bn_add.2} parent=64 // loop_footer_branch
                  %617 = sbr.rel target = $region81
                $region86: #{conv_bn_add.2} parent=64 // loop_exit
                  _
              $region65: #{conv_bn_add.2} parent=31 // pred_fallthru
                _
            $region32: #{conv_bn_add.2} parent=27 // pred_fallthru
              _
            // Predicated region
            $region33: #{conv_bn_add.2} parent=27 // pred_check
              %p171 = pneg %p167
            $region34: #{conv_bn_add.2} parent=27 // pred_check_branch
              %173 = sbr.rel (%p171) target = $region36
            $region35: #{conv_bn_add.2} parent=27 // pred_region
              %s174 = sshll.u32 1, %s163
              %s175 = ssub.s32 %s174, 1
              loop: start=0, step=1, limit=1
              $region37: #{conv_bn_add.2} parent=35 // loop_pre_header
                _
              $region38: #{conv_bn_add.2} parent=35 // loop_header
                %s177 = sphi 0, %s181
                %p178 = scmp.ge.s32.totalorder %s177, 1
                %s182 = sphi %s162, %s162
                %s183 = sphi %s154, %s154
              $region39: #{conv_bn_add.2} parent=35 // loop_header_branch
                %180 = sbr.rel (%p178) target = $region43
              $region40: #{conv_bn_add.2} parent=35 // loop_body
                %v184 = vld [vmem:[%s182] sm:%s175]
                %185 = vst [vmem:[%s183] sm:%s175] %v184
                %v186 = vld [vmem:[%s182 + $0x38] sm:%s175]
                %187 = vst [vmem:[%s183 + $0x20] sm:%s175] %v186
                %v188 = vld [vmem:[%s182 + $0x70] sm:%s175]
                %189 = vst [vmem:[%s183 + $0x40] sm:%s175] %v188
                %v190 = vld [vmem:[%s182 + $0xa8] sm:%s175]
                %191 = vst [vmem:[%s183 + $0x60] sm:%s175] %v190
                %v192 = vld [vmem:[%s182 + $0xe0] sm:%s175]
                %193 = vst [vmem:[%s183 + $0x80] sm:%s175] %v192
                %v194 = vld [vmem:[%s182 + $0x118] sm:%s175]
                %195 = vst [vmem:[%s183 + $0xa0] sm:%s175] %v194
                %v196 = vld [vmem:[%s182 + $0x150] sm:%s175]
                %197 = vst [vmem:[%s183 + $0xc0] sm:%s175] %v196
                %v198 = vld [vmem:[%s182 + $0x188] sm:%s175]
                %199 = vst [vmem:[%s183 + $0xe0] sm:%s175] %v198
                %v200 = vld [vmem:[%s182 + $0x1c0] sm:%s175]
                %201 = vst [vmem:[%s183 + $0x100] sm:%s175] %v200
                %v202 = vld [vmem:[%s182 + $0x1f8] sm:%s175]
                %203 = vst [vmem:[%s183 + $0x120] sm:%s175] %v202
                %v204 = vld [vmem:[%s182 + $0x230] sm:%s175]
                %205 = vst [vmem:[%s183 + $0x140] sm:%s175] %v204
                %v206 = vld [vmem:[%s182 + $0x268] sm:%s175]
                %207 = vst [vmem:[%s183 + $0x160] sm:%s175] %v206
                %v208 = vld [vmem:[%s182 + $0x2a0] sm:%s175]
                %209 = vst [vmem:[%s183 + $0x180] sm:%s175] %v208
                %v210 = vld [vmem:[%s182 + $0x2d8] sm:%s175]
                %211 = vst [vmem:[%s183 + $0x1a0] sm:%s175] %v210
                %v212 = vld [vmem:[%s182 + $0x310] sm:%s175]
                %213 = vst [vmem:[%s183 + $0x1c0] sm:%s175] %v212
                %v214 = vld [vmem:[%s182 + $0x348] sm:%s175]
                %215 = vst [vmem:[%s183 + $0x1e0] sm:%s175] %v214
                %v216 = vld [vmem:[%s182 + $0x380] sm:%s175]
                %217 = vst [vmem:[%s183 + $0x200] sm:%s175] %v216
                %v218 = vld [vmem:[%s182 + $0x3b8] sm:%s175]
                %219 = vst [vmem:[%s183 + $0x220] sm:%s175] %v218
                %v220 = vld [vmem:[%s182 + $0x3f0] sm:%s175]
                %221 = vst [vmem:[%s183 + $0x240] sm:%s175] %v220
                %v222 = vld [vmem:[%s182 + $0x428] sm:%s175]
                %223 = vst [vmem:[%s183 + $0x260] sm:%s175] %v222
                %v224 = vld [vmem:[%s182 + $0x460] sm:%s175]
                %225 = vst [vmem:[%s183 + $0x280] sm:%s175] %v224
                %v226 = vld [vmem:[%s182 + $0x498] sm:%s175]
                %227 = vst [vmem:[%s183 + $0x2a0] sm:%s175] %v226
                %v228 = vld [vmem:[%s182 + $0x4d0] sm:%s175]
                %229 = vst [vmem:[%s183 + $0x2c0] sm:%s175] %v228
                %v230 = vld [vmem:[%s182 + $0x508] sm:%s175]
                %231 = vst [vmem:[%s183 + $0x2e0] sm:%s175] %v230
              $region41: #{conv_bn_add.2} parent=35 // loop_footer
                %s181 = sadd.s32 1, %s177
              $region42: #{conv_bn_add.2} parent=35 // loop_footer_branch
                %176 = sbr.rel target = $region38
              $region43: #{conv_bn_add.2} parent=35 // loop_exit
                _
            $region36: #{conv_bn_add.2} parent=27 // pred_fallthru
              _
          $region28: #{conv_bn_add.2} parent=23 // pred_fallthru
            _
          %673 = vnop
        $region24: #{conv_bn_add.2} parent=19 // pred_fallthru
          _
      $region20: #{conv_bn_add.2} parent=5 // pred_fallthru
        _
      %p674 = scmp.le.s32.totalorder 1, %s11
      %p675 = scmp.lt.s32.totalorder %s11, 3
      %p676 = pnand %p674, %p675
      %p677 = pneg %p676
      // Predicated region
      $region87: #{conv_bn_add.2} parent=5 // pred_check
        _
      $region88: #{conv_bn_add.2} parent=5 // pred_check_branch
        %679 = sbr.rel (%p676) target = $region90
      $region89: #{conv_bn_add.2} parent=5 // pred_region
        %s680 = ssub.s32 %s11, 1
        %s681 = sand.u32 %s45, 1
        %s682 = sand.u32 %s45, 1
        %s683 = smul.addr %s682, 768
        %s684 = scalar_lea.vmem [#allocation2], %s683
        // Predicated region
        $region91: #{conv_bn_add.2} parent=89 // pred_check
          %p685 = pneg %p58
        $region92: #{conv_bn_add.2} parent=89 // pred_check_branch
          %687 = sbr.rel (%p685) target = $region94
        $region93: #{conv_bn_add.2} parent=89 // pred_region
          _
        $region94: #{conv_bn_add.2} parent=89 // pred_fallthru
          _
        %p688 = pneg %p32
        %p689 = pneg %p29
        %s690 = sand.u32 %s45, 1
        %s691 = sand.u32 %s45, 1
        %s692 = smul.addr %s691, 768
        %s693 = scalar_lea.vmem [#allocation2], %s692
        %p694 = pneg %p58
        %p695 = pneg %p55
        %p696 = pneg %p84
        %p697 = pneg %p81
        %s698 = sand.u32 %s71, 1
        %s699 = sand.u32 %s71, 1
        %s700 = smul.addr %s699, 128
        %s701 = scalar_lea.vmem [#allocation3], %s700
        %p702 = pneg %p105
        %p703 = pneg %p102
        %p704 = pneg %p126
        %p705 = pneg %p123
        %s706 = smul.u32 4, %s16
        %s707 = ssub.s32 7, %s706
        %p708 = scmp.lt.s32.totalorder %s707, 4
        %s709 = scalar_select %p708, %s707, 4
        %s710 = smul.u32 192, %s709
        %s711 = smul.u32 4, %s16
        %s712 = ssub.s32 7, %s711
        %p713 = scmp.lt.s32.totalorder %s712, 4
        %s714 = scalar_select %p713, %s712, 4
        %s715 = smul.u32 32, %s714
        %v716 = vld [vmem:[%s0] sm:$0xff]
        %v717 = vld [vmem:[%s0 + $0x8] sm:$0xff]
        %v718 = vld [vmem:[%s0 + $0x10] sm:$0xff]
        %v719 = vld [vmem:[%s0 + $0x18] sm:$0xff]
        %v720 = vld [vmem:[%s0 + $0x20] sm:$0xff]
        %v721 = vld [vmem:[%s0 + $0x28] sm:$0xff]
        %v722 = vld [vmem:[%s0 + $0x30] sm:$0xff]
        %v723 = vld [vmem:[%s0 + $0x38] sm:$0xff]
        %v724 = vld [vmem:[%s684] sm:$0xff]
        %v725 = vld [vmem:[%s684 + $0x8] sm:$0xff]
        %v726 = vld [vmem:[%s684 + $0x10] sm:$0xff]
        %v727 = vld [vmem:[%s684 + $0x18] sm:$0xff]
        %v728 = vld [vmem:[%s684 + $0x20] sm:$0xff]
        %v729 = vld [vmem:[%s684 + $0x28] sm:$0xff]
        %v730 = vld [vmem:[%s684 + $0x30] sm:$0xff]
        %v731 = vld [vmem:[%s684 + $0x38] sm:$0xff]
        %v732 = vld [vmem:[%s684 + $0x40] sm:$0xff]
        %v733 = vld [vmem:[%s684 + $0x48] sm:$0xff]
        %v734 = vld [vmem:[%s684 + $0x50] sm:$0xff]
        %v735 = vld [vmem:[%s684 + $0x58] sm:$0xff]
        %v736 = vld [vmem:[%s684 + $0x60] sm:$0xff]
        %v737 = vld [vmem:[%s684 + $0x68] sm:$0xff]
        %v738 = vld [vmem:[%s684 + $0x70] sm:$0xff]
        %v739 = vld [vmem:[%s684 + $0x78] sm:$0xff]
        %v740 = vld [vmem:[%s684 + $0x80] sm:$0xff]
        %v741 = vld [vmem:[%s684 + $0x88] sm:$0xff]
        %v742 = vld [vmem:[%s684 + $0x90] sm:$0xff]
        %v743 = vld [vmem:[%s684 + $0x98] sm:$0xff]
        %v744 = vld [vmem:[%s684 + $0xa0] sm:$0xff]
        %v745 = vld [vmem:[%s684 + $0xa8] sm:$0xff]
        %v746 = vld [vmem:[%s684 + $0xb0] sm:$0xff]
        %v747 = vld [vmem:[%s684 + $0xb8] sm:$0xff]
        %v748 = vld [vmem:[%s684 + $0xc0] sm:$0xff]
        %v749 = vld [vmem:[%s684 + $0xc8] sm:$0xff]
        %v750 = vld [vmem:[%s684 + $0xd0] sm:$0xff]
        %v751 = vld [vmem:[%s684 + $0xd8] sm:$0xff]
        %v752 = vld [vmem:[%s684 + $0xe0] sm:$0xff]
        %v753 = vld [vmem:[%s684 + $0xe8] sm:$0xff]
        %v754 = vld [vmem:[%s684 + $0xf0] sm:$0xff]
        %v755 = vld [vmem:[%s684 + $0xf8] sm:$0xff]
        %v756 = vld [vmem:[%s684 + $0x100] sm:$0xff]
        %v757 = vld [vmem:[%s684 + $0x108] sm:$0xff]
        %v758 = vld [vmem:[%s684 + $0x110] sm:$0xff]
        %v759 = vld [vmem:[%s684 + $0x118] sm:$0xff]
        %v760 = vld [vmem:[%s684 + $0x120] sm:$0xff]
        %v761 = vld [vmem:[%s684 + $0x128] sm:$0xff]
        %v762 = vld [vmem:[%s684 + $0x130] sm:$0xff]
        %v763 = vld [vmem:[%s684 + $0x138] sm:$0xff]
        %v764 = vld [vmem:[%s684 + $0x140] sm:$0xff]
        %v765 = vld [vmem:[%s684 + $0x148] sm:$0xff]
        %v766 = vld [vmem:[%s684 + $0x150] sm:$0xff]
        %v767 = vld [vmem:[%s684 + $0x158] sm:$0xff]
        %v768 = vld [vmem:[%s684 + $0x160] sm:$0xff]
        %v769 = vld [vmem:[%s684 + $0x168] sm:$0xff]
        %v770 = vld [vmem:[%s684 + $0x170] sm:$0xff]
        %v771 = vld [vmem:[%s684 + $0x178] sm:$0xff]
        %v772 = vld [vmem:[%s684 + $0x180] sm:$0xff]
        %v773 = vld [vmem:[%s684 + $0x188] sm:$0xff]
        %v774 = vld [vmem:[%s684 + $0x190] sm:$0xff]
        %v775 = vld [vmem:[%s684 + $0x198] sm:$0xff]
        %v776 = vld [vmem:[%s684 + $0x1a0] sm:$0xff]
        %v777 = vld [vmem:[%s684 + $0x1a8] sm:$0xff]
        %v778 = vld [vmem:[%s684 + $0x1b0] sm:$0xff]
        %v779 = vld [vmem:[%s684 + $0x1b8] sm:$0xff]
        %v780 = vld [vmem:[%s684 + $0x1c0] sm:$0xff]
        %v781 = vld [vmem:[%s684 + $0x1c8] sm:$0xff]
        %v782 = vld [vmem:[%s684 + $0x1d0] sm:$0xff]
        %v783 = vld [vmem:[%s684 + $0x1d8] sm:$0xff]
        %v784 = vld [vmem:[%s684 + $0x1e0] sm:$0xff]
        %v785 = vld [vmem:[%s684 + $0x1e8] sm:$0xff]
        %v786 = vld [vmem:[%s684 + $0x1f0] sm:$0xff]
        %v787 = vld [vmem:[%s684 + $0x1f8] sm:$0xff]
        %v788 = vld [vmem:[%s684 + $0x200] sm:$0xff]
        %v789 = vld [vmem:[%s684 + $0x208] sm:$0xff]
        %v790 = vld [vmem:[%s684 + $0x210] sm:$0xff]
        %v791 = vld [vmem:[%s684 + $0x218] sm:$0xff]
        %v792 = vld [vmem:[%s684 + $0x220] sm:$0xff]
        %v793 = vld [vmem:[%s684 + $0x228] sm:$0xff]
        %v794 = vld [vmem:[%s684 + $0x230] sm:$0xff]
        %v795 = vld [vmem:[%s684 + $0x238] sm:$0xff]
        %v796 = vld [vmem:[%s684 + $0x240] sm:$0xff]
        %v797 = vld [vmem:[%s684 + $0x248] sm:$0xff]
        %v798 = vld [vmem:[%s684 + $0x250] sm:$0xff]
        %v799 = vld [vmem:[%s684 + $0x258] sm:$0xff]
        %v800 = vld [vmem:[%s684 + $0x260] sm:$0xff]
        %v801 = vld [vmem:[%s684 + $0x268] sm:$0xff]
        %v802 = vld [vmem:[%s684 + $0x270] sm:$0xff]
        %v803 = vld [vmem:[%s684 + $0x278] sm:$0xff]
        %v804 = vld [vmem:[%s684 + $0x280] sm:$0xff]
        %v805 = vld [vmem:[%s684 + $0x288] sm:$0xff]
        %v806 = vld [vmem:[%s684 + $0x290] sm:$0xff]
        %v807 = vld [vmem:[%s684 + $0x298] sm:$0xff]
        %v808 = vld [vmem:[%s684 + $0x2a0] sm:$0xff]
        %v809 = vld [vmem:[%s684 + $0x2a8] sm:$0xff]
        %v810 = vld [vmem:[%s684 + $0x2b0] sm:$0xff]
        %v811 = vld [vmem:[%s684 + $0x2b8] sm:$0xff]
        %v812 = vld [vmem:[%s684 + $0x2c0] sm:$0xff]
        %v813 = vld [vmem:[%s684 + $0x2c8] sm:$0xff]
        %v814 = vld [vmem:[%s684 + $0x2d0] sm:$0xff]
        %v815 = vld [vmem:[%s684 + $0x2d8] sm:$0xff]
        %v816 = vld [vmem:[%s684 + $0x2e0] sm:$0xff]
        %v817 = vld [vmem:[%s684 + $0x2e8] sm:$0xff]
        %v818 = vld [vmem:[%s684 + $0x2f0] sm:$0xff]
        %v819 = vld [vmem:[%s684 + $0x2f8] sm:$0xff]
        %vm820 = vcmask 523264
        %v822 = vsel %vm820, %v717, 0
        %v825 = vsel %vm820, %v719, 0
        %v828 = vsel %vm820, %v721, 0
        %v831 = vsel %vm820, %v723, 0
        %833 = vmatpush.msra.mxu0 %v784
        %834 = vmatpush.msra.mxu0 %v780
        %835 = vmatpush.msra.mxu0 %v776
        %836 = vmatpush.msra.mxu0 %v772
        %837 = vmatpush.msra.mxu0 %v768
        %838 = vmatpush.msra.mxu0 %v764
        %839 = vmatpush.msra.mxu0 %v760
        %840 = vmatpush.msra.mxu0 %v756
        %841 = vmatpush.msra.mxu0 %v752
        %842 = vmatpush.msra.mxu0 %v748
        %843 = vmatpush.msra.mxu0 %v744
        %844 = vmatpush.msra.mxu0 %v740
        %845 = vmatpush.msra.mxu0 %v736
        %846 = vmatpush.msra.mxu0 %v732
        %847 = vmatpush.msra.mxu0 %v728
        %848 = vmatpush.msra.mxu0 %v724
        %849 = vmatmul.f32.gmra.mxu0 %v716
        %v850 = vpop.f32.mrf.mxu0
        %v851 = vadd.f32 0.0, %v850
        %852 = vmatmul.f32.gmra.mxu0 %v718
        %v853 = vpop.f32.mrf.mxu0
        %v854 = vadd.f32 0.0, %v853
        %855 = vmatmul.f32.gmra.mxu0 %v720
        %v856 = vpop.f32.mrf.mxu0
        %v857 = vadd.f32 0.0, %v856
        %858 = vmatmul.f32.gmra.mxu0 %v722
        %v859 = vpop.f32.mrf.mxu0
        %v860 = vadd.f32 0.0, %v859
        %861 = vdwg.mxu0
        %862 = vmatpush.msra.mxu0 0.0
        %863 = vmatpush.msra.mxu0 0.0
        %864 = vmatpush.msra.mxu0 0.0
        %865 = vmatpush.msra.mxu0 0.0
        %866 = vmatpush.msra.mxu0 0.0
        %867 = vmatpush.msra.mxu0 0.0
        %868 = vmatpush.msra.mxu0 0.0
        %869 = vmatpush.msra.mxu0 0.0
        %870 = vmatpush.msra.mxu0 %v816
        %871 = vmatpush.msra.mxu0 %v812
        %872 = vmatpush.msra.mxu0 %v808
        %873 = vmatpush.msra.mxu0 %v804
        %874 = vmatpush.msra.mxu0 %v800
        %875 = vmatpush.msra.mxu0 %v796
        %876 = vmatpush.msra.mxu0 %v792
        %877 = vmatpush.msra.mxu0 %v788
        %878 = vmatmul.f32.gmra.mxu0 %v822
        %v879 = vpop.f32.mrf.mxu0
        %v880 = vadd.f32 %v851, %v879
        %881 = vmatmul.f32.gmra.mxu0 %v825
        %v882 = vpop.f32.mrf.mxu0
        %v883 = vadd.f32 %v854, %v882
        %884 = vmatmul.f32.gmra.mxu0 %v828
        %v885 = vpop.f32.mrf.mxu0
        %v886 = vadd.f32 %v857, %v885
        %887 = vmatmul.f32.gmra.mxu0 %v831
        %v888 = vpop.f32.mrf.mxu0
        %v889 = vadd.f32 %v860, %v888
        %890 = vdwg.mxu0
        %891 = vmatpush.msra.mxu0 %v785
        %892 = vmatpush.msra.mxu0 %v781
        %893 = vmatpush.msra.mxu0 %v777
        %894 = vmatpush.msra.mxu0 %v773
        %895 = vmatpush.msra.mxu0 %v769
        %896 = vmatpush.msra.mxu0 %v765
        %897 = vmatpush.msra.mxu0 %v761
        %898 = vmatpush.msra.mxu0 %v757
        %899 = vmatpush.msra.mxu0 %v753
        %900 = vmatpush.msra.mxu0 %v749
        %901 = vmatpush.msra.mxu0 %v745
        %902 = vmatpush.msra.mxu0 %v741
        %903 = vmatpush.msra.mxu0 %v737
        %904 = vmatpush.msra.mxu0 %v733
        %905 = vmatpush.msra.mxu0 %v729
        %906 = vmatpush.msra.mxu0 %v725
        %907 = vmatmul.f32.gmra.mxu0 %v716
        %v908 = vpop.f32.mrf.mxu0
        %v909 = vadd.f32 0.0, %v908
        %910 = vmatmul.f32.gmra.mxu0 %v718
        %v911 = vpop.f32.mrf.mxu0
        %v912 = vadd.f32 0.0, %v911
        %913 = vmatmul.f32.gmra.mxu0 %v720
        %v914 = vpop.f32.mrf.mxu0
        %v915 = vadd.f32 0.0, %v914
        %916 = vmatmul.f32.gmra.mxu0 %v722
        %v917 = vpop.f32.mrf.mxu0
        %v918 = vadd.f32 0.0, %v917
        %919 = vdwg.mxu0
        %920 = vmatpush.msra.mxu0 0.0
        %921 = vmatpush.msra.mxu0 0.0
        %922 = vmatpush.msra.mxu0 0.0
        %923 = vmatpush.msra.mxu0 0.0
        %924 = vmatpush.msra.mxu0 0.0
        %925 = vmatpush.msra.mxu0 0.0
        %926 = vmatpush.msra.mxu0 0.0
        %927 = vmatpush.msra.mxu0 0.0
        %928 = vmatpush.msra.mxu0 %v817
        %929 = vmatpush.msra.mxu0 %v813
        %930 = vmatpush.msra.mxu0 %v809
        %931 = vmatpush.msra.mxu0 %v805
        %932 = vmatpush.msra.mxu0 %v801
        %933 = vmatpush.msra.mxu0 %v797
        %934 = vmatpush.msra.mxu0 %v793
        %935 = vmatpush.msra.mxu0 %v789
        %936 = vmatmul.f32.gmra.mxu0 %v822
        %v937 = vpop.f32.mrf.mxu0
        %v938 = vadd.f32 %v909, %v937
        %939 = vmatmul.f32.gmra.mxu0 %v825
        %v940 = vpop.f32.mrf.mxu0
        %v941 = vadd.f32 %v912, %v940
        %942 = vmatmul.f32.gmra.mxu0 %v828
        %v943 = vpop.f32.mrf.mxu0
        %v944 = vadd.f32 %v915, %v943
        %945 = vmatmul.f32.gmra.mxu0 %v831
        %v946 = vpop.f32.mrf.mxu0
        %v947 = vadd.f32 %v918, %v946
        %948 = vdwg.mxu0
        %949 = vmatpush.msra.mxu0 %v786
        %950 = vmatpush.msra.mxu0 %v782
        %951 = vmatpush.msra.mxu0 %v778
        %952 = vmatpush.msra.mxu0 %v774
        %953 = vmatpush.msra.mxu0 %v770
        %954 = vmatpush.msra.mxu0 %v766
        %955 = vmatpush.msra.mxu0 %v762
        %956 = vmatpush.msra.mxu0 %v758
        %957 = vmatpush.msra.mxu0 %v754
        %958 = vmatpush.msra.mxu0 %v750
        %959 = vmatpush.msra.mxu0 %v746
        %960 = vmatpush.msra.mxu0 %v742
        %961 = vmatpush.msra.mxu0 %v738
        %962 = vmatpush.msra.mxu0 %v734
        %963 = vmatpush.msra.mxu0 %v730
        %964 = vmatpush.msra.mxu0 %v726
        %965 = vmatmul.f32.gmra.mxu0 %v716
        %v966 = vpop.f32.mrf.mxu0
        %v967 = vadd.f32 0.0, %v966
        %968 = vmatmul.f32.gmra.mxu0 %v718
        %v969 = vpop.f32.mrf.mxu0
        %v970 = vadd.f32 0.0, %v969
        %971 = vmatmul.f32.gmra.mxu0 %v720
        %v972 = vpop.f32.mrf.mxu0
        %v973 = vadd.f32 0.0, %v972
        %974 = vmatmul.f32.gmra.mxu0 %v722
        %v975 = vpop.f32.mrf.mxu0
        %v976 = vadd.f32 0.0, %v975
        %977 = vdwg.mxu0
        %978 = vmatpush.msra.mxu0 0.0
        %979 = vmatpush.msra.mxu0 0.0
        %980 = vmatpush.msra.mxu0 0.0
        %981 = vmatpush.msra.mxu0 0.0
        %982 = vmatpush.msra.mxu0 0.0
        %983 = vmatpush.msra.mxu0 0.0
        %984 = vmatpush.msra.mxu0 0.0
        %985 = vmatpush.msra.mxu0 0.0
        %986 = vmatpush.msra.mxu0 %v818
        %987 = vmatpush.msra.mxu0 %v814
        %988 = vmatpush.msra.mxu0 %v810
        %989 = vmatpush.msra.mxu0 %v806
        %990 = vmatpush.msra.mxu0 %v802
        %991 = vmatpush.msra.mxu0 %v798
        %992 = vmatpush.msra.mxu0 %v794
        %993 = vmatpush.msra.mxu0 %v790
        %994 = vmatmul.f32.gmra.mxu0 %v822
        %v995 = vpop.f32.mrf.mxu0
        %v996 = vadd.f32 %v967, %v995
        %997 = vmatmul.f32.gmra.mxu0 %v825
        %v998 = vpop.f32.mrf.mxu0
        %v999 = vadd.f32 %v970, %v998
        %1000 = vmatmul.f32.gmra.mxu0 %v828
        %v1001 = vpop.f32.mrf.mxu0
        %v1002 = vadd.f32 %v973, %v1001
        %1003 = vmatmul.f32.gmra.mxu0 %v831
        %v1004 = vpop.f32.mrf.mxu0
        %v1005 = vadd.f32 %v976, %v1004
        %1006 = vdwg.mxu0
        %1007 = vmatpush.msra.mxu0 %v787
        %1008 = vmatpush.msra.mxu0 %v783
        %1009 = vmatpush.msra.mxu0 %v779
        %1010 = vmatpush.msra.mxu0 %v775
        %1011 = vmatpush.msra.mxu0 %v771
        %1012 = vmatpush.msra.mxu0 %v767
        %1013 = vmatpush.msra.mxu0 %v763
        %1014 = vmatpush.msra.mxu0 %v759
        %1015 = vmatpush.msra.mxu0 %v755
        %1016 = vmatpush.msra.mxu0 %v751
        %1017 = vmatpush.msra.mxu0 %v747
        %1018 = vmatpush.msra.mxu0 %v743
        %1019 = vmatpush.msra.mxu0 %v739
        %1020 = vmatpush.msra.mxu0 %v735
        %1021 = vmatpush.msra.mxu0 %v731
        %1022 = vmatpush.msra.mxu0 %v727
        %1023 = vmatmul.f32.gmra.mxu0 %v716
        %v1024 = vpop.f32.mrf.mxu0
        %v1025 = vadd.f32 0.0, %v1024
        %1026 = vmatmul.f32.gmra.mxu0 %v718
        %v1027 = vpop.f32.mrf.mxu0
        %v1028 = vadd.f32 0.0, %v1027
        %1029 = vmatmul.f32.gmra.mxu0 %v720
        %v1030 = vpop.f32.mrf.mxu0
        %v1031 = vadd.f32 0.0, %v1030
        %1032 = vmatmul.f32.gmra.mxu0 %v722
        %v1033 = vpop.f32.mrf.mxu0
        %v1034 = vadd.f32 0.0, %v1033
        %1035 = vdwg.mxu0
        %1036 = vmatpush.msra.mxu0 0.0
        %1037 = vmatpush.msra.mxu0 0.0
        %1038 = vmatpush.msra.mxu0 0.0
        %1039 = vmatpush.msra.mxu0 0.0
        %1040 = vmatpush.msra.mxu0 0.0
        %1041 = vmatpush.msra.mxu0 0.0
        %1042 = vmatpush.msra.mxu0 0.0
        %1043 = vmatpush.msra.mxu0 0.0
        %1044 = vmatpush.msra.mxu0 %v819
        %1045 = vmatpush.msra.mxu0 %v815
        %1046 = vmatpush.msra.mxu0 %v811
        %1047 = vmatpush.msra.mxu0 %v807
        %1048 = vmatpush.msra.mxu0 %v803
        %1049 = vmatpush.msra.mxu0 %v799
        %1050 = vmatpush.msra.mxu0 %v795
        %1051 = vmatpush.msra.mxu0 %v791
        %1052 = vmatmul.f32.gmra.mxu0 %v822
        %v1053 = vpop.f32.mrf.mxu0
        %v1054 = vadd.f32 %v1025, %v1053
        %1055 = vmatmul.f32.gmra.mxu0 %v825
        %v1056 = vpop.f32.mrf.mxu0
        %v1057 = vadd.f32 %v1028, %v1056
        %1058 = vmatmul.f32.gmra.mxu0 %v828
        %v1059 = vpop.f32.mrf.mxu0
        %v1060 = vadd.f32 %v1031, %v1059
        %1061 = vmatmul.f32.gmra.mxu0 %v831
        %v1062 = vpop.f32.mrf.mxu0
        %v1063 = vadd.f32 %v1034, %v1062
        %1064 = vdwg.mxu0
        %1065 = vst [vmem:[%s701] sm:$0xff] %v880
        %1066 = vst [vmem:[%s701 + $0x8] sm:$0xff] %v938
        %1067 = vst [vmem:[%s701 + $0x10] sm:$0xff] %v996
        %1068 = vst [vmem:[%s701 + $0x18] sm:$0xff] %v1054
        %1069 = vst [vmem:[%s701 + $0x20] sm:$0xff] %v883
        %1070 = vst [vmem:[%s701 + $0x28] sm:$0xff] %v941
        %1071 = vst [vmem:[%s701 + $0x30] sm:$0xff] %v999
        %1072 = vst [vmem:[%s701 + $0x38] sm:$0xff] %v1057
        %1073 = vst [vmem:[%s701 + $0x40] sm:$0xff] %v886
        %1074 = vst [vmem:[%s701 + $0x48] sm:$0xff] %v944
        %1075 = vst [vmem:[%s701 + $0x50] sm:$0xff] %v1002
        %1076 = vst [vmem:[%s701 + $0x58] sm:$0xff] %v1060
        %1077 = vst [vmem:[%s701 + $0x60] sm:$0xff] %v889
        %1078 = vst [vmem:[%s701 + $0x68] sm:$0xff] %v947
        %1079 = vst [vmem:[%s701 + $0x70] sm:$0xff] %v1005
        %1080 = vst [vmem:[%s701 + $0x78] sm:$0xff] %v1063
        %v1081 = vlaneseq
        %v1082 = vand.u32 %v1081, 127
        %v1083 = vadd.s32 %v1082, 128
        %v1084 = vadd.s32 %v1082, 256
        %v1085 = vadd.s32 %v1082, 384
        %s1086 = smul.u32 %s16, 512
        %v1087 = vstv %s1086
        %v1088 = vadd.s32 %v1082, %v1087
        %v1089 = vadd.s32 %v1083, %v1087
        %v1090 = vadd.s32 %v1084, %v1087
        %v1091 = vadd.s32 %v1085, %v1087
        %vm1092 = vcmp.lt.s32.totalorder %v1088, 784
        %vm1093 = vcmp.lt.s32.totalorder %v1089, 784
        %vm1094 = vcmp.lt.s32.totalorder %v1090, 784
        %vm1095 = vcmp.lt.s32.totalorder %v1091, 784
        %v1096 = vsel %vm1092, %v880, 0.0
        %v1097 = vsel %vm1093, %v938, 0.0
        %v1098 = vsel %vm1094, %v996, 0.0
        %v1099 = vsel %vm1095, %v1054, 0.0
        %v1100 = vsel %vm1092, %v883, 0.0
        %v1101 = vsel %vm1093, %v941, 0.0
        %v1102 = vsel %vm1094, %v999, 0.0
        %v1103 = vsel %vm1095, %v1057, 0.0
        %v1104 = vsel %vm1092, %v886, 0.0
        %v1105 = vsel %vm1093, %v944, 0.0
        %v1106 = vsel %vm1094, %v1002, 0.0
        %v1107 = vsel %vm1095, %v1060, 0.0
        %v1108 = vsel %vm1092, %v889, 0.0
        %v1109 = vsel %vm1093, %v947, 0.0
        %v1110 = vsel %vm1094, %v1005, 0.0
        %v1111 = vsel %vm1095, %v1063, 0.0
        %v1112 = vadd.f32 %v1096, %v1097
        %v1113 = vadd.f32 %v1112, %v1098
        %v1114 = vadd.f32 %v1113, %v1099
        %1115 = vadd.xlane.f32.xlu0 %v1114
        %v1116 = vpop.xlane.xlu0 %1115
        %v1117 = vadd.f32 %v1100, %v1101
        %v1118 = vadd.f32 %v1117, %v1102
        %v1119 = vadd.f32 %v1118, %v1103
        %1120 = vadd.xlane.f32.xlu0 %v1119
        %v1121 = vpop.xlane.xlu0 %1120
        %v1122 = vadd.f32 %v1104, %v1105
        %v1123 = vadd.f32 %v1122, %v1106
        %v1124 = vadd.f32 %v1123, %v1107
        %1125 = vadd.xlane.f32.xlu0 %v1124
        %v1126 = vpop.xlane.xlu0 %1125
        %v1127 = vadd.f32 %v1108, %v1109
        %v1128 = vadd.f32 %v1127, %v1110
        %v1129 = vadd.f32 %v1128, %v1111
        %1130 = vadd.xlane.f32.xlu0 %v1129
        %v1131 = vpop.xlane.xlu0 %1130
        %v1132 = vmul.f32 %v1096, %v1096
        %v1133 = vmul.f32 %v1097, %v1097
        %v1134 = vmul.f32 %v1098, %v1098
        %v1135 = vmul.f32 %v1099, %v1099
        %v1136 = vmul.f32 %v1100, %v1100
        %v1137 = vmul.f32 %v1101, %v1101
        %v1138 = vmul.f32 %v1102, %v1102
        %v1139 = vmul.f32 %v1103, %v1103
        %v1140 = vmul.f32 %v1104, %v1104
        %v1141 = vmul.f32 %v1105, %v1105
        %v1142 = vmul.f32 %v1106, %v1106
        %v1143 = vmul.f32 %v1107, %v1107
        %v1144 = vmul.f32 %v1108, %v1108
        %v1145 = vmul.f32 %v1109, %v1109
        %v1146 = vmul.f32 %v1110, %v1110
        %v1147 = vmul.f32 %v1111, %v1111
        %v1148 = vadd.f32 %v1132, %v1133
        %v1149 = vadd.f32 %v1148, %v1134
        %v1150 = vadd.f32 %v1149, %v1135
        %1151 = vadd.xlane.f32.xlu0 %v1150
        %v1152 = vpop.xlane.xlu0 %1151
        %v1153 = vadd.f32 %v1136, %v1137
        %v1154 = vadd.f32 %v1153, %v1138
        %v1155 = vadd.f32 %v1154, %v1139
        %1156 = vadd.xlane.f32.xlu0 %v1155
        %v1157 = vpop.xlane.xlu0 %1156
        %v1158 = vadd.f32 %v1140, %v1141
        %v1159 = vadd.f32 %v1158, %v1142
        %v1160 = vadd.f32 %v1159, %v1143
        %1161 = vadd.xlane.f32.xlu0 %v1160
        %v1162 = vpop.xlane.xlu0 %1161
        %v1163 = vadd.f32 %v1144, %v1145
        %v1164 = vadd.f32 %v1163, %v1146
        %v1165 = vadd.f32 %v1164, %v1147
        %1166 = vadd.xlane.f32.xlu0 %v1165
        %v1167 = vpop.xlane.xlu0 %1166
        %p1168 = scmp.eq.s32.totalorder %s16, 0
        // Predicated region
        $region95: #{conv_bn_add.2} parent=89 // pred_check
          %p1169 = pneg %p1168
        $region96: #{conv_bn_add.2} parent=89 // pred_check_branch
          %1171 = sbr.rel (%p1169) target = $region98
        $region97: #{conv_bn_add.2} parent=89 // pred_region
          %vm1172 = vcmask 7168
          %1173 = vst.msk [vmem:[%s3] sm:$0xff] %vm1172, %v1116
          %1174 = vst.msk [vmem:[%s3 + $0x8] sm:$0xff] %vm1172, %v1121
          %1175 = vst.msk [vmem:[%s3 + $0x10] sm:$0xff] %vm1172, %v1126
          %1176 = vst.msk [vmem:[%s3 + $0x18] sm:$0xff] %vm1172, %v1131
          %1177 = vst.msk [vmem:[%s4] sm:$0xff] %vm1172, %v1152
          %1178 = vst.msk [vmem:[%s4 + $0x8] sm:$0xff] %vm1172, %v1157
          %1179 = vst.msk [vmem:[%s4 + $0x10] sm:$0xff] %vm1172, %v1162
          %1180 = vst.msk [vmem:[%s4 + $0x18] sm:$0xff] %vm1172, %v1167
        $region98: #{conv_bn_add.2} parent=89 // pred_fallthru
          _
        %p1181 = scmp.ne.s32.totalorder %s16, 0
        // Predicated region
        $region99: #{conv_bn_add.2} parent=89 // pred_check
          %p1182 = pneg %p1181
        $region100: #{conv_bn_add.2} parent=89 // pred_check_branch
          %1184 = sbr.rel (%p1182) target = $region102
        $region101: #{conv_bn_add.2} parent=89 // pred_region
          %v1185 = vld [vmem:[%s3] sm:$0xff]
          %v1186 = vld [vmem:[%s3 + $0x8] sm:$0xff]
          %v1187 = vld [vmem:[%s3 + $0x10] sm:$0xff]
          %v1188 = vld [vmem:[%s3 + $0x18] sm:$0xff]
          %v1189 = vadd.f32 %v1185, %v1116
          %v1190 = vadd.f32 %v1186, %v1121
          %v1191 = vadd.f32 %v1187, %v1126
          %v1192 = vadd.f32 %v1188, %v1131
          %vm1193 = vcmask 7168
          %1194 = vst.msk [vmem:[%s3] sm:$0xff] %vm1193, %v1189
          %1195 = vst.msk [vmem:[%s3 + $0x8] sm:$0xff] %vm1193, %v1190
          %1196 = vst.msk [vmem:[%s3 + $0x10] sm:$0xff] %vm1193, %v1191
          %1197 = vst.msk [vmem:[%s3 + $0x18] sm:$0xff] %vm1193, %v1192
          %v1198 = vld [vmem:[%s4] sm:$0xff]
          %v1199 = vld [vmem:[%s4 + $0x8] sm:$0xff]
          %v1200 = vld [vmem:[%s4 + $0x10] sm:$0xff]
          %v1201 = vld [vmem:[%s4 + $0x18] sm:$0xff]
          %v1202 = vadd.f32 %v1198, %v1152
          %v1203 = vadd.f32 %v1199, %v1157
          %v1204 = vadd.f32 %v1200, %v1162
          %v1205 = vadd.f32 %v1201, %v1167
          %1206 = vst.msk [vmem:[%s4] sm:$0xff] %vm1193, %v1202
          %1207 = vst.msk [vmem:[%s4 + $0x8] sm:$0xff] %vm1193, %v1203
          %1208 = vst.msk [vmem:[%s4 + $0x10] sm:$0xff] %vm1193, %v1204
          %1209 = vst.msk [vmem:[%s4 + $0x18] sm:$0xff] %vm1193, %v1205
        $region102: #{conv_bn_add.2} parent=89 // pred_fallthru
          _
        %s1210 = sand.u32 %s71, 1
        %s1211 = sand.u32 %s71, 1
        %s1212 = smul.addr %s1211, 128
        %s1213 = scalar_lea.vmem [#allocation3], %s1212
        // Predicated region
        $region103: #{conv_bn_add.2} parent=89 // pred_check
          %p1214 = pneg %p81
        $region104: #{conv_bn_add.2} parent=89 // pred_check_branch
          %1216 = sbr.rel (%p1214) target = $region106
        $region105: #{conv_bn_add.2} parent=89 // pred_region
          %s1217 = smul.u32 4, %s16
          %s1218 = ssub.s32 7, %s1217
          %p1219 = scmp.lt.s32.totalorder %s1218, 4
          %s1220 = scalar_select %p1219, %s1218, 4
          %s1221 = smul.u32 32, %s1220
          %p1222 = scmp.ne.s32.totalorder 0, %s1221
          %s1223 = smul.addr %s1217, 8
          %s1224 = scalar_lea.vmem %s2, %s1223
          %s1225 = smul.u32 %s1220, 8
          // Predicated region
          $region107: #{conv_bn_add.2} parent=105 // pred_check
            %p1226 = pneg %p1222
          $region108: #{conv_bn_add.2} parent=105 // pred_check_branch
            %1228 = sbr.rel (%p1226) target = $region110
          $region109: #{conv_bn_add.2} parent=105 // pred_region
            %p1229 = scmp.lt.u32.totalorder %s1225, 8
            %p1230 = pneg %p1229
            // Predicated region
            $region111: #{conv_bn_add.2} parent=109 // pred_check
              _
            $region112: #{conv_bn_add.2} parent=109 // pred_check_branch
              %1232 = sbr.rel (%p1229) target = $region114
            $region113: #{conv_bn_add.2} parent=109 // pred_region
              %s1254 = sand.u32 %s1225, 7
              %p1255 = scmp.eq.s32.totalorder %s1254, 0
              // Predicated region
              $region126: #{conv_bn_add.2} parent=113 // pred_check
                %p1256 = pneg %p1255
              $region127: #{conv_bn_add.2} parent=113 // pred_check_branch
                %1258 = sbr.rel (%p1256) target = $region129
              $region128: #{conv_bn_add.2} parent=113 // pred_region
                %s1259 = sshrl.u32 %s1225, 3
                %s1260 = sshrl.u32 %s1259, 3
                // While loop
                $region130: #{conv_bn_add.2} parent=128 // loop_pre_header
                  _
                $region131: #{conv_bn_add.2} parent=128 // loop_header
                  %s1262 = sphi 0, %s1264
                  %p1263 = scmp.ge.s32.totalorder %s1262, %s1260
                  %s1267 = sphi 0, %s1336
                  %s1268 = sphi %s1213, %s1339
                  %s1269 = sphi %s1224, %s1340
                $region132: #{conv_bn_add.2} parent=128 // loop_header_branch
                  %1266 = sbr.rel (%p1263) target = $region136
                $region133: #{conv_bn_add.2} parent=128 // loop_body
                  %v1270 = vld [vmem:[%s1268] sm:$0xff]
                  %1271 = vst [vmem:[%s1269] sm:$0xff] %v1270
                  %v1272 = vld [vmem:[%s1268 + $0x8] sm:$0xff]
                  %1273 = vst [vmem:[%s1269 + $0x8] sm:$0xff] %v1272
                  %v1274 = vld [vmem:[%s1268 + $0x10] sm:$0xff]
                  %1275 = vst [vmem:[%s1269 + $0x10] sm:$0xff] %v1274
                  %v1276 = vld [vmem:[%s1268 + $0x18] sm:$0xff]
                  %1277 = vst [vmem:[%s1269 + $0x18] sm:$0xff] %v1276
                  %v1278 = vld [vmem:[%s1268 + $0x20] sm:$0xff]
                  %1279 = vst [vmem:[%s1269 + $0x20] sm:$0xff] %v1278
                  %v1280 = vld [vmem:[%s1268 + $0x28] sm:$0xff]
                  %1281 = vst [vmem:[%s1269 + $0x28] sm:$0xff] %v1280
                  %v1282 = vld [vmem:[%s1268 + $0x30] sm:$0xff]
                  %1283 = vst [vmem:[%s1269 + $0x30] sm:$0xff] %v1282
                  %v1284 = vld [vmem:[%s1268 + $0x38] sm:$0xff]
                  %1285 = vst [vmem:[%s1269 + $0x38] sm:$0xff] %v1284
                  %v1286 = vld [vmem:[%s1268 + $0x20] sm:$0xff]
                  %1287 = vst [vmem:[%s1269 + $0x38] sm:$0xff] %v1286
                  %v1288 = vld [vmem:[%s1268 + $0x28] sm:$0xff]
                  %1289 = vst [vmem:[%s1269 + $0x40] sm:$0xff] %v1288
                  %v1290 = vld [vmem:[%s1268 + $0x30] sm:$0xff]
                  %1291 = vst [vmem:[%s1269 + $0x48] sm:$0xff] %v1290
                  %v1292 = vld [vmem:[%s1268 + $0x38] sm:$0xff]
                  %1293 = vst [vmem:[%s1269 + $0x50] sm:$0xff] %v1292
                  %v1294 = vld [vmem:[%s1268 + $0x40] sm:$0xff]
                  %1295 = vst [vmem:[%s1269 + $0x58] sm:$0xff] %v1294
                  %v1296 = vld [vmem:[%s1268 + $0x48] sm:$0xff]
                  %1297 = vst [vmem:[%s1269 + $0x60] sm:$0xff] %v1296
                  %v1298 = vld [vmem:[%s1268 + $0x50] sm:$0xff]
                  %1299 = vst [vmem:[%s1269 + $0x68] sm:$0xff] %v1298
                  %v1300 = vld [vmem:[%s1268 + $0x58] sm:$0xff]
                  %1301 = vst [vmem:[%s1269 + $0x70] sm:$0xff] %v1300
                  %v1302 = vld [vmem:[%s1268 + $0x40] sm:$0xff]
                  %1303 = vst [vmem:[%s1269 + $0x70] sm:$0xff] %v1302
                  %v1304 = vld [vmem:[%s1268 + $0x48] sm:$0xff]
                  %1305 = vst [vmem:[%s1269 + $0x78] sm:$0xff] %v1304
                  %v1306 = vld [vmem:[%s1268 + $0x50] sm:$0xff]
                  %1307 = vst [vmem:[%s1269 + $0x80] sm:$0xff] %v1306
                  %v1308 = vld [vmem:[%s1268 + $0x58] sm:$0xff]
                  %1309 = vst [vmem:[%s1269 + $0x88] sm:$0xff] %v1308
                  %v1310 = vld [vmem:[%s1268 + $0x60] sm:$0xff]
                  %1311 = vst [vmem:[%s1269 + $0x90] sm:$0xff] %v1310
                  %v1312 = vld [vmem:[%s1268 + $0x68] sm:$0xff]
                  %1313 = vst [vmem:[%s1269 + $0x98] sm:$0xff] %v1312
                  %v1314 = vld [vmem:[%s1268 + $0x70] sm:$0xff]
                  %1315 = vst [vmem:[%s1269 + $0xa0] sm:$0xff] %v1314
                  %v1316 = vld [vmem:[%s1268 + $0x78] sm:$0xff]
                  %1317 = vst [vmem:[%s1269 + $0xa8] sm:$0xff] %v1316
                  %v1318 = vld [vmem:[%s1268 + $0x60] sm:$0xff]
                  %1319 = vst [vmem:[%s1269 + $0xa8] sm:$0xff] %v1318
                  %v1320 = vld [vmem:[%s1268 + $0x68] sm:$0xff]
                  %1321 = vst [vmem:[%s1269 + $0xb0] sm:$0xff] %v1320
                  %v1322 = vld [vmem:[%s1268 + $0x70] sm:$0xff]
                  %1323 = vst [vmem:[%s1269 + $0xb8] sm:$0xff] %v1322
                  %v1324 = vld [vmem:[%s1268 + $0x78] sm:$0xff]
                  %1325 = vst [vmem:[%s1269 + $0xc0] sm:$0xff] %v1324
                  %v1326 = vld [vmem:[%s1268 + $0x80] sm:$0xff]
                  %1327 = vst [vmem:[%s1269 + $0xc8] sm:$0xff] %v1326
                  %v1328 = vld [vmem:[%s1268 + $0x88] sm:$0xff]
                  %1329 = vst [vmem:[%s1269 + $0xd0] sm:$0xff] %v1328
                  %v1330 = vld [vmem:[%s1268 + $0x90] sm:$0xff]
                  %1331 = vst [vmem:[%s1269 + $0xd8] sm:$0xff] %v1330
                  %v1332 = vld [vmem:[%s1268 + $0x98] sm:$0xff]
                  %1333 = vst [vmem:[%s1269 + $0xe0] sm:$0xff] %v1332
                  %s1334 = sadd.s32 1, %s1267
                  %p1335 = scmp.ge.s32.totalorder %s1334, %s1260
                  %s1336 = scalar_select %p1335, 0, %s1334
                  %s1337 = smul.u32 %s1336, 64
                  %s1338 = smul.u32 %s1336, 64
                  %s1339 = scalar_lea.vmem %s1213, %s1337 [#allocation3]
                  %s1340 = scalar_lea.vmem %s1224, %s1338
                $region134: #{conv_bn_add.2} parent=128 // loop_footer
                  %s1264 = sadd.s32 %s1262, 1
                $region135: #{conv_bn_add.2} parent=128 // loop_footer_branch
                  %1261 = sbr.rel target = $region131
                $region136: #{conv_bn_add.2} parent=128 // loop_exit
                  _
                %s1341 = sshrl.u32 %s1259, 3
                %s1342 = sand.u32 %s1259, 7
                %s1343 = smul.u32 %s1341, 8
                %s1344 = smul.u32 8, %s1343
                %s1345 = scalar_lea.vmem %s1213, %s1344 [#allocation3]
                %s1346 = smul.u32 8, %s1343
                %s1347 = scalar_lea.vmem %s1224, %s1346
                // While loop
                $region137: #{conv_bn_add.2} parent=128 // loop_pre_header
                  _
                $region138: #{conv_bn_add.2} parent=128 // loop_header
                  %s1349 = sphi 0, %s1351
                  %p1350 = scmp.ge.s32.totalorder %s1349, %s1342
                  %s1354 = sphi 0, %s1367
                  %s1355 = sphi %s1345, %s1370
                  %s1356 = sphi %s1347, %s1371
                $region139: #{conv_bn_add.2} parent=128 // loop_header_branch
                  %1353 = sbr.rel (%p1350) target = $region143
                $region140: #{conv_bn_add.2} parent=128 // loop_body
                  %v1357 = vld [vmem:[%s1355] sm:$0xff]
                  %1358 = vst [vmem:[%s1356] sm:$0xff] %v1357
                  %v1359 = vld [vmem:[%s1355 + $0x20] sm:$0xff]
                  %1360 = vst [vmem:[%s1356 + $0x38] sm:$0xff] %v1359
                  %v1361 = vld [vmem:[%s1355 + $0x40] sm:$0xff]
                  %1362 = vst [vmem:[%s1356 + $0x70] sm:$0xff] %v1361
                  %v1363 = vld [vmem:[%s1355 + $0x60] sm:$0xff]
                  %1364 = vst [vmem:[%s1356 + $0xa8] sm:$0xff] %v1363
                  %s1365 = sadd.s32 1, %s1354
                  %p1366 = scmp.ge.s32.totalorder %s1365, %s1342
                  %s1367 = scalar_select %p1366, 0, %s1365
                  %s1368 = smul.u32 %s1367, 8
                  %s1369 = smul.u32 %s1367, 8
                  %s1370 = scalar_lea.vmem %s1345, %s1368 [#allocation3]
                  %s1371 = scalar_lea.vmem %s1347, %s1369
                $region141: #{conv_bn_add.2} parent=128 // loop_footer
                  %s1351 = sadd.s32 %s1349, 1
                $region142: #{conv_bn_add.2} parent=128 // loop_footer_branch
                  %1348 = sbr.rel target = $region138
                $region143: #{conv_bn_add.2} parent=128 // loop_exit
                  _
              $region129: #{conv_bn_add.2} parent=113 // pred_fallthru
                _
              %p1372 = pneg %p1255
              // Predicated region
              $region144: #{conv_bn_add.2} parent=113 // pred_check
                _
              $region145: #{conv_bn_add.2} parent=113 // pred_check_branch
                %1374 = sbr.rel (%p1255) target = $region147
              $region146: #{conv_bn_add.2} parent=113 // pred_region
                %s1375 = sand.u32 %s1225, 7
                %s1376 = ssub.s32 %s1225, %s1375
                %s1377 = scalar_lea.vmem %s1213, %s1376 [#allocation3]
                %s1378 = ssub.s32 %s1225, %s1375
                %s1379 = scalar_lea.vmem %s1224, %s1378
                %s1380 = sshrl.u32 %s1225, 3
                %s1381 = sshrl.u32 %s1380, 3
                // While loop
                $region148: #{conv_bn_add.2} parent=146 // loop_pre_header
                  _
                $region149: #{conv_bn_add.2} parent=146 // loop_header
                  %s1383 = sphi 0, %s1385
                  %p1384 = scmp.ge.s32.totalorder %s1383, %s1381
                  %s1388 = sphi 0, %s1457
                  %s1389 = sphi %s1213, %s1460
                  %s1390 = sphi %s1224, %s1461
                $region150: #{conv_bn_add.2} parent=146 // loop_header_branch
                  %1387 = sbr.rel (%p1384) target = $region154
                $region151: #{conv_bn_add.2} parent=146 // loop_body
                  %v1391 = vld [vmem:[%s1389] sm:$0xff]
                  %1392 = vst [vmem:[%s1390] sm:$0xff] %v1391
                  %v1393 = vld [vmem:[%s1389 + $0x8] sm:$0xff]
                  %1394 = vst [vmem:[%s1390 + $0x8] sm:$0xff] %v1393
                  %v1395 = vld [vmem:[%s1389 + $0x10] sm:$0xff]
                  %1396 = vst [vmem:[%s1390 + $0x10] sm:$0xff] %v1395
                  %v1397 = vld [vmem:[%s1389 + $0x18] sm:$0xff]
                  %1398 = vst [vmem:[%s1390 + $0x18] sm:$0xff] %v1397
                  %v1399 = vld [vmem:[%s1389 + $0x20] sm:$0xff]
                  %1400 = vst [vmem:[%s1390 + $0x20] sm:$0xff] %v1399
                  %v1401 = vld [vmem:[%s1389 + $0x28] sm:$0xff]
                  %1402 = vst [vmem:[%s1390 + $0x28] sm:$0xff] %v1401
                  %v1403 = vld [vmem:[%s1389 + $0x30] sm:$0xff]
                  %1404 = vst [vmem:[%s1390 + $0x30] sm:$0xff] %v1403
                  %v1405 = vld [vmem:[%s1389 + $0x38] sm:$0xff]
                  %1406 = vst [vmem:[%s1390 + $0x38] sm:$0xff] %v1405
                  %v1407 = vld [vmem:[%s1389 + $0x20] sm:$0xff]
                  %1408 = vst [vmem:[%s1390 + $0x38] sm:$0xff] %v1407
                  %v1409 = vld [vmem:[%s1389 + $0x28] sm:$0xff]
                  %1410 = vst [vmem:[%s1390 + $0x40] sm:$0xff] %v1409
                  %v1411 = vld [vmem:[%s1389 + $0x30] sm:$0xff]
                  %1412 = vst [vmem:[%s1390 + $0x48] sm:$0xff] %v1411
                  %v1413 = vld [vmem:[%s1389 + $0x38] sm:$0xff]
                  %1414 = vst [vmem:[%s1390 + $0x50] sm:$0xff] %v1413
                  %v1415 = vld [vmem:[%s1389 + $0x40] sm:$0xff]
                  %1416 = vst [vmem:[%s1390 + $0x58] sm:$0xff] %v1415
                  %v1417 = vld [vmem:[%s1389 + $0x48] sm:$0xff]
                  %1418 = vst [vmem:[%s1390 + $0x60] sm:$0xff] %v1417
                  %v1419 = vld [vmem:[%s1389 + $0x50] sm:$0xff]
                  %1420 = vst [vmem:[%s1390 + $0x68] sm:$0xff] %v1419
                  %v1421 = vld [vmem:[%s1389 + $0x58] sm:$0xff]
                  %1422 = vst [vmem:[%s1390 + $0x70] sm:$0xff] %v1421
                  %v1423 = vld [vmem:[%s1389 + $0x40] sm:$0xff]
                  %1424 = vst [vmem:[%s1390 + $0x70] sm:$0xff] %v1423
                  %v1425 = vld [vmem:[%s1389 + $0x48] sm:$0xff]
                  %1426 = vst [vmem:[%s1390 + $0x78] sm:$0xff] %v1425
                  %v1427 = vld [vmem:[%s1389 + $0x50] sm:$0xff]
                  %1428 = vst [vmem:[%s1390 + $0x80] sm:$0xff] %v1427
                  %v1429 = vld [vmem:[%s1389 + $0x58] sm:$0xff]
                  %1430 = vst [vmem:[%s1390 + $0x88] sm:$0xff] %v1429
                  %v1431 = vld [vmem:[%s1389 + $0x60] sm:$0xff]
                  %1432 = vst [vmem:[%s1390 + $0x90] sm:$0xff] %v1431
                  %v1433 = vld [vmem:[%s1389 + $0x68] sm:$0xff]
                  %1434 = vst [vmem:[%s1390 + $0x98] sm:$0xff] %v1433
                  %v1435 = vld [vmem:[%s1389 + $0x70] sm:$0xff]
                  %1436 = vst [vmem:[%s1390 + $0xa0] sm:$0xff] %v1435
                  %v1437 = vld [vmem:[%s1389 + $0x78] sm:$0xff]
                  %1438 = vst [vmem:[%s1390 + $0xa8] sm:$0xff] %v1437
                  %v1439 = vld [vmem:[%s1389 + $0x60] sm:$0xff]
                  %1440 = vst [vmem:[%s1390 + $0xa8] sm:$0xff] %v1439
                  %v1441 = vld [vmem:[%s1389 + $0x68] sm:$0xff]
                  %1442 = vst [vmem:[%s1390 + $0xb0] sm:$0xff] %v1441
                  %v1443 = vld [vmem:[%s1389 + $0x70] sm:$0xff]
                  %1444 = vst [vmem:[%s1390 + $0xb8] sm:$0xff] %v1443
                  %v1445 = vld [vmem:[%s1389 + $0x78] sm:$0xff]
                  %1446 = vst [vmem:[%s1390 + $0xc0] sm:$0xff] %v1445
                  %v1447 = vld [vmem:[%s1389 + $0x80] sm:$0xff]
                  %1448 = vst [vmem:[%s1390 + $0xc8] sm:$0xff] %v1447
                  %v1449 = vld [vmem:[%s1389 + $0x88] sm:$0xff]
                  %1450 = vst [vmem:[%s1390 + $0xd0] sm:$0xff] %v1449
                  %v1451 = vld [vmem:[%s1389 + $0x90] sm:$0xff]
                  %1452 = vst [vmem:[%s1390 + $0xd8] sm:$0xff] %v1451
                  %v1453 = vld [vmem:[%s1389 + $0x98] sm:$0xff]
                  %1454 = vst [vmem:[%s1390 + $0xe0] sm:$0xff] %v1453
                  %s1455 = sadd.s32 1, %s1388
                  %p1456 = scmp.ge.s32.totalorder %s1455, %s1381
                  %s1457 = scalar_select %p1456, 0, %s1455
                  %s1458 = smul.u32 %s1457, 64
                  %s1459 = smul.u32 %s1457, 64
                  %s1460 = scalar_lea.vmem %s1213, %s1458 [#allocation3]
                  %s1461 = scalar_lea.vmem %s1224, %s1459
                $region152: #{conv_bn_add.2} parent=146 // loop_footer
                  %s1385 = sadd.s32 %s1383, 1
                $region153: #{conv_bn_add.2} parent=146 // loop_footer_branch
                  %1382 = sbr.rel target = $region149
                $region154: #{conv_bn_add.2} parent=146 // loop_exit
                  _
                %s1462 = sshrl.u32 %s1380, 3
                %s1463 = sand.u32 %s1380, 7
                %s1464 = smul.u32 %s1462, 8
                %s1465 = smul.u32 8, %s1464
                %s1466 = scalar_lea.vmem %s1213, %s1465 [#allocation3]
                %s1467 = smul.u32 8, %s1464
                %s1468 = scalar_lea.vmem %s1224, %s1467
                // While loop
                $region155: #{conv_bn_add.2} parent=146 // loop_pre_header
                  _
                $region156: #{conv_bn_add.2} parent=146 // loop_header
                  %s1470 = sphi 0, %s1472
                  %p1471 = scmp.ge.s32.totalorder %s1470, %s1463
                  %s1475 = sphi 0, %s1488
                  %s1476 = sphi %s1466, %s1491
                  %s1477 = sphi %s1468, %s1492
                $region157: #{conv_bn_add.2} parent=146 // loop_header_branch
                  %1474 = sbr.rel (%p1471) target = $region161
                $region158: #{conv_bn_add.2} parent=146 // loop_body
                  %v1478 = vld [vmem:[%s1476] sm:$0xff]
                  %1479 = vst [vmem:[%s1477] sm:$0xff] %v1478
                  %v1480 = vld [vmem:[%s1476 + $0x20] sm:$0xff]
                  %1481 = vst [vmem:[%s1477 + $0x38] sm:$0xff] %v1480
                  %v1482 = vld [vmem:[%s1476 + $0x40] sm:$0xff]
                  %1483 = vst [vmem:[%s1477 + $0x70] sm:$0xff] %v1482
                  %v1484 = vld [vmem:[%s1476 + $0x60] sm:$0xff]
                  %1485 = vst [vmem:[%s1477 + $0xa8] sm:$0xff] %v1484
                  %s1486 = sadd.s32 1, %s1475
                  %p1487 = scmp.ge.s32.totalorder %s1486, %s1463
                  %s1488 = scalar_select %p1487, 0, %s1486
                  %s1489 = smul.u32 %s1488, 8
                  %s1490 = smul.u32 %s1488, 8
                  %s1491 = scalar_lea.vmem %s1466, %s1489 [#allocation3]
                  %s1492 = scalar_lea.vmem %s1468, %s1490
                $region159: #{conv_bn_add.2} parent=146 // loop_footer
                  %s1472 = sadd.s32 %s1470, 1
                $region160: #{conv_bn_add.2} parent=146 // loop_footer_branch
                  %1469 = sbr.rel target = $region156
                $region161: #{conv_bn_add.2} parent=146 // loop_exit
                  _
                %s1493 = sshll.u32 1, %s1375
                %s1494 = ssub.s32 %s1493, 1
                loop: start=0, step=1, limit=1
                $region162: #{conv_bn_add.2} parent=146 // loop_pre_header
                  _
                $region163: #{conv_bn_add.2} parent=146 // loop_header
                  %s1496 = sphi 0, %s1500
                  %p1497 = scmp.ge.s32.totalorder %s1496, 1
                  %s1501 = sphi %s1377, %s1377
                  %s1502 = sphi %s1379, %s1379
                $region164: #{conv_bn_add.2} parent=146 // loop_header_branch
                  %1499 = sbr.rel (%p1497) target = $region168
                $region165: #{conv_bn_add.2} parent=146 // loop_body
                  %v1503 = vld [vmem:[%s1501] sm:%s1494]
                  %1504 = vst [vmem:[%s1502] sm:%s1494] %v1503
                  %v1505 = vld [vmem:[%s1501 + $0x20] sm:%s1494]
                  %1506 = vst [vmem:[%s1502 + $0x38] sm:%s1494] %v1505
                  %v1507 = vld [vmem:[%s1501 + $0x40] sm:%s1494]
                  %1508 = vst [vmem:[%s1502 + $0x70] sm:%s1494] %v1507
                  %v1509 = vld [vmem:[%s1501 + $0x60] sm:%s1494]
                  %1510 = vst [vmem:[%s1502 + $0xa8] sm:%s1494] %v1509
                $region166: #{conv_bn_add.2} parent=146 // loop_footer
                  %s1500 = sadd.s32 1, %s1496
                $region167: #{conv_bn_add.2} parent=146 // loop_footer_branch
                  %1495 = sbr.rel target = $region163
                $region168: #{conv_bn_add.2} parent=146 // loop_exit
                  _
              $region147: #{conv_bn_add.2} parent=113 // pred_fallthru
                _
            $region114: #{conv_bn_add.2} parent=109 // pred_fallthru
              _
            // Predicated region
            $region115: #{conv_bn_add.2} parent=109 // pred_check
              %p1233 = pneg %p1229
            $region116: #{conv_bn_add.2} parent=109 // pred_check_branch
              %1235 = sbr.rel (%p1233) target = $region118
            $region117: #{conv_bn_add.2} parent=109 // pred_region
              %s1236 = sshll.u32 1, %s1225
              %s1237 = ssub.s32 %s1236, 1
              loop: start=0, step=1, limit=1
              $region119: #{conv_bn_add.2} parent=117 // loop_pre_header
                _
              $region120: #{conv_bn_add.2} parent=117 // loop_header
                %s1239 = sphi 0, %s1243
                %p1240 = scmp.ge.s32.totalorder %s1239, 1
                %s1244 = sphi %s1213, %s1213
                %s1245 = sphi %s1224, %s1224
              $region121: #{conv_bn_add.2} parent=117 // loop_header_branch
                %1242 = sbr.rel (%p1240) target = $region125
              $region122: #{conv_bn_add.2} parent=117 // loop_body
                %v1246 = vld [vmem:[%s1244] sm:%s1237]
                %1247 = vst [vmem:[%s1245] sm:%s1237] %v1246
                %v1248 = vld [vmem:[%s1244 + $0x20] sm:%s1237]
                %1249 = vst [vmem:[%s1245 + $0x38] sm:%s1237] %v1248
                %v1250 = vld [vmem:[%s1244 + $0x40] sm:%s1237]
                %1251 = vst [vmem:[%s1245 + $0x70] sm:%s1237] %v1250
                %v1252 = vld [vmem:[%s1244 + $0x60] sm:%s1237]
                %1253 = vst [vmem:[%s1245 + $0xa8] sm:%s1237] %v1252
              $region123: #{conv_bn_add.2} parent=117 // loop_footer
                %s1243 = sadd.s32 1, %s1239
              $region124: #{conv_bn_add.2} parent=117 // loop_footer_branch
                %1238 = sbr.rel target = $region120
              $region125: #{conv_bn_add.2} parent=117 // loop_exit
                _
            $region118: #{conv_bn_add.2} parent=109 // pred_fallthru
              _
          $region110: #{conv_bn_add.2} parent=105 // pred_fallthru
            _
          %1511 = vnop
        $region106: #{conv_bn_add.2} parent=89 // pred_fallthru
          _
        // Predicated region
        $region169: #{conv_bn_add.2} parent=89 // pred_check
          %p1512 = pneg %p102
        $region170: #{conv_bn_add.2} parent=89 // pred_check_branch
          %1514 = sbr.rel (%p1512) target = $region172
        $region171: #{conv_bn_add.2} parent=89 // pred_region
          _
        $region172: #{conv_bn_add.2} parent=89 // pred_fallthru
          _
        // Predicated region
        $region173: #{conv_bn_add.2} parent=89 // pred_check
          %p1515 = pneg %p123
        $region174: #{conv_bn_add.2} parent=89 // pred_check_branch
          %1517 = sbr.rel (%p1515) target = $region176
        $region175: #{conv_bn_add.2} parent=89 // pred_region
          _
        $region176: #{conv_bn_add.2} parent=89 // pred_fallthru
          _
        // Predicated region
        $region177: #{conv_bn_add.2} parent=89 // pred_check
          %p1518 = pneg %p102
        $region178: #{conv_bn_add.2} parent=89 // pred_check_branch
          %1520 = sbr.rel (%p1518) target = $region180
        $region179: #{conv_bn_add.2} parent=89 // pred_region
          _
        $region180: #{conv_bn_add.2} parent=89 // pred_fallthru
          _
        // Predicated region
        $region181: #{conv_bn_add.2} parent=89 // pred_check
          %p1521 = pneg %p123
        $region182: #{conv_bn_add.2} parent=89 // pred_check_branch
          %1523 = sbr.rel (%p1521) target = $region184
        $region183: #{conv_bn_add.2} parent=89 // pred_region
          _
        $region184: #{conv_bn_add.2} parent=89 // pred_fallthru
          _
      $region90: #{conv_bn_add.2} parent=5 // pred_fallthru
        _
      %p1524 = scmp.le.s32.totalorder 2, %s11
      // Predicated region
      $region185: #{conv_bn_add.2} parent=5 // pred_check
        %p1525 = pneg %p1524
      $region186: #{conv_bn_add.2} parent=5 // pred_check_branch
        %1527 = sbr.rel (%p1525) target = $region188
      $region187: #{conv_bn_add.2} parent=5 // pred_region
        %s1528 = ssub.s32 %s11, 2
        // Predicated region
        $region189: #{conv_bn_add.2} parent=187 // pred_check
          %p1529 = pneg %p87
        $region190: #{conv_bn_add.2} parent=187 // pred_check_branch
          %1531 = sbr.rel (%p1529) target = $region192
        $region191: #{conv_bn_add.2} parent=187 // pred_region
          %s1532 = sand.u32 %s72, 1
          %s1533 = sand.u32 %s72, 1
          %s1534 = smul.addr %s1533, 128
          %s1535 = scalar_lea.vmem [#allocation3], %s1534
        $region192: #{conv_bn_add.2} parent=187 // pred_fallthru
          _
      $region188: #{conv_bn_add.2} parent=5 // pred_fallthru
        _
    $region6: #{conv_bn_add.2} parent=1 // loop_footer
      %s15 = sadd.s32 1, %s11
    $region7: #{conv_bn_add.2} parent=1 // loop_footer_branch
      %10 = sbr.rel target = $region3
    $region8: #{conv_bn_add.2} parent=1 // loop_exit
      _

</llo_original>
